<compile_context>
chip_gen: v5e
topology: v5e:2x2
jax: 0.10.0
libtpu: 0.0.40
codegen_flags: <defaults>
</compile_context>

<pallas_src>
import functools

import jax
import jax.numpy as jnp
from jax.experimental import pallas as pl
from jax.experimental.pallas import tpu as pltpu

BN_EPS = 1e-5


# --------------------------------- kernels ---------------------------------


def _run_pointwise_mlp(h, wb_refs, num_layers, compute_dtype):
    """num_layers of (x @ W + b -> ReLU) applied per point.

    h: (B, TN, C_in) float32 -> (B, TN, C_out) float32.  Matmuls run on the
    MXU with f32 accumulation; bias (with folded BN) + ReLU ride on the VPU.
    """
    b_dim, tn_dim, _ = h.shape
    h2 = h.reshape(b_dim * tn_dim, h.shape[-1])
    for l in range(num_layers):
        w = wb_refs[2 * l][...]
        bias = wb_refs[2 * l + 1][...]          # (1, C_out) float32
        h2 = jnp.dot(h2.astype(compute_dtype), w.astype(compute_dtype),
                     preferred_element_type=jnp.float32)
        h2 = jnp.maximum(h2 + bias, 0.0)        # fused bias + folded BN + ReLU
    return h2.reshape(b_dim, tn_dim, h2.shape[-1])


def _maybe_transform(h, t_ref):
    """torch.bmm(T, P) on channel-major P == per-point  p -> T @ p."""
    if t_ref is None:
        return h
    return jnp.einsum('bng,bfg->bnf', h, t_ref[...],
                      preferred_element_type=jnp.float32)


def make_conv_pool_kernel(num_layers, apply_transform, compute_dtype):
    """Conv(k=1)+BN+ReLU stack fused with the global max-pool over points.

    1-D grid over point tiles; the (B, C_out) output block is resident across
    the whole grid and acts as the running-max accumulator.
    """

    def kernel(*refs):
        x_ref = refs[0]
        t_ref = refs[1] if apply_transform else None
        wb = refs[2:-1] if apply_transform else refs[1:-1]
        o_ref = refs[-1]

        h = _maybe_transform(x_ref[...].astype(jnp.float32), t_ref)
        h = _run_pointwise_mlp(h, wb, num_layers, compute_dtype)
        tile_max = jnp.max(h, axis=1)                       # (B, C_out)

        @pl.when(pl.program_id(0) == 0)
        def _init():
            o_ref[...] = jnp.full(o_ref.shape, -jnp.inf, o_ref.dtype)

        o_ref[...] = jnp.maximum(o_ref[...], tile_max.astype(o_ref.dtype))

    return kernel


def make_conv_pointwise_kernel(num_layers, apply_transform, compute_dtype):
    """Conv(k=1)+BN+ReLU stack with per-point output (no pooling)."""

    def kernel(*refs):
        x_ref = refs[0]
        t_ref = refs[1] if apply_transform else None
        wb = refs[2:-1] if apply_transform else refs[1:-1]
        o_ref = refs[-1]

        h = _maybe_transform(x_ref[...].astype(jnp.float32), t_ref)
        h = _run_pointwise_mlp(h, wb, num_layers, compute_dtype)
        o_ref[...] = h.astype(o_ref.dtype)

    return kernel


def make_fc_kernel(relu_flags, compute_dtype):
    """Fused dense MLP on (B, C): Linear (+ folded BN) (+ ReLU) per layer."""

    def kernel(x_ref, *refs):
        o_ref = refs[-1]
        wb = refs[:-1]
        h = x_ref[...].astype(jnp.float32)
        for l, relu in enumerate(relu_flags):
            w = wb[2 * l][...]
            bias = wb[2 * l + 1][...]
            h = jnp.dot(h.astype(compute_dtype), w.astype(compute_dtype),
                        preferred_element_type=jnp.float32) + bias
            if relu:
                h = jnp.maximum(h, 0.0)
        o_ref[...] = h.astype(o_ref.dtype)

    return kernel


# ------------------------------ pallas wrappers -----------------------------


def _conv_call(kernel, x, T, wbs, out_shape, out_spec, tile_n, semantics):
    b_dim, n_pts, c_in = x.shape
    assert n_pts % tile_n == 0
    in_specs = [pl.BlockSpec((b_dim, tile_n, c_in), lambda n: (0, n, 0))]
    operands = [x]
    if T is not None:
        f = T.shape[-1]
        in_specs.append(pl.BlockSpec((b_dim, f, f), lambda n: (0, 0, 0)))
        operands.append(T)
    for w, b in wbs:                          # resident weights / biases
        in_specs.append(pl.BlockSpec(w.shape, lambda n: (0, 0)))
        in_specs.append(pl.BlockSpec(b.shape, lambda n: (0, 0)))
        operands.extend((w, b))
    return pl.pallas_call(
        kernel,
        grid=(n_pts // tile_n,),
        in_specs=in_specs,
        out_specs=out_spec,
        out_shape=out_shape,
        compiler_params=pltpu.CompilerParams(dimension_semantics=(semantics,)),
    )(*operands)


def conv_stack_pool(x, wbs, T=None, *, tile_n=128, compute_dtype=jnp.bfloat16):
    """(B, Np, C_in) -> (B, C_out): conv stack + global max-pool, one kernel."""
    b_dim = x.shape[0]
    c_out = wbs[-1][0].shape[1]
    kernel = make_conv_pool_kernel(len(wbs), T is not None, compute_dtype)
    return _conv_call(
        kernel, x, T, wbs,
        out_shape=jax.ShapeDtypeStruct((b_dim, c_out), jnp.float32),
        out_spec=pl.BlockSpec((b_dim, c_out), lambda n: (0, 0)),
        tile_n=tile_n,
        semantics="arbitrary",        # output block accumulates across the grid
    )


def conv_stack_pointwise(x, wbs, T=None, *, tile_n=128,
                         compute_dtype=jnp.bfloat16):
    """(B, Np, C_in) -> (B, Np, C_out): conv stack, per-point output."""
    b_dim, n_pts, _ = x.shape
    c_out = wbs[-1][0].shape[1]
    kernel = make_conv_pointwise_kernel(len(wbs), T is not None, compute_dtype)
    return _conv_call(
        kernel, x, T, wbs,
        out_shape=jax.ShapeDtypeStruct((b_dim, n_pts, c_out), jnp.float32),
        out_spec=pl.BlockSpec((b_dim, tile_n, c_out), lambda n: (0, n, 0)),
        tile_n=tile_n,
        semantics="parallel",         # independent tiles (megacore-shardable)
    )


def fc_stack(x, wbs, relu_flags, *, compute_dtype=jnp.bfloat16):
    """(B, C_in) -> (B, C_out): fused dense MLP; everything fits VMEM whole."""
    b_dim = x.shape[0]
    c_out = wbs[-1][0].shape[1]
    vmem = pl.BlockSpec(memory_space=pltpu.MemorySpace.VMEM)
    operands = [x]
    for w, b in wbs:
        operands.extend((w, b))
    return pl.pallas_call(
        make_fc_kernel(tuple(relu_flags), compute_dtype),
        in_specs=[vmem] * len(operands),
        out_specs=vmem,
        out_shape=jax.ShapeDtypeStruct((b_dim, c_out), jnp.float32),
    )(*operands)


# ------------------------- parameters & BN folding --------------------------


def _linear_init(key, fan_in, fan_out):
    kw, kb = jax.random.split(key)
    bound = 1.0 / (fan_in ** 0.5)
    return {
        'w': jax.random.uniform(kw, (fan_in, fan_out), jnp.float32, -bound, bound),
        'b': jax.random.uniform(kb, (fan_out,), jnp.float32, -bound, bound),
    }


def _bn_init(key, dim):
    k1, k2, k3, k4 = jax.random.split(key, 4)
    return {
        'gamma': jax.random.uniform(k1, (dim,), jnp.float32, 0.8, 1.2),
        'beta': jax.random.uniform(k2, (dim,), jnp.float32, -0.1, 0.1),
        'mean': jax.random.uniform(k3, (dim,), jnp.float32, -0.1, 0.1),
        'var': jax.random.uniform(k4, (dim,), jnp.float32, 0.5, 1.5),
    }


def init_simple_pointnet(key, latent_dim, conv_layer_sizes, conv_output_dim,
                         fc_layer_sizes, transformer_positions,
                         t_conv_dims=(64, 128, 512), t_fc_dims=(512, 256),
                         end_in_batchnorm=False):
    assert conv_output_dim % 2 == 0, 'Input Conv dim must be even'
    assert t_fc_dims[0] == t_conv_dims[-1]
    conv_sizes = [3] + list(conv_layer_sizes) + [conv_output_dim]
    fc_sizes = [conv_output_dim] + list(fc_layer_sizes)

    def conv_bn(k, cin, cout):
        k1, k2 = jax.random.split(k)
        layer = _linear_init(k1, cin, cout)
        layer['bn'] = _bn_init(k2, cout)
        return layer

    params = {'conv': [], 'fc': [], 'transformers': {}}
    for i in range(len(conv_sizes) - 1):
        key, k = jax.random.split(key)
        params['conv'].append(conv_bn(k, conv_sizes[i], conv_sizes[i + 1]))

    for i in range(len(fc_sizes) - 1):
        key, k = jax.random.split(key)
        params['fc'].append(conv_bn(k, fc_sizes[i], fc_sizes[i + 1]))
    key, k = jax.random.split(key)
    final = _linear_init(k, fc_sizes[-1], latent_dim)
    if end_in_batchnorm:
        key, k = jax.random.split(key)
        final['bn'] = _bn_init(k, latent_dim)
    params['fc'].append(final)

    for pos in transformer_positions:
        feat = conv_sizes[pos]
        t_conv = [feat] + list(t_conv_dims)
        tp = {'conv': [], 'fc': []}
        for i in range(len(t_conv) - 1):
            key, k = jax.random.split(key)
            tp['conv'].append(conv_bn(k, t_conv[i], t_conv[i + 1]))
        for i in range(len(t_fc_dims) - 1):
            key, k = jax.random.split(key)
            tp['fc'].append(_linear_init(k, t_fc_dims[i], t_fc_dims[i + 1]))
        key, k = jax.random.split(key)
        tp['fc'].append(_linear_init(k, t_fc_dims[-1], feat * feat))
        params['transformers'][pos] = tp
    return params


def fold_layer(layer, weight_dtype):
    """Fold eval-mode BatchNorm into an (in, out) weight and (1, out) bias."""
    w, b = layer['w'], layer['b']
    if 'bn' in layer:
        bn = layer['bn']
        a = bn['gamma'] / jnp.sqrt(bn['var'] + BN_EPS)
        w = w * a[None, :]
        b = b * a + (bn['beta'] - bn['mean'] * a)
    return w.astype(weight_dtype), b.reshape(1, -1).astype(jnp.float32)


# --------------------------------- forward ----------------------------------


def simple_pointnet_forward(P, params, *, tile_n=128,
                            weight_dtype=jnp.bfloat16):
    """P: (B, N, 3) non-permuted point cloud -> (B, latent) embedding."""
    b_dim, n_pts, c0 = P.shape
    assert c0 == 3, 'Unexpected shape'
    # Pad N to a tile multiple by replicating the last point: a no-op for the
    # global max-pool and for every per-point operation.
    n_pad = -n_pts % tile_n
    x = P.astype(jnp.float32)
    if n_pad:
        x = jnp.pad(x, ((0, 0), (0, n_pad), (0, 0)), mode='edge')

    fold = lambda layers: [fold_layer(l, weight_dtype) for l in layers]
    positions = sorted(params['transformers'].keys())
    conv_layers = params['conv']
    n_conv = len(conv_layers)

    def run_transformer(tp, feats):
        pooled_t = conv_stack_pool(feats, fold(tp['conv']),
                                   tile_n=tile_n, compute_dtype=weight_dtype)
        fc_wbs = fold(tp['fc'])
        relu = [True] * (len(fc_wbs) - 1) + [False]
        tvec = fc_stack(pooled_t, fc_wbs, relu, compute_dtype=weight_dtype)
        f = feats.shape[-1]
        return tvec.reshape(b_dim, f, f) + jnp.eye(f, dtype=jnp.float32)[None]

    pooled = None
    i = 0
    while i < n_conv:
        T = run_transformer(params['transformers'][i], x) if i in positions else None
        nxt = min([p for p in positions if p > i], default=n_conv)
        seg = fold(conv_layers[i:nxt])
        if nxt == n_conv:   # last segment ends in the global max-pool
            pooled = conv_stack_pool(x, seg, T=T, tile_n=tile_n,
                                     compute_dtype=weight_dtype)
        else:               # materialize per-point activations for the next transformer
            x = conv_stack_pointwise(x, seg, T=T, tile_n=tile_n,
                                     compute_dtype=weight_dtype)
        i = nxt

    fc_wbs = fold(params['fc'])
    relu = [True] * (len(fc_wbs) - 1) + [False]
    return fc_stack(pooled, fc_wbs, relu, compute_dtype=weight_dtype)


# --------------------------- pure-JAX reference ------------------------------


def _ref_layer(x, layer, relu):
    y = x @ layer['w'] + layer['b']
    if 'bn' in layer:
        bn = layer['bn']
        y = (y - bn['mean']) / jnp.sqrt(bn['var'] + BN_EPS) * bn['gamma'] + bn['beta']
    return jnp.maximum(y, 0.0) if relu else y


def _ref_mlp(x, layers):
    n = len(layers)
    for j, layer in enumerate(layers):
        x = _ref_layer(x, layer, relu=(j < n - 1))
    return x


def _ref_transformer(x, tp):
    h = x
    for layer in tp['conv']:
        h = _ref_layer(h, layer, relu=True)
    h = jnp.max(h, axis=1)
    h = _ref_mlp(h, tp['fc'])
    f = x.shape[-1]
    return h.reshape(x.shape[0], f, f) + jnp.eye(f, dtype=h.dtype)[None]


def simple_pointnet_reference(P, params):
    """Eval-mode pure-JAX mirror of SimplePointNet.forward (point-major)."""
    x = P
    for i, layer in enumerate(params['conv']):
        if i in params['transformers']:
            T = _ref_transformer(x, params['transformers'][i])
            x = jnp.einsum('bfg,bng->bnf', T, x)     # torch.bmm(T, P)
        x = _ref_layer(x, layer, relu=True)
    x = jnp.max(x, axis=1)                           # F.max_pool1d over all points
    return _ref_mlp(x, params['fc'])


# ------------------------------------ main -----------------------------------


if __name__ == '__main__':
    # Small config consistent with the module:
    #   SimplePointNet(latent=32, conv_layer_sizes=(16, 32), conv_output_dim=64,
    #                  fc_layer_sizes=(48,), transformer_positions=[0])
    # with the position-0 SimpleTransformer scaled to conv (16, 32, 64), fc (64, 32).
    B, N = 2, 200
    latent_dim = 32

    key = jax.random.PRNGKey(0)
    key, kp = jax.random.split(key)
    P = jax.random.normal(kp, (B, N, 3), jnp.float32)
    params = init_simple_pointnet(
        key, latent_dim, conv_layer_sizes=(16, 32), conv_output_dim=64,
        fc_layer_sizes=(48,), transformer_positions=[0],
        t_conv_dims=(16, 32, 64), t_fc_dims=(64, 32))

    fwd = jax.jit(functools.partial(simple_pointnet_forward,
                                    tile_n=128, weight_dtype=jnp.bfloat16))
    out = jax.block_until_ready(fwd(P, params))

    ref = simple_pointnet_reference(P, params)
    assert out.shape == (B, latent_dim), out.shape
    # bf16 weights / bf16 MXU inputs with f32 accumulation -> loose tolerance.
    assert jnp.allclose(out, ref, atol=5e-2, rtol=5e-2), \
        float(jnp.max(jnp.abs(out - ref)))

    print("KERNEL_OK")
</pallas_src>

<mosaic_0001>
module attributes {stable_mosaic.version = 11 : i64} {
  func.func @kernel(%arg0: i32, %arg1: memref<2x128x3xf32, #tpu.memory_space<vmem>>, %arg2: memref<2x3x3xf32, #tpu.memory_space<vmem>>, %arg3: memref<3x16xbf16, #tpu.memory_space<vmem>>, %arg4: memref<1x16xf32, #tpu.memory_space<vmem>>, %arg5: memref<16x32xbf16, #tpu.memory_space<vmem>>, %arg6: memref<1x32xf32, #tpu.memory_space<vmem>>, %arg7: memref<32x64xbf16, #tpu.memory_space<vmem>>, %arg8: memref<1x64xf32, #tpu.memory_space<vmem>>, %arg9: memref<2x64xf32, #tpu.memory_space<vmem>>) attributes {dimension_semantics = [#tpu.dimension_semantics<arbitrary>], iteration_bounds = array<i64: 2>, scalar_prefetch = 0 : i64, scratch_operands = 0 : i64, tpu.core_type = #tpu.core_type<tc>, window_params = [{transform_indices = @transform_0, window_bounds = array<i64: 2, 128, 3>}, {pipeline_mode = #tpu.pipeline_mode<synchronous>, transform_indices = @transform_1, window_bounds = array<i64: 2, 3, 3>}, {pipeline_mode = #tpu.pipeline_mode<synchronous>, transform_indices = @transform_2, window_bounds = array<i64: 3, 16>}, {pipeline_mode = #tpu.pipeline_mode<synchronous>, transform_indices = @transform_3, window_bounds = array<i64: 1, 16>}, {pipeline_mode = #tpu.pipeline_mode<synchronous>, transform_indices = @transform_4, window_bounds = array<i64: 16, 32>}, {pipeline_mode = #tpu.pipeline_mode<synchronous>, transform_indices = @transform_5, window_bounds = array<i64: 1, 32>}, {pipeline_mode = #tpu.pipeline_mode<synchronous>, transform_indices = @transform_6, window_bounds = array<i64: 32, 64>}, {pipeline_mode = #tpu.pipeline_mode<synchronous>, transform_indices = @transform_7, window_bounds = array<i64: 1, 64>}, {pipeline_mode = #tpu.pipeline_mode<synchronous>, transform_indices = @transform_8, window_bounds = array<i64: 2, 64>}]} {
    %c0 = arith.constant 0 : index
    %c0_0 = arith.constant 0 : index
    %c0_1 = arith.constant 0 : index
    %0 = vector.load %arg1[%c0, %c0_0, %c0_1] : memref<2x128x3xf32, #tpu.memory_space<vmem>>, vector<2x128x3xf32>
    %c0_2 = arith.constant 0 : index
    %c0_3 = arith.constant 0 : index
    %c0_4 = arith.constant 0 : index
    %1 = vector.load %arg2[%c0_2, %c0_3, %c0_4] : memref<2x3x3xf32, #tpu.memory_space<vmem>>, vector<2x3x3xf32>
    "tpu.trace_start"() <{level = 10 : i32, message = "bng,bfg->bnf"}> : () -> ()
    %cst = arith.constant dense<0.000000e+00> : vector<2x128x3xf32>
    %2 = tpu.matmul %0, %1, %cst {dimension_numbers = #tpu.dot_dimension_numbers<[2], [2], [1], [1], [0, 0, 0, 1, 1, 1], [0], [0]>} : vector<2x128x3xf32>, vector<2x3x3xf32>, vector<2x128x3xf32> -> vector<2x128x3xf32>
    "tpu.trace_stop"() : () -> ()
    %3 = vector.shape_cast %2 : vector<2x128x3xf32> to vector<256x3xf32>
    %c0_5 = arith.constant 0 : index
    %c0_6 = arith.constant 0 : index
    %4 = vector.load %arg3[%c0_5, %c0_6] : memref<3x16xbf16, #tpu.memory_space<vmem>>, vector<3x16xbf16>
    %c0_7 = arith.constant 0 : index
    %c0_8 = arith.constant 0 : index
    %5 = vector.load %arg4[%c0_7, %c0_8] : memref<1x16xf32, #tpu.memory_space<vmem>>, vector<1x16xf32>
    %6 = arith.truncf %3 : vector<256x3xf32> to vector<256x3xbf16>
    %cst_9 = arith.constant dense<0.000000e+00> : vector<256x16xf32>
    %7 = tpu.matmul %6, %4, %cst_9 {dimension_numbers = #tpu.dot_dimension_numbers<[1], [0], [0], [1], [0, 0, 1, 1], [], []>} : vector<256x3xbf16>, vector<3x16xbf16>, vector<256x16xf32> -> vector<256x16xf32>
    %8 = vector.broadcast %5 : vector<1x16xf32> to vector<256x16xf32>
    %9 = arith.addf %7, %8 : vector<256x16xf32>
    %cst_10 = arith.constant 0.000000e+00 : f32
    %10 = vector.broadcast %cst_10 : f32 to vector<256x16xf32>
    %11 = arith.maximumf %9, %10 : vector<256x16xf32>
    %c0_11 = arith.constant 0 : index
    %c0_12 = arith.constant 0 : index
    %12 = vector.load %arg5[%c0_11, %c0_12] : memref<16x32xbf16, #tpu.memory_space<vmem>>, vector<16x32xbf16>
    %c0_13 = arith.constant 0 : index
    %c0_14 = arith.constant 0 : index
    %13 = vector.load %arg6[%c0_13, %c0_14] : memref<1x32xf32, #tpu.memory_space<vmem>>, vector<1x32xf32>
    %14 = arith.truncf %11 : vector<256x16xf32> to vector<256x16xbf16>
    %cst_15 = arith.constant dense<0.000000e+00> : vector<256x32xf32>
    %15 = tpu.matmul %14, %12, %cst_15 {dimension_numbers = #tpu.dot_dimension_numbers<[1], [0], [0], [1], [0, 0, 1, 1], [], []>} : vector<256x16xbf16>, vector<16x32xbf16>, vector<256x32xf32> -> vector<256x32xf32>
    %16 = vector.broadcast %13 : vector<1x32xf32> to vector<256x32xf32>
    %17 = arith.addf %15, %16 : vector<256x32xf32>
    %cst_16 = arith.constant 0.000000e+00 : f32
    %18 = vector.broadcast %cst_16 : f32 to vector<256x32xf32>
    %19 = arith.maximumf %17, %18 : vector<256x32xf32>
    %c0_17 = arith.constant 0 : index
    %c0_18 = arith.constant 0 : index
    %20 = vector.load %arg7[%c0_17, %c0_18] : memref<32x64xbf16, #tpu.memory_space<vmem>>, vector<32x64xbf16>
    %c0_19 = arith.constant 0 : index
    %c0_20 = arith.constant 0 : index
    %21 = vector.load %arg8[%c0_19, %c0_20] : memref<1x64xf32, #tpu.memory_space<vmem>>, vector<1x64xf32>
    %22 = arith.truncf %19 : vector<256x32xf32> to vector<256x32xbf16>
    %cst_21 = arith.constant dense<0.000000e+00> : vector<256x64xf32>
    %23 = tpu.matmul %22, %20, %cst_21 {dimension_numbers = #tpu.dot_dimension_numbers<[1], [0], [0], [1], [0, 0, 1, 1], [], []>} : vector<256x32xbf16>, vector<32x64xbf16>, vector<256x64xf32> -> vector<256x64xf32>
    %24 = vector.broadcast %21 : vector<1x64xf32> to vector<256x64xf32>
    %25 = arith.addf %23, %24 : vector<256x64xf32>
    %cst_22 = arith.constant 0.000000e+00 : f32
    %26 = vector.broadcast %cst_22 : f32 to vector<256x64xf32>
    %27 = arith.maximumf %25, %26 : vector<256x64xf32>
    %28 = vector.shape_cast %27 : vector<256x64xf32> to vector<2x128x64xf32>
    %cst_23 = arith.constant dense<0xFF800000> : vector<2x64xf32>
    %29 = vector.multi_reduction <maximumf>, %28, %cst_23 [1] : vector<2x128x64xf32> to vector<2x64xf32>
    %c0_i32 = arith.constant 0 : i32
    %30 = arith.cmpi eq, %arg0, %c0_i32 : i32
    %31 = arith.extui %30 : i1 to i32
    %c0_i32_24 = arith.constant 0 : i32
    %32 = arith.cmpi ne, %31, %c0_i32_24 : i32
    scf.if %32 {
      %cst_29 = arith.constant 0xFF800000 : f32
      %36 = vector.broadcast %cst_29 : f32 to vector<2x64xf32>
      %c0_30 = arith.constant 0 : index
      %c0_31 = arith.constant 0 : index
      %37 = vector.load %arg9[%c0_30, %c0_31] : memref<2x64xf32, #tpu.memory_space<vmem>>, vector<2x64xf32>
      tpu.vector_store %arg9[%c0_30, %c0_31], %36 {strides = array<i32>} : memref<2x64xf32, #tpu.memory_space<vmem>>, vector<2x64xf32>,
    } else {
    }
    %c0_25 = arith.constant 0 : index
    %c0_26 = arith.constant 0 : index
    %33 = vector.load %arg9[%c0_25, %c0_26] : memref<2x64xf32, #tpu.memory_space<vmem>>, vector<2x64xf32>
    %34 = arith.maximumf %33, %29 : vector<2x64xf32>
    %c0_27 = arith.constant 0 : index
    %c0_28 = arith.constant 0 : index
    %35 = vector.load %arg9[%c0_27, %c0_28] : memref<2x64xf32, #tpu.memory_space<vmem>>, vector<2x64xf32>
    tpu.vector_store %arg9[%c0_27, %c0_28], %34 {strides = array<i32>} : memref<2x64xf32, #tpu.memory_space<vmem>>, vector<2x64xf32>,
    return
  }
  func.func @transform_0(%arg0: i32) -> (i32, i32, i32) {
    %c0_i32 = arith.constant 0 : i32
    %c0_i32_0 = arith.constant 0 : i32
    %c0_i32_1 = arith.constant 0 : i32
    return %c0_i32, %arg0, %c0_i32_0 : i32, i32, i32
  }
  func.func @transform_1(%arg0: i32) -> (i32, i32, i32) {
    %c0_i32 = arith.constant 0 : i32
    %c0_i32_0 = arith.constant 0 : i32
    %c0_i32_1 = arith.constant 0 : i32
    %c0_i32_2 = arith.constant 0 : i32
    return %c0_i32, %c0_i32_0, %c0_i32_1 : i32, i32, i32
  }
  func.func @transform_2(%arg0: i32) -> (i32, i32) {
    %c0_i32 = arith.constant 0 : i32
    %c0_i32_0 = arith.constant 0 : i32
    %c0_i32_1 = arith.constant 0 : i32
    return %c0_i32, %c0_i32_0 : i32, i32
  }
  func.func @transform_3(%arg0: i32) -> (i32, i32) {
    %c0_i32 = arith.constant 0 : i32
    %c0_i32_0 = arith.constant 0 : i32
    %c0_i32_1 = arith.constant 0 : i32
    return %c0_i32, %c0_i32_0 : i32, i32
  }
  func.func @transform_4(%arg0: i32) -> (i32, i32) {
    %c0_i32 = arith.constant 0 : i32
    %c0_i32_0 = arith.constant 0 : i32
    %c0_i32_1 = arith.constant 0 : i32
    return %c0_i32, %c0_i32_0 : i32, i32
  }
  func.func @transform_5(%arg0: i32) -> (i32, i32) {
    %c0_i32 = arith.constant 0 : i32
    %c0_i32_0 = arith.constant 0 : i32
    %c0_i32_1 = arith.constant 0 : i32
    return %c0_i32, %c0_i32_0 : i32, i32
  }
  func.func @transform_6(%arg0: i32) -> (i32, i32) {
    %c0_i32 = arith.constant 0 : i32
    %c0_i32_0 = arith.constant 0 : i32
    %c0_i32_1 = arith.constant 0 : i32
    return %c0_i32, %c0_i32_0 : i32, i32
  }
  func.func @transform_7(%arg0: i32) -> (i32, i32) {
    %c0_i32 = arith.constant 0 : i32
    %c0_i32_0 = arith.constant 0 : i32
    %c0_i32_1 = arith.constant 0 : i32
    return %c0_i32, %c0_i32_0 : i32, i32
  }
  func.func @transform_8(%arg0: i32) -> (i32, i32) {
    %c0_i32 = arith.constant 0 : i32
    %c0_i32_0 = arith.constant 0 : i32
    %c0_i32_1 = arith.constant 0 : i32
    return %c0_i32, %c0_i32_0 : i32, i32
  }
}

module attributes {stable_mosaic.version = 11 : i64} {
  func.func @kernel(%arg0: memref<2x64xf32, #tpu.memory_space<vmem>>, %arg1: memref<64x32xbf16, #tpu.memory_space<vmem>>, %arg2: memref<1x32xf32, #tpu.memory_space<vmem>>, %arg3: memref<32x9xbf16, #tpu.memory_space<vmem>>, %arg4: memref<1x9xf32, #tpu.memory_space<vmem>>, %arg5: memref<2x9xf32, #tpu.memory_space<vmem>>) attributes {dimension_semantics = [], scalar_prefetch = 0 : i64, scratch_operands = 0 : i64, tpu.core_type = #tpu.core_type<tc>} {
    %c0 = arith.constant 0 : index
    %c0_0 = arith.constant 0 : index
    %0 = vector.load %arg0[%c0, %c0_0] : memref<2x64xf32, #tpu.memory_space<vmem>>, vector<2x64xf32>
    %c0_1 = arith.constant 0 : index
    %c0_2 = arith.constant 0 : index
    %1 = vector.load %arg1[%c0_1, %c0_2] : memref<64x32xbf16, #tpu.memory_space<vmem>>, vector<64x32xbf16>
    %c0_3 = arith.constant 0 : index
    %c0_4 = arith.constant 0 : index
    %2 = vector.load %arg2[%c0_3, %c0_4] : memref<1x32xf32, #tpu.memory_space<vmem>>, vector<1x32xf32>
    %3 = arith.truncf %0 : vector<2x64xf32> to vector<2x64xbf16>
    %cst = arith.constant dense<0.000000e+00> : vector<2x32xf32>
    %4 = tpu.matmul %3, %1, %cst {dimension_numbers = #tpu.dot_dimension_numbers<[1], [0], [0], [1], [0, 0, 1, 1], [], []>} : vector<2x64xbf16>, vector<64x32xbf16>, vector<2x32xf32> -> vector<2x32xf32>
    %5 = vector.broadcast %2 : vector<1x32xf32> to vector<2x32xf32>
    %6 = arith.addf %4, %5 : vector<2x32xf32>
    %cst_5 = arith.constant 0.000000e+00 : f32
    %7 = vector.broadcast %cst_5 : f32 to vector<2x32xf32>
    %8 = arith.maximumf %6, %7 : vector<2x32xf32>
    %c0_6 = arith.constant 0 : index
    %c0_7 = arith.constant 0 : index
    %9 = vector.load %arg3[%c0_6, %c0_7] : memref<32x9xbf16, #tpu.memory_space<vmem>>, vector<32x9xbf16>
    %c0_8 = arith.constant 0 : index
    %c0_9 = arith.constant 0 : index
    %10 = vector.load %arg4[%c0_8, %c0_9] : memref<1x9xf32, #tpu.memory_space<vmem>>, vector<1x9xf32>
    %11 = arith.truncf %8 : vector<2x32xf32> to vector<2x32xbf16>
    %cst_10 = arith.constant dense<0.000000e+00> : vector<2x9xf32>
    %12 = tpu.matmul %11, %9, %cst_10 {dimension_numbers = #tpu.dot_dimension_numbers<[1], [0], [0], [1], [0, 0, 1, 1], [], []>} : vector<2x32xbf16>, vector<32x9xbf16>, vector<2x9xf32> -> vector<2x9xf32>
    %13 = vector.broadcast %10 : vector<1x9xf32> to vector<2x9xf32>
    %14 = arith.addf %12, %13 : vector<2x9xf32>
    %c0_11 = arith.constant 0 : index
    %c0_12 = arith.constant 0 : index
    %15 = vector.load %arg5[%c0_11, %c0_12] : memref<2x9xf32, #tpu.memory_space<vmem>>, vector<2x9xf32>
    tpu.vector_store %arg5[%c0_11, %c0_12], %14 {strides = array<i32>} : memref<2x9xf32, #tpu.memory_space<vmem>>, vector<2x9xf32>,
    return
  }
}

module attributes {stable_mosaic.version = 11 : i64} {
  func.func @kernel(%arg0: i32, %arg1: memref<2x128x3xf32, #tpu.memory_space<vmem>>, %arg2: memref<3x16xbf16, #tpu.memory_space<vmem>>, %arg3: memref<1x16xf32, #tpu.memory_space<vmem>>, %arg4: memref<16x32xbf16, #tpu.memory_space<vmem>>, %arg5: memref<1x32xf32, #tpu.memory_space<vmem>>, %arg6: memref<32x64xbf16, #tpu.memory_space<vmem>>, %arg7: memref<1x64xf32, #tpu.memory_space<vmem>>, %arg8: memref<2x64xf32, #tpu.memory_space<vmem>>) attributes {dimension_semantics = [#tpu.dimension_semantics<arbitrary>], iteration_bounds = array<i64: 2>, scalar_prefetch = 0 : i64, scratch_operands = 0 : i64, tpu.core_type = #tpu.core_type<tc>, window_params = [{transform_indices = @transform_0, window_bounds = array<i64: 2, 128, 3>}, {pipeline_mode = #tpu.pipeline_mode<synchronous>, transform_indices = @transform_1, window_bounds = array<i64: 3, 16>}, {pipeline_mode = #tpu.pipeline_mode<synchronous>, transform_indices = @transform_2, window_bounds = array<i64: 1, 16>}, {pipeline_mode = #tpu.pipeline_mode<synchronous>, transform_indices = @transform_3, window_bounds = array<i64: 16, 32>}, {pipeline_mode = #tpu.pipeline_mode<synchronous>, transform_indices = @transform_4, window_bounds = array<i64: 1, 32>}, {pipeline_mode = #tpu.pipeline_mode<synchronous>, transform_indices = @transform_5, window_bounds = array<i64: 32, 64>}, {pipeline_mode = #tpu.pipeline_mode<synchronous>, transform_indices = @transform_6, window_bounds = array<i64: 1, 64>}, {pipeline_mode = #tpu.pipeline_mode<synchronous>, transform_indices = @transform_7, window_bounds = array<i64: 2, 64>}]} {
    %c0 = arith.constant 0 : index
    %c0_0 = arith.constant 0 : index
    %c0_1 = arith.constant 0 : index
    %0 = vector.load %arg1[%c0, %c0_0, %c0_1] : memref<2x128x3xf32, #tpu.memory_space<vmem>>, vector<2x128x3xf32>
    %1 = vector.shape_cast %0 : vector<2x128x3xf32> to vector<256x3xf32>
    %c0_2 = arith.constant 0 : index
    %c0_3 = arith.constant 0 : index
    %2 = vector.load %arg2[%c0_2, %c0_3] : memref<3x16xbf16, #tpu.memory_space<vmem>>, vector<3x16xbf16>
    %c0_4 = arith.constant 0 : index
    %c0_5 = arith.constant 0 : index
    %3 = vector.load %arg3[%c0_4, %c0_5] : memref<1x16xf32, #tpu.memory_space<vmem>>, vector<1x16xf32>
    %4 = arith.truncf %1 : vector<256x3xf32> to vector<256x3xbf16>
    %cst = arith.constant dense<0.000000e+00> : vector<256x16xf32>
    %5 = tpu.matmul %4, %2, %cst {dimension_numbers = #tpu.dot_dimension_numbers<[1], [0], [0], [1], [0, 0, 1, 1], [], []>} : vector<256x3xbf16>, vector<3x16xbf16>, vector<256x16xf32> -> vector<256x16xf32>
    %6 = vector.broadcast %3 : vector<1x16xf32> to vector<256x16xf32>
    %7 = arith.addf %5, %6 : vector<256x16xf32>
    %cst_6 = arith.constant 0.000000e+00 : f32
    %8 = vector.broadcast %cst_6 : f32 to vector<256x16xf32>
    %9 = arith.maximumf %7, %8 : vector<256x16xf32>
    %c0_7 = arith.constant 0 : index
    %c0_8 = arith.constant 0 : index
    %10 = vector.load %arg4[%c0_7, %c0_8] : memref<16x32xbf16, #tpu.memory_space<vmem>>, vector<16x32xbf16>
    %c0_9 = arith.constant 0 : index
    %c0_10 = arith.constant 0 : index
    %11 = vector.load %arg5[%c0_9, %c0_10] : memref<1x32xf32, #tpu.memory_space<vmem>>, vector<1x32xf32>
    %12 = arith.truncf %9 : vector<256x16xf32> to vector<256x16xbf16>
    %cst_11 = arith.constant dense<0.000000e+00> : vector<256x32xf32>
    %13 = tpu.matmul %12, %10, %cst_11 {dimension_numbers = #tpu.dot_dimension_numbers<[1], [0], [0], [1], [0, 0, 1, 1], [], []>} : vector<256x16xbf16>, vector<16x32xbf16>, vector<256x32xf32> -> vector<256x32xf32>
    %14 = vector.broadcast %11 : vector<1x32xf32> to vector<256x32xf32>
    %15 = arith.addf %13, %14 : vector<256x32xf32>
    %cst_12 = arith.constant 0.000000e+00 : f32
    %16 = vector.broadcast %cst_12 : f32 to vector<256x32xf32>
    %17 = arith.maximumf %15, %16 : vector<256x32xf32>
    %c0_13 = arith.constant 0 : index
    %c0_14 = arith.constant 0 : index
    %18 = vector.load %arg6[%c0_13, %c0_14] : memref<32x64xbf16, #tpu.memory_space<vmem>>, vector<32x64xbf16>
    %c0_15 = arith.constant 0 : index
    %c0_16 = arith.constant 0 : index
    %19 = vector.load %arg7[%c0_15, %c0_16] : memref<1x64xf32, #tpu.memory_space<vmem>>, vector<1x64xf32>
    %20 = arith.truncf %17 : vector<256x32xf32> to vector<256x32xbf16>
    %cst_17 = arith.constant dense<0.000000e+00> : vector<256x64xf32>
    %21 = tpu.matmul %20, %18, %cst_17 {dimension_numbers = #tpu.dot_dimension_numbers<[1], [0], [0], [1], [0, 0, 1, 1], [], []>} : vector<256x32xbf16>, vector<32x64xbf16>, vector<256x64xf32> -> vector<256x64xf32>
    %22 = vector.broadcast %19 : vector<1x64xf32> to vector<256x64xf32>
    %23 = arith.addf %21, %22 : vector<256x64xf32>
    %cst_18 = arith.constant 0.000000e+00 : f32
    %24 = vector.broadcast %cst_18 : f32 to vector<256x64xf32>
    %25 = arith.maximumf %23, %24 : vector<256x64xf32>
    %26 = vector.shape_cast %25 : vector<256x64xf32> to vector<2x128x64xf32>
    %cst_19 = arith.constant dense<0xFF800000> : vector<2x64xf32>
    %27 = vector.multi_reduction <maximumf>, %26, %cst_19 [1] : vector<2x128x64xf32> to vector<2x64xf32>
    %c0_i32 = arith.constant 0 : i32
    %28 = arith.cmpi eq, %arg0, %c0_i32 : i32
    %29 = arith.extui %28 : i1 to i32
    %c0_i32_20 = arith.constant 0 : i32
    %30 = arith.cmpi ne, %29, %c0_i32_20 : i32
    scf.if %30 {
      %cst_25 = arith.constant 0xFF800000 : f32
      %34 = vector.broadcast %cst_25 : f32 to vector<2x64xf32>
      %c0_26 = arith.constant 0 : index
      %c0_27 = arith.constant 0 : index
      %35 = vector.load %arg8[%c0_26, %c0_27] : memref<2x64xf32, #tpu.memory_space<vmem>>, vector<2x64xf32>
      tpu.vector_store %arg8[%c0_26, %c0_27], %34 {strides = array<i32>} : memref<2x64xf32, #tpu.memory_space<vmem>>, vector<2x64xf32>,
    } else {
    }
    %c0_21 = arith.constant 0 : index
    %c0_22 = arith.constant 0 : index
    %31 = vector.load %arg8[%c0_21, %c0_22] : memref<2x64xf32, #tpu.memory_space<vmem>>, vector<2x64xf32>
    %32 = arith.maximumf %31, %27 : vector<2x64xf32>
    %c0_23 = arith.constant 0 : index
    %c0_24 = arith.constant 0 : index
    %33 = vector.load %arg8[%c0_23, %c0_24] : memref<2x64xf32, #tpu.memory_space<vmem>>, vector<2x64xf32>
    tpu.vector_store %arg8[%c0_23, %c0_24], %32 {strides = array<i32>} : memref<2x64xf32, #tpu.memory_space<vmem>>, vector<2x64xf32>,
    return
  }
  func.func @transform_0(%arg0: i32) -> (i32, i32, i32) {
    %c0_i32 = arith.constant 0 : i32
    %c0_i32_0 = arith.constant 0 : i32
    %c0_i32_1 = arith.constant 0 : i32
    return %c0_i32, %arg0, %c0_i32_0 : i32, i32, i32
  }
  func.func @transform_1(%arg0: i32) -> (i32, i32) {
    %c0_i32 = arith.constant 0 : i32
    %c0_i32_0 = arith.constant 0 : i32
    %c0_i32_1 = arith.constant 0 : i32
    return %c0_i32, %c0_i32_0 : i32, i32
  }
  func.func @transform_2(%arg0: i32) -> (i32, i32) {
    %c0_i32 = arith.constant 0 : i32
    %c0_i32_0 = arith.constant 0 : i32
    %c0_i32_1 = arith.constant 0 : i32
    return %c0_i32, %c0_i32_0 : i32, i32
  }
  func.func @transform_3(%arg0: i32) -> (i32, i32) {
    %c0_i32 = arith.constant 0 : i32
    %c0_i32_0 = arith.constant 0 : i32
    %c0_i32_1 = arith.constant 0 : i32
    return %c0_i32, %c0_i32_0 : i32, i32
  }
  func.func @transform_4(%arg0: i32) -> (i32, i32) {
    %c0_i32 = arith.constant 0 : i32
    %c0_i32_0 = arith.constant 0 : i32
    %c0_i32_1 = arith.constant 0 : i32
    return %c0_i32, %c0_i32_0 : i32, i32
  }
  func.func @transform_5(%arg0: i32) -> (i32, i32) {
    %c0_i32 = arith.constant 0 : i32
    %c0_i32_0 = arith.constant 0 : i32
    %c0_i32_1 = arith.constant 0 : i32
    return %c0_i32, %c0_i32_0 : i32, i32
  }
  func.func @transform_6(%arg0: i32) -> (i32, i32) {
    %c0_i32 = arith.constant 0 : i32
    %c0_i32_0 = arith.constant 0 : i32
    %c0_i32_1 = arith.constant 0 : i32
    return %c0_i32, %c0_i32_0 : i32, i32
  }
  func.func @transform_7(%arg0: i32) -> (i32, i32) {
    %c0_i32 = arith.constant 0 : i32
    %c0_i32_0 = arith.constant 0 : i32
    %c0_i32_1 = arith.constant 0 : i32
    return %c0_i32, %c0_i32_0 : i32, i32
  }
}

module attributes {stable_mosaic.version = 11 : i64} {
  func.func @kernel(%arg0: memref<2x64xf32, #tpu.memory_space<vmem>>, %arg1: memref<64x48xbf16, #tpu.memory_space<vmem>>, %arg2: memref<1x48xf32, #tpu.memory_space<vmem>>, %arg3: memref<48x32xbf16, #tpu.memory_space<vmem>>, %arg4: memref<1x32xf32, #tpu.memory_space<vmem>>, %arg5: memref<2x32xf32, #tpu.memory_space<vmem>>) attributes {dimension_semantics = [], scalar_prefetch = 0 : i64, scratch_operands = 0 : i64, tpu.core_type = #tpu.core_type<tc>} {
    %c0 = arith.constant 0 : index
    %c0_0 = arith.constant 0 : index
    %0 = vector.load %arg0[%c0, %c0_0] : memref<2x64xf32, #tpu.memory_space<vmem>>, vector<2x64xf32>
    %c0_1 = arith.constant 0 : index
    %c0_2 = arith.constant 0 : index
    %1 = vector.load %arg1[%c0_1, %c0_2] : memref<64x48xbf16, #tpu.memory_space<vmem>>, vector<64x48xbf16>
    %c0_3 = arith.constant 0 : index
    %c0_4 = arith.constant 0 : index
    %2 = vector.load %arg2[%c0_3, %c0_4] : memref<1x48xf32, #tpu.memory_space<vmem>>, vector<1x48xf32>
    %3 = arith.truncf %0 : vector<2x64xf32> to vector<2x64xbf16>
    %cst = arith.constant dense<0.000000e+00> : vector<2x48xf32>
    %4 = tpu.matmul %3, %1, %cst {dimension_numbers = #tpu.dot_dimension_numbers<[1], [0], [0], [1], [0, 0, 1, 1], [], []>} : vector<2x64xbf16>, vector<64x48xbf16>, vector<2x48xf32> -> vector<2x48xf32>
    %5 = vector.broadcast %2 : vector<1x48xf32> to vector<2x48xf32>
    %6 = arith.addf %4, %5 : vector<2x48xf32>
    %cst_5 = arith.constant 0.000000e+00 : f32
    %7 = vector.broadcast %cst_5 : f32 to vector<2x48xf32>
    %8 = arith.maximumf %6, %7 : vector<2x48xf32>
    %c0_6 = arith.constant 0 : index
    %c0_7 = arith.constant 0 : index
    %9 = vector.load %arg3[%c0_6, %c0_7] : memref<48x32xbf16, #tpu.memory_space<vmem>>, vector<48x32xbf16>
    %c0_8 = arith.constant 0 : index
    %c0_9 = arith.constant 0 : index
    %10 = vector.load %arg4[%c0_8, %c0_9] : memref<1x32xf32, #tpu.memory_space<vmem>>, vector<1x32xf32>
    %11 = arith.truncf %8 : vector<2x48xf32> to vector<2x48xbf16>
    %cst_10 = arith.constant dense<0.000000e+00> : vector<2x32xf32>
    %12 = tpu.matmul %11, %9, %cst_10 {dimension_numbers = #tpu.dot_dimension_numbers<[1], [0], [0], [1], [0, 0, 1, 1], [], []>} : vector<2x48xbf16>, vector<48x32xbf16>, vector<2x32xf32> -> vector<2x32xf32>
    %13 = vector.broadcast %10 : vector<1x32xf32> to vector<2x32xf32>
    %14 = arith.addf %12, %13 : vector<2x32xf32>
    %c0_11 = arith.constant 0 : index
    %c0_12 = arith.constant 0 : index
    %15 = vector.load %arg5[%c0_11, %c0_12] : memref<2x32xf32, #tpu.memory_space<vmem>>, vector<2x32xf32>
    tpu.vector_store %arg5[%c0_11, %c0_12], %14 {strides = array<i32>} : memref<2x32xf32, #tpu.memory_space<vmem>>, vector<2x32xf32>,
    return
  }
}

</mosaic_0001>

<llo_original>
// kernel: simple_pointnet_forward.5
$region0: #{simple_pointnet_forward.5}
  #allocation0 [shape = 'u32[]', space=smem, size = 0x4, offset = 0x4, fixed_abs, tag = 'smem constant byte address 0x4 - core index']
  #allocation1 [shape = 'u32[72,128]{1,0:T(1,128)}', space=vmem, size = 0x9000, scoped, tag = 'internal scratch']
  %s0 = inlined_call_operand.vmem [shape: f32[2,64], index: 0, kind: input, shape index: {}]
  %s1 = inlined_call_operand.vmem [shape: bf16[64,32], index: 1, kind: input, shape index: {}]
  %s2 = inlined_call_operand.vmem [shape: f32[1,32], index: 2, kind: input, shape index: {}]
  %s3 = inlined_call_operand.vmem [shape: bf16[32,9], index: 3, kind: input, shape index: {}]
  %s4 = inlined_call_operand.vmem [shape: f32[1,9], index: 4, kind: input, shape index: {}]
  %s5 = inlined_call_operand.vmem [shape: f32[2,9], index: 5, kind: output, shape index: {}]
  %s6 = sld [smem:[#allocation0]]
  $region30: #{simple_pointnet_forward.5} parent=0
    _
  %s8 = ssub.s32 1, %s6
  %s9 = scalar_select 0, %s8, %s6
  // Predicated region
  $region2: #{simple_pointnet_forward.5} parent=0 // pred_check
    _
  $region3: #{simple_pointnet_forward.5} parent=0 // pred_check_branch
    %11 = sbr.rel (0) target = $region5
  $region4: #{simple_pointnet_forward.5} parent=0 // pred_region
    _
  $region5: #{simple_pointnet_forward.5} parent=0 // pred_fallthru
    _
  // Predicated region
  $region6: #{simple_pointnet_forward.5} parent=0 // pred_check
    _
  $region7: #{simple_pointnet_forward.5} parent=0 // pred_check_branch
    %13 = sbr.rel (0) target = $region9
  $region8: #{simple_pointnet_forward.5} parent=0 // pred_region
    _
  $region9: #{simple_pointnet_forward.5} parent=0 // pred_fallthru
    _
  // Predicated region
  $region10: #{simple_pointnet_forward.5} parent=0 // pred_check
    _
  $region11: #{simple_pointnet_forward.5} parent=0 // pred_check_branch
    %15 = sbr.rel (0) target = $region13
  $region12: #{simple_pointnet_forward.5} parent=0 // pred_region
    _
  $region13: #{simple_pointnet_forward.5} parent=0 // pred_fallthru
    _
  // Predicated region
  $region14: #{simple_pointnet_forward.5} parent=0 // pred_check
    _
  $region15: #{simple_pointnet_forward.5} parent=0 // pred_check_branch
    %17 = sbr.rel (0) target = $region17
  $region16: #{simple_pointnet_forward.5} parent=0 // pred_region
    _
  $region17: #{simple_pointnet_forward.5} parent=0 // pred_fallthru
    _
  // Predicated region
  $region18: #{simple_pointnet_forward.5} parent=0 // pred_check
    _
  $region19: #{simple_pointnet_forward.5} parent=0 // pred_check_branch
    %19 = sbr.rel (0) target = $region21
  $region20: #{simple_pointnet_forward.5} parent=0 // pred_region
    _
  $region21: #{simple_pointnet_forward.5} parent=0 // pred_fallthru
    _
  %v21 = vld [vmem:[%s0] sm:$0x3]
  %v22 = vld [vmem:[%s1] sm:$0xf]
  %v23 = vld [vmem:[%s1 + $0x4] sm:$0xf]
  %v24 = vld [vmem:[%s1 + $0x8] sm:$0xf]
  %v25 = vld [vmem:[%s1 + $0xc] sm:$0xf]
  %v26 = vld [vmem:[%s1 + $0x10] sm:$0xf]
  %v27 = vld [vmem:[%s1 + $0x14] sm:$0xf]
  %v28 = vld [vmem:[%s1 + $0x18] sm:$0xf]
  %v29 = vld [vmem:[%s1 + $0x1c] sm:$0xf]
  %v30 = vld [vmem:[%s2] sm:$0x1]
  %v31 = vpack.c.bf16 %v21, %v21
  %v33 = vperm.slane %v30, 0
  %v43 = vunpack.c.l.b16 %v22
  %v44 = vunpack.c.l.b16 %v23
  %v45 = vunpack.c.l.b16 %v24
  %v46 = vunpack.c.l.b16 %v25
  %v47 = vunpack.c.l.b16 %v26
  %v48 = vunpack.c.l.b16 %v27
  %v49 = vunpack.c.l.b16 %v28
  %v50 = vunpack.c.l.b16 %v29
  %v51 = vpack.c.b16 %v44, %v43
  %v52 = vpack.c.b16 %v46, %v45
  %v53 = vpack.c.b16 %v48, %v47
  %v54 = vpack.c.b16 %v50, %v49
  %vm59 = vcmask 523264
  %v61 = vsel %vm59, %v31, 0
  %63 = vmatpush.bf16.msra.mxu0 0
  %64 = vmatpush.bf16.msra.mxu0 0
  %65 = vmatpush.bf16.msra.mxu0 0
  %66 = vmatpush.bf16.msra.mxu0 0
  %67 = vmatpush.bf16.msra.mxu0 %v54
  %68 = vmatpush.bf16.msra.mxu0 %v53
  %69 = vmatpush.bf16.msra.mxu0 %v52
  %70 = vmatpush.bf16.msra.mxu0 %v51
  %71 = vmatmul.bf16.gmra.mxu0 %v61
  %v72 = vpop.f32.mrf.mxu0
  %v73 = vadd.f32 %v33, %v72
  %v74 = vpop.f32.mrf.mxu0
  %75 = vdwg.mxu0
  %v76 = vmax.f32 %v73, 0.0
  %v77 = vld [vmem:[%s3] sm:$0xf]
  %v78 = vld [vmem:[%s3 + $0x4] sm:$0xf]
  %v79 = vld [vmem:[%s3 + $0x8] sm:$0xf]
  %v80 = vld [vmem:[%s3 + $0xc] sm:$0xf]
  %v81 = vld [vmem:[%s4] sm:$0x1]
  %v82 = vpack.c.bf16 %v76, %v76
  %v84 = vperm.slane %v81, 0
  %v90 = vunpack.c.l.b16 %v77
  %v91 = vunpack.c.l.b16 %v78
  %v92 = vunpack.c.l.b16 %v79
  %v93 = vunpack.c.l.b16 %v80
  %v94 = vpack.c.b16 %v91, %v90
  %v95 = vpack.c.b16 %v93, %v92
  %vm98 = vcmask 261120
  %v100 = vsel %vm98, %v82, 0
  %102 = vmatpush.bf16.msra.mxu0 0
  %103 = vmatpush.bf16.msra.mxu0 0
  %104 = vmatpush.bf16.msra.mxu0 0
  %105 = vmatpush.bf16.msra.mxu0 0
  %106 = vmatpush.bf16.msra.mxu0 0
  %107 = vmatpush.bf16.msra.mxu0 0
  %108 = vmatpush.bf16.msra.mxu0 %v95
  %109 = vmatpush.bf16.msra.mxu0 %v94
  %110 = vmatmul.bf16.gmra.mxu0 %v100
  %v111 = vpop.f32.mrf.mxu0
  %v112 = vadd.f32 %v84, %v111
  %v113 = vpop.f32.mrf.mxu0
  %114 = vdwg.mxu0
  %vm115 = vcmask 66560
  %116 = vst.msk [vmem:[%s5] sm:$0x3] %vm115, %v112
  // Predicated region
  $region22: #{simple_pointnet_forward.5} parent=0 // pred_check
    _
  $region23: #{simple_pointnet_forward.5} parent=0 // pred_check_branch
    %118 = sbr.rel (0) target = $region25
  $region24: #{simple_pointnet_forward.5} parent=0 // pred_region
    _
  $region25: #{simple_pointnet_forward.5} parent=0 // pred_fallthru
    _
  // Predicated region
  $region26: #{simple_pointnet_forward.5} parent=0 // pred_check
    _
  $region27: #{simple_pointnet_forward.5} parent=0 // pred_check_branch
    %120 = sbr.rel (0) target = $region29
  $region28: #{simple_pointnet_forward.5} parent=0 // pred_region
    _
  $region29: #{simple_pointnet_forward.5} parent=0 // pred_fallthru
    _

// kernel: simple_pointnet_forward.7
$region0: #{simple_pointnet_forward.7}
  #allocation0 [shape = 'u32[]', space=smem, size = 0x4, offset = 0x4, fixed_abs, tag = 'smem constant byte address 0x4 - core index']
  #allocation1 [shape = 'u32[72,128]{1,0:T(1,128)}', space=vmem, size = 0x9000, scoped, tag = 'internal scratch']
  %s0 = inlined_call_operand.vmem [shape: f32[2,64], index: 0, kind: input, shape index: {}]
  %s1 = inlined_call_operand.vmem [shape: bf16[64,48], index: 1, kind: input, shape index: {}]
  %s2 = inlined_call_operand.vmem [shape: f32[1,48], index: 2, kind: input, shape index: {}]
  %s3 = inlined_call_operand.vmem [shape: bf16[48,32], index: 3, kind: input, shape index: {}]
  %s4 = inlined_call_operand.vmem [shape: f32[1,32], index: 4, kind: input, shape index: {}]
  %s5 = inlined_call_operand.hbm [shape: f32[2,32], index: 5, kind: output, shape index: {}]
  %s6 = sld [smem:[#allocation0]]
  $region30: #{simple_pointnet_forward.7} parent=0
    _
  %s8 = ssub.s32 1, %s6
  %s9 = scalar_select 0, %s8, %s6
  $region1: #{simple_pointnet_forward.7} parent=0
    #allocation2 [shape = 'u8[1024]{0}', space=vmem, size = 0x400, scoped, tag = 'output window, operand 0, single buffered']
    #allocation3 [shape = 's32[1]{0}', space=sflag, size = 0x4, scoped, tag = 'scoped memory for simple_pointnet_forward.7']
    %10 = vsyncpa [#allocation3], 0
    // Predicated region
    $region2: #{simple_pointnet_forward.7} parent=1 // pred_check
      _
    $region3: #{simple_pointnet_forward.7} parent=1 // pred_check_branch
      %12 = sbr.rel (0) target = $region5
    $region4: #{simple_pointnet_forward.7} parent=1 // pred_region
      _
    $region5: #{simple_pointnet_forward.7} parent=1 // pred_fallthru
      _
    // Predicated region
    $region6: #{simple_pointnet_forward.7} parent=1 // pred_check
      _
    $region7: #{simple_pointnet_forward.7} parent=1 // pred_check_branch
      %14 = sbr.rel (0) target = $region9
    $region8: #{simple_pointnet_forward.7} parent=1 // pred_region
      _
    $region9: #{simple_pointnet_forward.7} parent=1 // pred_fallthru
      _
    // Predicated region
    $region10: #{simple_pointnet_forward.7} parent=1 // pred_check
      _
    $region11: #{simple_pointnet_forward.7} parent=1 // pred_check_branch
      %16 = sbr.rel (0) target = $region13
    $region12: #{simple_pointnet_forward.7} parent=1 // pred_region
      _
    $region13: #{simple_pointnet_forward.7} parent=1 // pred_fallthru
      _
    // Predicated region
    $region14: #{simple_pointnet_forward.7} parent=1 // pred_check
      _
    $region15: #{simple_pointnet_forward.7} parent=1 // pred_check_branch
      %18 = sbr.rel (0) target = $region17
    $region16: #{simple_pointnet_forward.7} parent=1 // pred_region
      _
    $region17: #{simple_pointnet_forward.7} parent=1 // pred_fallthru
      _
    // Predicated region
    $region18: #{simple_pointnet_forward.7} parent=1 // pred_check
      _
    $region19: #{simple_pointnet_forward.7} parent=1 // pred_check_branch
      %20 = sbr.rel (0) target = $region21
    $region20: #{simple_pointnet_forward.7} parent=1 // pred_region
      _
    $region21: #{simple_pointnet_forward.7} parent=1 // pred_fallthru
      _
    %v22 = vld [vmem:[%s0] sm:$0x3]
    %v23 = vld [vmem:[%s1] sm:$0xf]
    %v24 = vld [vmem:[%s1 + $0x4] sm:$0xf]
    %v25 = vld [vmem:[%s1 + $0x8] sm:$0xf]
    %v26 = vld [vmem:[%s1 + $0xc] sm:$0xf]
    %v27 = vld [vmem:[%s1 + $0x10] sm:$0xf]
    %v28 = vld [vmem:[%s1 + $0x14] sm:$0xf]
    %v29 = vld [vmem:[%s1 + $0x18] sm:$0xf]
    %v30 = vld [vmem:[%s1 + $0x1c] sm:$0xf]
    %v31 = vld [vmem:[%s2] sm:$0x1]
    %v32 = vpack.c.bf16 %v22, %v22
    %v34 = vperm.slane %v31, 0
    %v44 = vunpack.c.l.b16 %v23
    %v45 = vunpack.c.l.b16 %v24
    %v46 = vunpack.c.l.b16 %v25
    %v47 = vunpack.c.l.b16 %v26
    %v48 = vunpack.c.l.b16 %v27
    %v49 = vunpack.c.l.b16 %v28
    %v50 = vunpack.c.l.b16 %v29
    %v51 = vunpack.c.l.b16 %v30
    %v52 = vpack.c.b16 %v45, %v44
    %v53 = vpack.c.b16 %v47, %v46
    %v54 = vpack.c.b16 %v49, %v48
    %v55 = vpack.c.b16 %v51, %v50
    %vm60 = vcmask 523264
    %v62 = vsel %vm60, %v32, 0
    %64 = vmatpush.bf16.msra.mxu0 0
    %65 = vmatpush.bf16.msra.mxu0 0
    %66 = vmatpush.bf16.msra.mxu0 0
    %67 = vmatpush.bf16.msra.mxu0 0
    %68 = vmatpush.bf16.msra.mxu0 %v55
    %69 = vmatpush.bf16.msra.mxu0 %v54
    %70 = vmatpush.bf16.msra.mxu0 %v53
    %71 = vmatpush.bf16.msra.mxu0 %v52
    %72 = vmatmul.bf16.gmra.mxu0 %v62
    %v73 = vpop.f32.mrf.mxu0
    %v74 = vadd.f32 %v34, %v73
    %v75 = vpop.f32.mrf.mxu0
    %76 = vdwg.mxu0
    %v77 = vmax.f32 %v74, 0.0
    %v78 = vld [vmem:[%s3] sm:$0xf]
    %v79 = vld [vmem:[%s3 + $0x4] sm:$0xf]
    %v80 = vld [vmem:[%s3 + $0x8] sm:$0xf]
    %v81 = vld [vmem:[%s3 + $0xc] sm:$0xf]
    %v82 = vld [vmem:[%s3 + $0x10] sm:$0xf]
    %v83 = vld [vmem:[%s3 + $0x14] sm:$0xf]
    %v84 = vld [vmem:[%s4] sm:$0x1]
    %v85 = vpack.c.bf16 %v77, %v77
    %v87 = vperm.slane %v84, 0
    %v95 = vunpack.c.l.b16 %v78
    %v96 = vunpack.c.l.b16 %v79
    %v97 = vunpack.c.l.b16 %v80
    %v98 = vunpack.c.l.b16 %v81
    %v99 = vunpack.c.l.b16 %v82
    %v100 = vunpack.c.l.b16 %v83
    %v101 = vpack.c.b16 %v96, %v95
    %v102 = vpack.c.b16 %v98, %v97
    %v103 = vpack.c.b16 %v100, %v99
    %vm107 = vcmask 392192
    %v109 = vsel %vm107, %v85, 0
    %111 = vmatpush.bf16.msra.mxu0 0
    %112 = vmatpush.bf16.msra.mxu0 0
    %113 = vmatpush.bf16.msra.mxu0 0
    %114 = vmatpush.bf16.msra.mxu0 0
    %115 = vmatpush.bf16.msra.mxu0 0
    %116 = vmatpush.bf16.msra.mxu0 %v103
    %117 = vmatpush.bf16.msra.mxu0 %v102
    %118 = vmatpush.bf16.msra.mxu0 %v101
    %119 = vmatmul.bf16.gmra.mxu0 %v109
    %v120 = vpop.f32.mrf.mxu0
    %v121 = vadd.f32 %v87, %v120
    %v122 = vpop.f32.mrf.mxu0
    %123 = vdwg.mxu0
    %vm124 = vcmask 254976
    %125 = vst.msk [vmem:[#allocation2] sm:$0x3] %vm124, %v121
    // Predicated region
    $region22: #{simple_pointnet_forward.7} parent=1 // pred_check
      _
    $region23: #{simple_pointnet_forward.7} parent=1 // pred_check_branch
      %127 = sbr.rel (0) target = $region25
    $region24: #{simple_pointnet_forward.7} parent=1 // pred_region
      %129 = vsyncadd [#allocation3], 0
      %s131 = sshll.u32 [#allocation2], 4
      %s132 = int_to_ptr.vmem [resolvable:$true] %s131
      %s133 = sshll.u32 %s5, 4
      %s134 = int_to_ptr.hbm [resolvable:$true] %s133
      %136 = dma.vmem_to_hbm [thread:$0]  %s132, 32, %s134, [#allocation3]
    $region25: #{simple_pointnet_forward.7} parent=1 // pred_fallthru
      _
    // Predicated region
    $region26: #{simple_pointnet_forward.7} parent=1 // pred_check
      _
    $region27: #{simple_pointnet_forward.7} parent=1 // pred_check_branch
      %138 = sbr.rel (0) target = $region29
    $region28: #{simple_pointnet_forward.7} parent=1 // pred_region
      %140 = dma.done [#allocation3], 32
    $region29: #{simple_pointnet_forward.7} parent=1 // pred_fallthru
      _
    %141 = vsyncpa [#allocation3], 1

// kernel: simple_pointnet_forward.6
$region0: #{simple_pointnet_forward.6}
  #allocation0 [shape = 'u32[]', space=smem, size = 0x4, offset = 0x4, fixed_abs, tag = 'smem constant byte address 0x4 - core index']
  #allocation1 [shape = 'u32[72,128]{1,0:T(1,128)}', space=vmem, size = 0x9000, scoped, tag = 'internal scratch']
  %s0 = inlined_call_operand.vmem [shape: f32[2,256,3], index: 0, kind: input, shape index: {}]
  %s1 = inlined_call_operand.vmem [shape: f32[2,3,3], index: 1, kind: input, shape index: {}]
  %s2 = inlined_call_operand.vmem [shape: bf16[3,16], index: 2, kind: input, shape index: {}]
  %s3 = inlined_call_operand.vmem [shape: f32[1,16], index: 3, kind: input, shape index: {}]
  %s4 = inlined_call_operand.vmem [shape: bf16[16,32], index: 4, kind: input, shape index: {}]
  %s5 = inlined_call_operand.vmem [shape: f32[1,32], index: 5, kind: input, shape index: {}]
  %s6 = inlined_call_operand.vmem [shape: bf16[32,64], index: 6, kind: input, shape index: {}]
  %s7 = inlined_call_operand.vmem [shape: f32[1,64], index: 7, kind: input, shape index: {}]
  %s8 = inlined_call_operand.vmem [shape: f32[2,64], index: 8, kind: output, shape index: {}]
  %s9 = sld [smem:[#allocation0]]
  $region107: #{simple_pointnet_forward.6} parent=0
    _
  %s11 = ssub.s32 1, %s9
  %s12 = scalar_select 0, %s11, %s9
  $region1: #{simple_pointnet_forward.6} parent=0
    #allocation2 [shape = 'u8[262144]{0}', space=vmem, size = 0x40000, scoped, tag = 'input window, operand 0']
    loop: start=0, step=1, limit=4
    $region2: #{simple_pointnet_forward.6} parent=1 // loop_pre_header
      _
    $region3: #{simple_pointnet_forward.6} parent=1 // loop_header
      %s14 = sphi 0, %s18
      %p15 = scmp.ge.s32.totalorder %s14, 4
      %s24 = sphi 0, %s26
      %s27 = sphi 0, %s24
      %s28 = sphi 0, %s27
      %s44 = sphi 0, %s28
      %s48 = sphi 0, %s48
      %s50 = sphi 0, %s48
      %s51 = sphi 0, %s50
      %s65 = sphi 0, %s51
      %s69 = sphi 0, %s69
      %s71 = sphi 0, %s69
      %s72 = sphi 0, %s71
      %s86 = sphi 0, %s72
      %s90 = sphi 0, %s90
      %s92 = sphi 0, %s90
      %s93 = sphi 0, %s92
      %s107 = sphi 0, %s93
      %s111 = sphi 0, %s111
      %s113 = sphi 0, %s111
      %s114 = sphi 0, %s113
      %s128 = sphi 0, %s114
      %s132 = sphi 0, %s132
      %s134 = sphi 0, %s132
      %s135 = sphi 0, %s134
      %s149 = sphi 0, %s135
      %s153 = sphi 0, %s153
      %s155 = sphi 0, %s153
      %s156 = sphi 0, %s155
      %s170 = sphi 0, %s156
      %s174 = sphi 0, %s174
      %s176 = sphi 0, %s174
      %s177 = sphi 0, %s176
      %s191 = sphi 0, %s177
      %s195 = sphi 0, %s195
      %s197 = sphi 0, %s195
      %s198 = sphi 0, %s197
      %s212 = sphi 0, %s198
    $region4: #{simple_pointnet_forward.6} parent=1 // loop_header_branch
      %17 = sbr.rel (%p15) target = $region8
    $region5: #{simple_pointnet_forward.6} parent=1 // loop_body
      %s19 = ssub.s32 %s14, 1
      %s20 = ssub.s32 %s14, 2
      %s21 = sadd.s32 %s14, 1
      %s22 = ssub.s32 %s14, %s21
      %p23 = scmp.eq.s32.totalorder %s22, 0
      %s25 = sadd.s32 %s24, 1
      %s26 = scalar_select %p23, %s24, %s25
      %p29 = pneg %p23
      %p30 = scmp.eq.s32.totalorder %s14, 1
      %p31 = por %p29, %p30
      %p32 = scmp.ne.s32.totalorder %s24, %s27
      %p33 = scmp.eq.s32.totalorder %s14, 0
      %p34 = por %p32, %p33
      %p35 = scmp.ne.s32.totalorder %s24, %s27
      %p36 = scmp.eq.s32.totalorder %s19, 1
      %p37 = por %p35, %p36
      %p38 = scmp.ne.s32.totalorder %s27, %s28
      %p39 = scmp.eq.s32.totalorder %s19, 0
      %p40 = por %p38, %p39
      %p41 = scmp.ne.s32.totalorder %s27, %s28
      %p42 = scmp.eq.s32.totalorder %s20, 1
      %p43 = por %p41, %p42
      %p45 = scmp.ne.s32.totalorder %s28, %s44
      %p46 = scmp.eq.s32.totalorder %s20, 0
      %p47 = por %p45, %p46
      %s49 = sadd.s32 %s48, 1
      %p52 = scmp.eq.s32.totalorder %s14, 1
      %p53 = scmp.ne.s32.totalorder %s48, %s50
      %p54 = scmp.eq.s32.totalorder %s14, 0
      %p55 = por %p53, %p54
      %p56 = scmp.ne.s32.totalorder %s48, %s50
      %p57 = scmp.eq.s32.totalorder %s19, 1
      %p58 = por %p56, %p57
      %p59 = scmp.ne.s32.totalorder %s50, %s51
      %p60 = scmp.eq.s32.totalorder %s19, 0
      %p61 = por %p59, %p60
      %p62 = scmp.ne.s32.totalorder %s50, %s51
      %p63 = scmp.eq.s32.totalorder %s20, 1
      %p64 = por %p62, %p63
      %p66 = scmp.ne.s32.totalorder %s51, %s65
      %p67 = scmp.eq.s32.totalorder %s20, 0
      %p68 = por %p66, %p67
      %s70 = sadd.s32 %s69, 1
      %p73 = scmp.eq.s32.totalorder %s14, 1
      %p74 = scmp.ne.s32.totalorder %s69, %s71
      %p75 = scmp.eq.s32.totalorder %s14, 0
      %p76 = por %p74, %p75
      %p77 = scmp.ne.s32.totalorder %s69, %s71
      %p78 = scmp.eq.s32.totalorder %s19, 1
      %p79 = por %p77, %p78
      %p80 = scmp.ne.s32.totalorder %s71, %s72
      %p81 = scmp.eq.s32.totalorder %s19, 0
      %p82 = por %p80, %p81
      %p83 = scmp.ne.s32.totalorder %s71, %s72
      %p84 = scmp.eq.s32.totalorder %s20, 1
      %p85 = por %p83, %p84
      %p87 = scmp.ne.s32.totalorder %s72, %s86
      %p88 = scmp.eq.s32.totalorder %s20, 0
      %p89 = por %p87, %p88
      %s91 = sadd.s32 %s90, 1
      %p94 = scmp.eq.s32.totalorder %s14, 1
      %p95 = scmp.ne.s32.totalorder %s90, %s92
      %p96 = scmp.eq.s32.totalorder %s14, 0
      %p97 = por %p95, %p96
      %p98 = scmp.ne.s32.totalorder %s90, %s92
      %p99 = scmp.eq.s32.totalorder %s19, 1
      %p100 = por %p98, %p99
      %p101 = scmp.ne.s32.totalorder %s92, %s93
      %p102 = scmp.eq.s32.totalorder %s19, 0
      %p103 = por %p101, %p102
      %p104 = scmp.ne.s32.totalorder %s92, %s93
      %p105 = scmp.eq.s32.totalorder %s20, 1
      %p106 = por %p104, %p105
      %p108 = scmp.ne.s32.totalorder %s93, %s107
      %p109 = scmp.eq.s32.totalorder %s20, 0
      %p110 = por %p108, %p109
      %s112 = sadd.s32 %s111, 1
      %p115 = scmp.eq.s32.totalorder %s14, 1
      %p116 = scmp.ne.s32.totalorder %s111, %s113
      %p117 = scmp.eq.s32.totalorder %s14, 0
      %p118 = por %p116, %p117
      %p119 = scmp.ne.s32.totalorder %s111, %s113
      %p120 = scmp.eq.s32.totalorder %s19, 1
      %p121 = por %p119, %p120
      %p122 = scmp.ne.s32.totalorder %s113, %s114
      %p123 = scmp.eq.s32.totalorder %s19, 0
      %p124 = por %p122, %p123
      %p125 = scmp.ne.s32.totalorder %s113, %s114
      %p126 = scmp.eq.s32.totalorder %s20, 1
      %p127 = por %p125, %p126
      %p129 = scmp.ne.s32.totalorder %s114, %s128
      %p130 = scmp.eq.s32.totalorder %s20, 0
      %p131 = por %p129, %p130
      %s133 = sadd.s32 %s132, 1
      %p136 = scmp.eq.s32.totalorder %s14, 1
      %p137 = scmp.ne.s32.totalorder %s132, %s134
      %p138 = scmp.eq.s32.totalorder %s14, 0
      %p139 = por %p137, %p138
      %p140 = scmp.ne.s32.totalorder %s132, %s134
      %p141 = scmp.eq.s32.totalorder %s19, 1
      %p142 = por %p140, %p141
      %p143 = scmp.ne.s32.totalorder %s134, %s135
      %p144 = scmp.eq.s32.totalorder %s19, 0
      %p145 = por %p143, %p144
      %p146 = scmp.ne.s32.totalorder %s134, %s135
      %p147 = scmp.eq.s32.totalorder %s20, 1
      %p148 = por %p146, %p147
      %p150 = scmp.ne.s32.totalorder %s135, %s149
      %p151 = scmp.eq.s32.totalorder %s20, 0
      %p152 = por %p150, %p151
      %s154 = sadd.s32 %s153, 1
      %p157 = scmp.eq.s32.totalorder %s14, 1
      %p158 = scmp.ne.s32.totalorder %s153, %s155
      %p159 = scmp.eq.s32.totalorder %s14, 0
      %p160 = por %p158, %p159
      %p161 = scmp.ne.s32.totalorder %s153, %s155
      %p162 = scmp.eq.s32.totalorder %s19, 1
      %p163 = por %p161, %p162
      %p164 = scmp.ne.s32.totalorder %s155, %s156
      %p165 = scmp.eq.s32.totalorder %s19, 0
      %p166 = por %p164, %p165
      %p167 = scmp.ne.s32.totalorder %s155, %s156
      %p168 = scmp.eq.s32.totalorder %s20, 1
      %p169 = por %p167, %p168
      %p171 = scmp.ne.s32.totalorder %s156, %s170
      %p172 = scmp.eq.s32.totalorder %s20, 0
      %p173 = por %p171, %p172
      %s175 = sadd.s32 %s174, 1
      %p178 = scmp.eq.s32.totalorder %s14, 1
      %p179 = scmp.ne.s32.totalorder %s174, %s176
      %p180 = scmp.eq.s32.totalorder %s14, 0
      %p181 = por %p179, %p180
      %p182 = scmp.ne.s32.totalorder %s174, %s176
      %p183 = scmp.eq.s32.totalorder %s19, 1
      %p184 = por %p182, %p183
      %p185 = scmp.ne.s32.totalorder %s176, %s177
      %p186 = scmp.eq.s32.totalorder %s19, 0
      %p187 = por %p185, %p186
      %p188 = scmp.ne.s32.totalorder %s176, %s177
      %p189 = scmp.eq.s32.totalorder %s20, 1
      %p190 = por %p188, %p189
      %p192 = scmp.ne.s32.totalorder %s177, %s191
      %p193 = scmp.eq.s32.totalorder %s20, 0
      %p194 = por %p192, %p193
      %s196 = sadd.s32 %s195, 1
      %p199 = scmp.eq.s32.totalorder %s14, 1
      %p200 = scmp.ne.s32.totalorder %s195, %s197
      %p201 = scmp.eq.s32.totalorder %s14, 0
      %p202 = por %p200, %p201
      %p203 = scmp.ne.s32.totalorder %s195, %s197
      %p204 = scmp.eq.s32.totalorder %s19, 1
      %p205 = por %p203, %p204
      %p206 = scmp.ne.s32.totalorder %s197, %s198
      %p207 = scmp.eq.s32.totalorder %s19, 0
      %p208 = por %p206, %p207
      %p209 = scmp.ne.s32.totalorder %s197, %s198
      %p210 = scmp.eq.s32.totalorder %s20, 1
      %p211 = por %p209, %p210
      %p213 = scmp.ne.s32.totalorder %s198, %s212
      %p214 = scmp.eq.s32.totalorder %s20, 0
      %p215 = por %p213, %p214
      %p216 = scmp.le.s32.totalorder 1, %s14
      %p217 = scmp.lt.s32.totalorder %s14, 3
      %p218 = pnand %p216, %p217
      %p219 = pneg %p218
      // Predicated region
      $region9: #{simple_pointnet_forward.6} parent=5 // pred_check
        _
      $region10: #{simple_pointnet_forward.6} parent=5 // pred_check_branch
        %221 = sbr.rel (%p218) target = $region12
      $region11: #{simple_pointnet_forward.6} parent=5 // pred_region
        %s222 = ssub.s32 %s14, 1
        // Predicated region
        $region13: #{simple_pointnet_forward.6} parent=11 // pred_check
          %p223 = pneg %p61
        $region14: #{simple_pointnet_forward.6} parent=11 // pred_check_branch
          %225 = sbr.rel (%p223) target = $region16
        $region15: #{simple_pointnet_forward.6} parent=11 // pred_region
          _
        $region16: #{simple_pointnet_forward.6} parent=11 // pred_fallthru
          _
        // Predicated region
        $region17: #{simple_pointnet_forward.6} parent=11 // pred_check
          %p226 = pneg %p82
        $region18: #{simple_pointnet_forward.6} parent=11 // pred_check_branch
          %228 = sbr.rel (%p226) target = $region20
        $region19: #{simple_pointnet_forward.6} parent=11 // pred_region
          _
        $region20: #{simple_pointnet_forward.6} parent=11 // pred_fallthru
          _
        // Predicated region
        $region21: #{simple_pointnet_forward.6} parent=11 // pred_check
          %p229 = pneg %p103
        $region22: #{simple_pointnet_forward.6} parent=11 // pred_check_branch
          %231 = sbr.rel (%p229) target = $region24
        $region23: #{simple_pointnet_forward.6} parent=11 // pred_region
          _
        $region24: #{simple_pointnet_forward.6} parent=11 // pred_fallthru
          _
        // Predicated region
        $region25: #{simple_pointnet_forward.6} parent=11 // pred_check
          %p232 = pneg %p124
        $region26: #{simple_pointnet_forward.6} parent=11 // pred_check_branch
          %234 = sbr.rel (%p232) target = $region28
        $region27: #{simple_pointnet_forward.6} parent=11 // pred_region
          _
        $region28: #{simple_pointnet_forward.6} parent=11 // pred_fallthru
          _
        // Predicated region
        $region29: #{simple_pointnet_forward.6} parent=11 // pred_check
          %p235 = pneg %p145
        $region30: #{simple_pointnet_forward.6} parent=11 // pred_check_branch
          %237 = sbr.rel (%p235) target = $region32
        $region31: #{simple_pointnet_forward.6} parent=11 // pred_region
          _
        $region32: #{simple_pointnet_forward.6} parent=11 // pred_fallthru
          _
        // Predicated region
        $region33: #{simple_pointnet_forward.6} parent=11 // pred_check
          %p238 = pneg %p166
        $region34: #{simple_pointnet_forward.6} parent=11 // pred_check_branch
          %240 = sbr.rel (%p238) target = $region36
        $region35: #{simple_pointnet_forward.6} parent=11 // pred_region
          _
        $region36: #{simple_pointnet_forward.6} parent=11 // pred_fallthru
          _
        // Predicated region
        $region37: #{simple_pointnet_forward.6} parent=11 // pred_check
          %p241 = pneg %p187
        $region38: #{simple_pointnet_forward.6} parent=11 // pred_check_branch
          %243 = sbr.rel (%p241) target = $region40
        $region39: #{simple_pointnet_forward.6} parent=11 // pred_region
          _
        $region40: #{simple_pointnet_forward.6} parent=11 // pred_fallthru
          _
      $region12: #{simple_pointnet_forward.6} parent=5 // pred_fallthru
        _
      %p244 = scmp.lt.s32.totalorder %s14, 2
      // Predicated region
      $region41: #{simple_pointnet_forward.6} parent=5 // pred_check
        %p245 = pneg %p244
      $region42: #{simple_pointnet_forward.6} parent=5 // pred_check_branch
        %247 = sbr.rel (%p245) target = $region44
      $region43: #{simple_pointnet_forward.6} parent=5 // pred_region
        // Predicated region
        $region45: #{simple_pointnet_forward.6} parent=43 // pred_check
          %p248 = pneg %p34
        $region46: #{simple_pointnet_forward.6} parent=43 // pred_check_branch
          %250 = sbr.rel (%p248) target = $region48
        $region47: #{simple_pointnet_forward.6} parent=43 // pred_region
          %s251 = sand.u32 %s24, 1
          %s252 = sand.u32 %s24, 1
          %s253 = smul.addr %s252, 256
          %s254 = scalar_lea.vmem [#allocation2], %s253
          %s255 = smul.u32 16, %s14
          %s256 = smul.addr %s255, 8
          %s257 = scalar_lea.vmem %s0, %s256
          // Predicated region
          $region49: #{simple_pointnet_forward.6} parent=47 // pred_check
            _
          $region50: #{simple_pointnet_forward.6} parent=47 // pred_check_branch
            %259 = sbr.rel (0) target = $region52
          $region51: #{simple_pointnet_forward.6} parent=47 // pred_region
            // Predicated region
            $region53: #{simple_pointnet_forward.6} parent=51 // pred_check
              _
            $region54: #{simple_pointnet_forward.6} parent=51 // pred_check_branch
              %261 = sbr.rel (0) target = $region56
            $region55: #{simple_pointnet_forward.6} parent=51 // pred_region
              // Predicated region
              $region68: #{simple_pointnet_forward.6} parent=55 // pred_check
                _
              $region69: #{simple_pointnet_forward.6} parent=55 // pred_check_branch
                %339 = sbr.rel (0) target = $region71
              $region70: #{simple_pointnet_forward.6} parent=55 // pred_region
                loop: start=0, step=1, limit=1
                $region72: #{simple_pointnet_forward.6} parent=70 // loop_pre_header
                  _
                $region73: #{simple_pointnet_forward.6} parent=70 // loop_header
                  %s341 = sphi 0, %s345
                  %p342 = scmp.ge.s32.totalorder %s341, 1
                  %s346 = sphi %s257, %s257
                  %s347 = sphi %s254, %s254
                $region74: #{simple_pointnet_forward.6} parent=70 // loop_header_branch
                  %344 = sbr.rel (%p342) target = $region78
                $region75: #{simple_pointnet_forward.6} parent=70 // loop_body
                  %v348 = vld [vmem:[%s346] sm:$0xff]
                  %349 = vst [vmem:[%s347] sm:$0xff] %v348
                  %v350 = vld [vmem:[%s346 + $0x8] sm:$0xff]
                  %351 = vst [vmem:[%s347 + $0x8] sm:$0xff] %v350
                  %v352 = vld [vmem:[%s346 + $0x10] sm:$0xff]
                  %353 = vst [vmem:[%s347 + $0x10] sm:$0xff] %v352
                  %v354 = vld [vmem:[%s346 + $0x18] sm:$0xff]
                  %355 = vst [vmem:[%s347 + $0x18] sm:$0xff] %v354
                  %v356 = vld [vmem:[%s346 + $0x20] sm:$0xff]
                  %357 = vst [vmem:[%s347 + $0x20] sm:$0xff] %v356
                  %v358 = vld [vmem:[%s346 + $0x28] sm:$0xff]
                  %359 = vst [vmem:[%s347 + $0x28] sm:$0xff] %v358
                  %v360 = vld [vmem:[%s346 + $0x30] sm:$0xff]
                  %361 = vst [vmem:[%s347 + $0x30] sm:$0xff] %v360
                  %v362 = vld [vmem:[%s346 + $0x38] sm:$0xff]
                  %363 = vst [vmem:[%s347 + $0x38] sm:$0xff] %v362
                  %v364 = vld [vmem:[%s346 + $0x40] sm:$0xff]
                  %365 = vst [vmem:[%s347 + $0x40] sm:$0xff] %v364
                  %v366 = vld [vmem:[%s346 + $0x48] sm:$0xff]
                  %367 = vst [vmem:[%s347 + $0x48] sm:$0xff] %v366
                  %v368 = vld [vmem:[%s346 + $0x50] sm:$0xff]
                  %369 = vst [vmem:[%s347 + $0x50] sm:$0xff] %v368
                  %v370 = vld [vmem:[%s346 + $0x58] sm:$0xff]
                  %371 = vst [vmem:[%s347 + $0x58] sm:$0xff] %v370
                  %v372 = vld [vmem:[%s346 + $0x60] sm:$0xff]
                  %373 = vst [vmem:[%s347 + $0x60] sm:$0xff] %v372
                  %v374 = vld [vmem:[%s346 + $0x68] sm:$0xff]
                  %375 = vst [vmem:[%s347 + $0x68] sm:$0xff] %v374
                  %v376 = vld [vmem:[%s346 + $0x70] sm:$0xff]
                  %377 = vst [vmem:[%s347 + $0x70] sm:$0xff] %v376
                  %v378 = vld [vmem:[%s346 + $0x78] sm:$0xff]
                  %379 = vst [vmem:[%s347 + $0x78] sm:$0xff] %v378
                  %v380 = vld [vmem:[%s346 + $0x100] sm:$0xff]
                  %381 = vst [vmem:[%s347 + $0x80] sm:$0xff] %v380
                  %v382 = vld [vmem:[%s346 + $0x108] sm:$0xff]
                  %383 = vst [vmem:[%s347 + $0x88] sm:$0xff] %v382
                  %v384 = vld [vmem:[%s346 + $0x110] sm:$0xff]
                  %385 = vst [vmem:[%s347 + $0x90] sm:$0xff] %v384
                  %v386 = vld [vmem:[%s346 + $0x118] sm:$0xff]
                  %387 = vst [vmem:[%s347 + $0x98] sm:$0xff] %v386
                  %v388 = vld [vmem:[%s346 + $0x120] sm:$0xff]
                  %389 = vst [vmem:[%s347 + $0xa0] sm:$0xff] %v388
                  %v390 = vld [vmem:[%s346 + $0x128] sm:$0xff]
                  %391 = vst [vmem:[%s347 + $0xa8] sm:$0xff] %v390
                  %v392 = vld [vmem:[%s346 + $0x130] sm:$0xff]
                  %393 = vst [vmem:[%s347 + $0xb0] sm:$0xff] %v392
                  %v394 = vld [vmem:[%s346 + $0x138] sm:$0xff]
                  %395 = vst [vmem:[%s347 + $0xb8] sm:$0xff] %v394
                  %v396 = vld [vmem:[%s346 + $0x140] sm:$0xff]
                  %397 = vst [vmem:[%s347 + $0xc0] sm:$0xff] %v396
                  %v398 = vld [vmem:[%s346 + $0x148] sm:$0xff]
                  %399 = vst [vmem:[%s347 + $0xc8] sm:$0xff] %v398
                  %v400 = vld [vmem:[%s346 + $0x150] sm:$0xff]
                  %401 = vst [vmem:[%s347 + $0xd0] sm:$0xff] %v400
                  %v402 = vld [vmem:[%s346 + $0x158] sm:$0xff]
                  %403 = vst [vmem:[%s347 + $0xd8] sm:$0xff] %v402
                  %v404 = vld [vmem:[%s346 + $0x160] sm:$0xff]
                  %405 = vst [vmem:[%s347 + $0xe0] sm:$0xff] %v404
                  %v406 = vld [vmem:[%s346 + $0x168] sm:$0xff]
                  %407 = vst [vmem:[%s347 + $0xe8] sm:$0xff] %v406
                  %v408 = vld [vmem:[%s346 + $0x170] sm:$0xff]
                  %409 = vst [vmem:[%s347 + $0xf0] sm:$0xff] %v408
                  %v410 = vld [vmem:[%s346 + $0x178] sm:$0xff]
                  %411 = vst [vmem:[%s347 + $0xf8] sm:$0xff] %v410
                $region76: #{simple_pointnet_forward.6} parent=70 // loop_footer
                  %s345 = sadd.s32 1, %s341
                $region77: #{simple_pointnet_forward.6} parent=70 // loop_footer_branch
                  %340 = sbr.rel target = $region73
                $region78: #{simple_pointnet_forward.6} parent=70 // loop_exit
                  _
              $region71: #{simple_pointnet_forward.6} parent=55 // pred_fallthru
                _
              // Predicated region
              $region79: #{simple_pointnet_forward.6} parent=55 // pred_check
                _
              $region80: #{simple_pointnet_forward.6} parent=55 // pred_check_branch
                %413 = sbr.rel target = $region82
              $region81: #{simple_pointnet_forward.6} parent=55 // pred_region
                _
              $region82: #{simple_pointnet_forward.6} parent=55 // pred_fallthru
                _
            $region56: #{simple_pointnet_forward.6} parent=51 // pred_fallthru
              _
            // Predicated region
            $region57: #{simple_pointnet_forward.6} parent=51 // pred_check
              _
            $region58: #{simple_pointnet_forward.6} parent=51 // pred_check_branch
              %263 = sbr.rel target = $region60
            $region59: #{simple_pointnet_forward.6} parent=51 // pred_region
              %s265 = ssub.s32 256, 1
              loop: start=0, step=1, limit=1
              $region61: #{simple_pointnet_forward.6} parent=59 // loop_pre_header
                _
              $region62: #{simple_pointnet_forward.6} parent=59 // loop_header
                %s267 = sphi 0, %s271
                %p268 = scmp.ge.s32.totalorder %s267, 1
                %s272 = sphi %s257, %s257
                %s273 = sphi %s254, %s254
              $region63: #{simple_pointnet_forward.6} parent=59 // loop_header_branch
                %270 = sbr.rel (%p268) target = $region67
              $region64: #{simple_pointnet_forward.6} parent=59 // loop_body
                %v274 = vld [vmem:[%s272] sm:%s265]
                %275 = vst [vmem:[%s273] sm:%s265] %v274
                %v276 = vld [vmem:[%s272 + $0x8] sm:%s265]
                %277 = vst [vmem:[%s273 + $0x8] sm:%s265] %v276
                %v278 = vld [vmem:[%s272 + $0x10] sm:%s265]
                %279 = vst [vmem:[%s273 + $0x10] sm:%s265] %v278
                %v280 = vld [vmem:[%s272 + $0x18] sm:%s265]
                %281 = vst [vmem:[%s273 + $0x18] sm:%s265] %v280
                %v282 = vld [vmem:[%s272 + $0x20] sm:%s265]
                %283 = vst [vmem:[%s273 + $0x20] sm:%s265] %v282
                %v284 = vld [vmem:[%s272 + $0x28] sm:%s265]
                %285 = vst [vmem:[%s273 + $0x28] sm:%s265] %v284
                %v286 = vld [vmem:[%s272 + $0x30] sm:%s265]
                %287 = vst [vmem:[%s273 + $0x30] sm:%s265] %v286
                %v288 = vld [vmem:[%s272 + $0x38] sm:%s265]
                %289 = vst [vmem:[%s273 + $0x38] sm:%s265] %v288
                %v290 = vld [vmem:[%s272 + $0x40] sm:%s265]
                %291 = vst [vmem:[%s273 + $0x40] sm:%s265] %v290
                %v292 = vld [vmem:[%s272 + $0x48] sm:%s265]
                %293 = vst [vmem:[%s273 + $0x48] sm:%s265] %v292
                %v294 = vld [vmem:[%s272 + $0x50] sm:%s265]
                %295 = vst [vmem:[%s273 + $0x50] sm:%s265] %v294
                %v296 = vld [vmem:[%s272 + $0x58] sm:%s265]
                %297 = vst [vmem:[%s273 + $0x58] sm:%s265] %v296
                %v298 = vld [vmem:[%s272 + $0x60] sm:%s265]
                %299 = vst [vmem:[%s273 + $0x60] sm:%s265] %v298
                %v300 = vld [vmem:[%s272 + $0x68] sm:%s265]
                %301 = vst [vmem:[%s273 + $0x68] sm:%s265] %v300
                %v302 = vld [vmem:[%s272 + $0x70] sm:%s265]
                %303 = vst [vmem:[%s273 + $0x70] sm:%s265] %v302
                %v304 = vld [vmem:[%s272 + $0x78] sm:%s265]
                %305 = vst [vmem:[%s273 + $0x78] sm:%s265] %v304
                %v306 = vld [vmem:[%s272 + $0x100] sm:%s265]
                %307 = vst [vmem:[%s273 + $0x80] sm:%s265] %v306
                %v308 = vld [vmem:[%s272 + $0x108] sm:%s265]
                %309 = vst [vmem:[%s273 + $0x88] sm:%s265] %v308
                %v310 = vld [vmem:[%s272 + $0x110] sm:%s265]
                %311 = vst [vmem:[%s273 + $0x90] sm:%s265] %v310
                %v312 = vld [vmem:[%s272 + $0x118] sm:%s265]
                %313 = vst [vmem:[%s273 + $0x98] sm:%s265] %v312
                %v314 = vld [vmem:[%s272 + $0x120] sm:%s265]
                %315 = vst [vmem:[%s273 + $0xa0] sm:%s265] %v314
                %v316 = vld [vmem:[%s272 + $0x128] sm:%s265]
                %317 = vst [vmem:[%s273 + $0xa8] sm:%s265] %v316
                %v318 = vld [vmem:[%s272 + $0x130] sm:%s265]
                %319 = vst [vmem:[%s273 + $0xb0] sm:%s265] %v318
                %v320 = vld [vmem:[%s272 + $0x138] sm:%s265]
                %321 = vst [vmem:[%s273 + $0xb8] sm:%s265] %v320
                %v322 = vld [vmem:[%s272 + $0x140] sm:%s265]
                %323 = vst [vmem:[%s273 + $0xc0] sm:%s265] %v322
                %v324 = vld [vmem:[%s272 + $0x148] sm:%s265]
                %325 = vst [vmem:[%s273 + $0xc8] sm:%s265] %v324
                %v326 = vld [vmem:[%s272 + $0x150] sm:%s265]
                %327 = vst [vmem:[%s273 + $0xd0] sm:%s265] %v326
                %v328 = vld [vmem:[%s272 + $0x158] sm:%s265]
                %329 = vst [vmem:[%s273 + $0xd8] sm:%s265] %v328
                %v330 = vld [vmem:[%s272 + $0x160] sm:%s265]
                %331 = vst [vmem:[%s273 + $0xe0] sm:%s265] %v330
                %v332 = vld [vmem:[%s272 + $0x168] sm:%s265]
                %333 = vst [vmem:[%s273 + $0xe8] sm:%s265] %v332
                %v334 = vld [vmem:[%s272 + $0x170] sm:%s265]
                %335 = vst [vmem:[%s273 + $0xf0] sm:%s265] %v334
                %v336 = vld [vmem:[%s272 + $0x178] sm:%s265]
                %337 = vst [vmem:[%s273 + $0xf8] sm:%s265] %v336
              $region65: #{simple_pointnet_forward.6} parent=59 // loop_footer
                %s271 = sadd.s32 1, %s267
              $region66: #{simple_pointnet_forward.6} parent=59 // loop_footer_branch
                %266 = sbr.rel target = $region62
              $region67: #{simple_pointnet_forward.6} parent=59 // loop_exit
                _
            $region60: #{simple_pointnet_forward.6} parent=51 // pred_fallthru
              _
          $region52: #{simple_pointnet_forward.6} parent=47 // pred_fallthru
            _
          %414 = vnop
        $region48: #{simple_pointnet_forward.6} parent=43 // pred_fallthru
          _
      $region44: #{simple_pointnet_forward.6} parent=5 // pred_fallthru
        _
      %p415 = scmp.le.s32.totalorder 1, %s14
      %p416 = scmp.lt.s32.totalorder %s14, 3
      %p417 = pnand %p415, %p416
      %p418 = pneg %p417
      // Predicated region
      $region83: #{simple_pointnet_forward.6} parent=5 // pred_check
        _
      $region84: #{simple_pointnet_forward.6} parent=5 // pred_check_branch
        %420 = sbr.rel (%p417) target = $region86
      $region85: #{simple_pointnet_forward.6} parent=5 // pred_region
        %s421 = ssub.s32 %s14, 1
        %s422 = sand.u32 %s27, 1
        %s423 = sand.u32 %s27, 1
        %s424 = smul.addr %s423, 256
        %s425 = scalar_lea.vmem [#allocation2], %s424
        // Predicated region
        $region87: #{simple_pointnet_forward.6} parent=85 // pred_check
          %p426 = pneg %p40
        $region88: #{simple_pointnet_forward.6} parent=85 // pred_check_branch
          %428 = sbr.rel (%p426) target = $region90
        $region89: #{simple_pointnet_forward.6} parent=85 // pred_region
          _
        $region90: #{simple_pointnet_forward.6} parent=85 // pred_fallthru
          _
        %s429 = sand.u32 %s27, 1
        %s430 = sand.u32 %s27, 1
        %s431 = smul.addr %s430, 256
        %s432 = scalar_lea.vmem [#allocation2], %s431
        %p433 = pneg %p40
        %p434 = pneg %p37
        %p435 = pneg %p61
        %p436 = pneg %p58
        %p437 = pneg %p82
        %p438 = pneg %p79
        %p439 = pneg %p103
        %p440 = pneg %p100
        %p441 = pneg %p124
        %p442 = pneg %p121
        %p443 = pneg %p145
        %p444 = pneg %p142
        %p445 = pneg %p166
        %p446 = pneg %p163
        %p447 = pneg %p187
        %p448 = pneg %p184
        %p449 = pneg %p208
        %p450 = pneg %p205
        %s451 = smul.u32 16, %s19
        %v453 = vld [vmem:[%s425] sm:$0xff]
        %v454 = vld [vmem:[%s425 + $0x8] sm:$0xff]
        %v455 = vld [vmem:[%s425 + $0x10] sm:$0xff]
        %v456 = vld [vmem:[%s425 + $0x18] sm:$0xff]
        %v457 = vld [vmem:[%s425 + $0x20] sm:$0xff]
        %v458 = vld [vmem:[%s425 + $0x28] sm:$0xff]
        %v459 = vld [vmem:[%s425 + $0x30] sm:$0xff]
        %v460 = vld [vmem:[%s425 + $0x38] sm:$0xff]
        %v461 = vld [vmem:[%s425 + $0x40] sm:$0xff]
        %v462 = vld [vmem:[%s425 + $0x48] sm:$0xff]
        %v463 = vld [vmem:[%s425 + $0x50] sm:$0xff]
        %v464 = vld [vmem:[%s425 + $0x58] sm:$0xff]
        %v465 = vld [vmem:[%s425 + $0x60] sm:$0xff]
        %v466 = vld [vmem:[%s425 + $0x68] sm:$0xff]
        %v467 = vld [vmem:[%s425 + $0x70] sm:$0xff]
        %v468 = vld [vmem:[%s425 + $0x78] sm:$0xff]
        %v469 = vld [vmem:[%s425 + $0x80] sm:$0xff]
        %v470 = vld [vmem:[%s425 + $0x88] sm:$0xff]
        %v471 = vld [vmem:[%s425 + $0x90] sm:$0xff]
        %v472 = vld [vmem:[%s425 + $0x98] sm:$0xff]
        %v473 = vld [vmem:[%s425 + $0xa0] sm:$0xff]
        %v474 = vld [vmem:[%s425 + $0xa8] sm:$0xff]
        %v475 = vld [vmem:[%s425 + $0xb0] sm:$0xff]
        %v476 = vld [vmem:[%s425 + $0xb8] sm:$0xff]
        %v477 = vld [vmem:[%s425 + $0xc0] sm:$0xff]
        %v478 = vld [vmem:[%s425 + $0xc8] sm:$0xff]
        %v479 = vld [vmem:[%s425 + $0xd0] sm:$0xff]
        %v480 = vld [vmem:[%s425 + $0xd8] sm:$0xff]
        %v481 = vld [vmem:[%s425 + $0xe0] sm:$0xff]
        %v482 = vld [vmem:[%s425 + $0xe8] sm:$0xff]
        %v483 = vld [vmem:[%s425 + $0xf0] sm:$0xff]
        %v484 = vld [vmem:[%s425 + $0xf8] sm:$0xff]
        %v485 = vld [vmem:[%s1] sm:$0x7]
        %v486 = vld [vmem:[%s1 + $0x4] sm:$0x7]
        %vm487 = vcmask 23552
        %v489 = vsel %vm487, %v453, 0
        %v492 = vsel %vm487, %v454, 0
        %v495 = vsel %vm487, %v455, 0
        %v498 = vsel %vm487, %v456, 0
        %v501 = vsel %vm487, %v457, 0
        %v504 = vsel %vm487, %v458, 0
        %v507 = vsel %vm487, %v459, 0
        %v510 = vsel %vm487, %v460, 0
        %v513 = vsel %vm487, %v461, 0
        %v516 = vsel %vm487, %v462, 0
        %v519 = vsel %vm487, %v463, 0
        %v522 = vsel %vm487, %v464, 0
        %v525 = vsel %vm487, %v465, 0
        %v528 = vsel %vm487, %v466, 0
        %v531 = vsel %vm487, %v467, 0
        %v534 = vsel %vm487, %v468, 0
        %v537 = vsel %vm487, %v485, 0
        %539 = vmatpush.xpose.msra.mxu0 0.0
        %540 = vmatpush.xpose.msra.mxu0 0.0
        %541 = vmatpush.xpose.msra.mxu0 0.0
        %542 = vmatpush.xpose.msra.mxu0 0.0
        %543 = vmatpush.xpose.msra.mxu0 0.0
        %544 = vmatpush.xpose.msra.mxu0 0.0
        %545 = vmatpush.xpose.msra.mxu0 0.0
        %546 = vmatpush.xpose.msra.mxu0 0.0
        %547 = vmatpush.xpose.msra.mxu0 0.0
        %548 = vmatpush.xpose.msra.mxu0 0.0
        %549 = vmatpush.xpose.msra.mxu0 0.0
        %550 = vmatpush.xpose.msra.mxu0 0.0
        %551 = vmatpush.xpose.msra.mxu0 0.0
        %552 = vmatpush.xpose.msra.mxu0 0.0
        %553 = vmatpush.xpose.msra.mxu0 0.0
        %554 = vmatpush.xpose.msra.mxu0 %v537
        %555 = vmatmul.f32.gmra.mxu0 %v489
        %v556 = vpop.f32.mrf.mxu0
        %v557 = vadd.f32 0.0, %v556
        %558 = vmatmul.f32.gmra.mxu0 %v492
        %v559 = vpop.f32.mrf.mxu0
        %v560 = vadd.f32 0.0, %v559
        %561 = vmatmul.f32.gmra.mxu0 %v495
        %v562 = vpop.f32.mrf.mxu0
        %v563 = vadd.f32 0.0, %v562
        %564 = vmatmul.f32.gmra.mxu0 %v498
        %v565 = vpop.f32.mrf.mxu0
        %v566 = vadd.f32 0.0, %v565
        %567 = vmatmul.f32.gmra.mxu0 %v501
        %v568 = vpop.f32.mrf.mxu0
        %v569 = vadd.f32 0.0, %v568
        %570 = vmatmul.f32.gmra.mxu0 %v504
        %v571 = vpop.f32.mrf.mxu0
        %v572 = vadd.f32 0.0, %v571
        %573 = vmatmul.f32.gmra.mxu0 %v507
        %v574 = vpop.f32.mrf.mxu0
        %v575 = vadd.f32 0.0, %v574
        %576 = vmatmul.f32.gmra.mxu0 %v510
        %v577 = vpop.f32.mrf.mxu0
        %v578 = vadd.f32 0.0, %v577
        %579 = vmatmul.f32.gmra.mxu0 %v513
        %v580 = vpop.f32.mrf.mxu0
        %v581 = vadd.f32 0.0, %v580
        %582 = vmatmul.f32.gmra.mxu0 %v516
        %v583 = vpop.f32.mrf.mxu0
        %v584 = vadd.f32 0.0, %v583
        %585 = vmatmul.f32.gmra.mxu0 %v519
        %v586 = vpop.f32.mrf.mxu0
        %v587 = vadd.f32 0.0, %v586
        %588 = vmatmul.f32.gmra.mxu0 %v522
        %v589 = vpop.f32.mrf.mxu0
        %v590 = vadd.f32 0.0, %v589
        %591 = vmatmul.f32.gmra.mxu0 %v525
        %v592 = vpop.f32.mrf.mxu0
        %v593 = vadd.f32 0.0, %v592
        %594 = vmatmul.f32.gmra.mxu0 %v528
        %v595 = vpop.f32.mrf.mxu0
        %v596 = vadd.f32 0.0, %v595
        %597 = vmatmul.f32.gmra.mxu0 %v531
        %v598 = vpop.f32.mrf.mxu0
        %v599 = vadd.f32 0.0, %v598
        %600 = vmatmul.f32.gmra.mxu0 %v534
        %v601 = vpop.f32.mrf.mxu0
        %v602 = vadd.f32 0.0, %v601
        %603 = vdwg.mxu0
        %v605 = vsel %vm487, %v469, 0
        %v608 = vsel %vm487, %v470, 0
        %v611 = vsel %vm487, %v471, 0
        %v614 = vsel %vm487, %v472, 0
        %v617 = vsel %vm487, %v473, 0
        %v620 = vsel %vm487, %v474, 0
        %v623 = vsel %vm487, %v475, 0
        %v626 = vsel %vm487, %v476, 0
        %v629 = vsel %vm487, %v477, 0
        %v632 = vsel %vm487, %v478, 0
        %v635 = vsel %vm487, %v479, 0
        %v638 = vsel %vm487, %v480, 0
        %v641 = vsel %vm487, %v481, 0
        %v644 = vsel %vm487, %v482, 0
        %v647 = vsel %vm487, %v483, 0
        %v650 = vsel %vm487, %v484, 0
        %v653 = vsel %vm487, %v486, 0
        %655 = vmatpush.xpose.msra.mxu0 0.0
        %656 = vmatpush.xpose.msra.mxu0 0.0
        %657 = vmatpush.xpose.msra.mxu0 0.0
        %658 = vmatpush.xpose.msra.mxu0 0.0
        %659 = vmatpush.xpose.msra.mxu0 0.0
        %660 = vmatpush.xpose.msra.mxu0 0.0
        %661 = vmatpush.xpose.msra.mxu0 0.0
        %662 = vmatpush.xpose.msra.mxu0 0.0
        %663 = vmatpush.xpose.msra.mxu0 0.0
        %664 = vmatpush.xpose.msra.mxu0 0.0
        %665 = vmatpush.xpose.msra.mxu0 0.0
        %666 = vmatpush.xpose.msra.mxu0 0.0
        %667 = vmatpush.xpose.msra.mxu0 0.0
        %668 = vmatpush.xpose.msra.mxu0 0.0
        %669 = vmatpush.xpose.msra.mxu0 0.0
        %670 = vmatpush.xpose.msra.mxu0 %v653
        %671 = vmatmul.f32.gmra.mxu0 %v605
        %v672 = vpop.f32.mrf.mxu0
        %v673 = vadd.f32 0.0, %v672
        %674 = vmatmul.f32.gmra.mxu0 %v608
        %v675 = vpop.f32.mrf.mxu0
        %v676 = vadd.f32 0.0, %v675
        %677 = vmatmul.f32.gmra.mxu0 %v611
        %v678 = vpop.f32.mrf.mxu0
        %v679 = vadd.f32 0.0, %v678
        %680 = vmatmul.f32.gmra.mxu0 %v614
        %v681 = vpop.f32.mrf.mxu0
        %v682 = vadd.f32 0.0, %v681
        %683 = vmatmul.f32.gmra.mxu0 %v617
        %v684 = vpop.f32.mrf.mxu0
        %v685 = vadd.f32 0.0, %v684
        %686 = vmatmul.f32.gmra.mxu0 %v620
        %v687 = vpop.f32.mrf.mxu0
        %v688 = vadd.f32 0.0, %v687
        %689 = vmatmul.f32.gmra.mxu0 %v623
        %v690 = vpop.f32.mrf.mxu0
        %v691 = vadd.f32 0.0, %v690
        %692 = vmatmul.f32.gmra.mxu0 %v626
        %v693 = vpop.f32.mrf.mxu0
        %v694 = vadd.f32 0.0, %v693
        %695 = vmatmul.f32.gmra.mxu0 %v629
        %v696 = vpop.f32.mrf.mxu0
        %v697 = vadd.f32 0.0, %v696
        %698 = vmatmul.f32.gmra.mxu0 %v632
        %v699 = vpop.f32.mrf.mxu0
        %v700 = vadd.f32 0.0, %v699
        %701 = vmatmul.f32.gmra.mxu0 %v635
        %v702 = vpop.f32.mrf.mxu0
        %v703 = vadd.f32 0.0, %v702
        %704 = vmatmul.f32.gmra.mxu0 %v638
        %v705 = vpop.f32.mrf.mxu0
        %v706 = vadd.f32 0.0, %v705
        %707 = vmatmul.f32.gmra.mxu0 %v641
        %v708 = vpop.f32.mrf.mxu0
        %v709 = vadd.f32 0.0, %v708
        %710 = vmatmul.f32.gmra.mxu0 %v644
        %v711 = vpop.f32.mrf.mxu0
        %v712 = vadd.f32 0.0, %v711
        %713 = vmatmul.f32.gmra.mxu0 %v647
        %v714 = vpop.f32.mrf.mxu0
        %v715 = vadd.f32 0.0, %v714
        %716 = vmatmul.f32.gmra.mxu0 %v650
        %v717 = vpop.f32.mrf.mxu0
        %v718 = vadd.f32 0.0, %v717
        %719 = vdwg.mxu0
        %v720 = vld [vmem:[%s2] sm:$0x3]
        %v721 = vld [vmem:[%s3] sm:$0x1]
        %v722 = vpack.c.bf16 %v560, %v557
        %v723 = vpack.c.bf16 %v566, %v563
        %v724 = vpack.c.bf16 %v572, %v569
        %v725 = vpack.c.bf16 %v578, %v575
        %v726 = vpack.c.bf16 %v584, %v581
        %v727 = vpack.c.bf16 %v590, %v587
        %v728 = vpack.c.bf16 %v596, %v593
        %v729 = vpack.c.bf16 %v602, %v599
        %v730 = vpack.c.bf16 %v676, %v673
        %v731 = vpack.c.bf16 %v682, %v679
        %v732 = vpack.c.bf16 %v688, %v685
        %v733 = vpack.c.bf16 %v694, %v691
        %v734 = vpack.c.bf16 %v700, %v697
        %v735 = vpack.c.bf16 %v706, %v703
        %v736 = vpack.c.bf16 %v712, %v709
        %v737 = vpack.c.bf16 %v718, %v715
        %v739 = vperm.slane %v721, 0
        %v742 = vsel %vm487, %v722, 0
        %v745 = vsel %vm487, %v723, 0
        %v748 = vsel %vm487, %v724, 0
        %v751 = vsel %vm487, %v725, 0
        %v754 = vsel %vm487, %v726, 0
        %v757 = vsel %vm487, %v727, 0
        %v760 = vsel %vm487, %v728, 0
        %v763 = vsel %vm487, %v729, 0
        %v766 = vsel %vm487, %v730, 0
        %v769 = vsel %vm487, %v731, 0
        %v772 = vsel %vm487, %v732, 0
        %v775 = vsel %vm487, %v733, 0
        %v778 = vsel %vm487, %v734, 0
        %v781 = vsel %vm487, %v735, 0
        %v784 = vsel %vm487, %v736, 0
        %v787 = vsel %vm487, %v737, 0
        %vm789 = vcmask 1040384
        %vm790 = vcmask 1041408
        %v791 = vsel %vm789, 4294967295, 65535
        %v792 = vsel %vm790, %v791, 0
        %v794 = vand.u32 %v720, %v792
        %796 = vmatpush.bf16.msra.mxu0 0
        %797 = vmatpush.bf16.msra.mxu0 0
        %798 = vmatpush.bf16.msra.mxu0 0
        %799 = vmatpush.bf16.msra.mxu0 0
        %800 = vmatpush.bf16.msra.mxu0 0
        %801 = vmatpush.bf16.msra.mxu0 0
        %802 = vmatpush.bf16.msra.mxu0 0
        %803 = vmatpush.bf16.msra.mxu0 %v794
        %804 = vmatmul.bf16.gmra.mxu0 %v742
        %v805 = vpop.f32.mrf.mxu0
        %v806 = vadd.f32 %v739, %v805
        %v807 = vpop.f32.mrf.mxu0
        %v808 = vadd.f32 %v739, %v807
        %809 = vmatmul.bf16.gmra.mxu0 %v745
        %v810 = vpop.f32.mrf.mxu0
        %v811 = vadd.f32 %v739, %v810
        %v812 = vpop.f32.mrf.mxu0
        %v813 = vadd.f32 %v739, %v812
        %814 = vmatmul.bf16.gmra.mxu0 %v748
        %v815 = vpop.f32.mrf.mxu0
        %v816 = vadd.f32 %v739, %v815
        %v817 = vpop.f32.mrf.mxu0
        %v818 = vadd.f32 %v739, %v817
        %819 = vmatmul.bf16.gmra.mxu0 %v751
        %v820 = vpop.f32.mrf.mxu0
        %v821 = vadd.f32 %v739, %v820
        %v822 = vpop.f32.mrf.mxu0
        %v823 = vadd.f32 %v739, %v822
        %824 = vmatmul.bf16.gmra.mxu0 %v754
        %v825 = vpop.f32.mrf.mxu0
        %v826 = vadd.f32 %v739, %v825
        %v827 = vpop.f32.mrf.mxu0
        %v828 = vadd.f32 %v739, %v827
        %829 = vmatmul.bf16.gmra.mxu0 %v757
        %v830 = vpop.f32.mrf.mxu0
        %v831 = vadd.f32 %v739, %v830
        %v832 = vpop.f32.mrf.mxu0
        %v833 = vadd.f32 %v739, %v832
        %834 = vmatmul.bf16.gmra.mxu0 %v760
        %v835 = vpop.f32.mrf.mxu0
        %v836 = vadd.f32 %v739, %v835
        %v837 = vpop.f32.mrf.mxu0
        %v838 = vadd.f32 %v739, %v837
        %839 = vmatmul.bf16.gmra.mxu0 %v763
        %v840 = vpop.f32.mrf.mxu0
        %v841 = vadd.f32 %v739, %v840
        %v842 = vpop.f32.mrf.mxu0
        %v843 = vadd.f32 %v739, %v842
        %844 = vmatmul.bf16.gmra.mxu0 %v766
        %v845 = vpop.f32.mrf.mxu0
        %v846 = vadd.f32 %v739, %v845
        %v847 = vpop.f32.mrf.mxu0
        %v848 = vadd.f32 %v739, %v847
        %849 = vmatmul.bf16.gmra.mxu0 %v769
        %v850 = vpop.f32.mrf.mxu0
        %v851 = vadd.f32 %v739, %v850
        %v852 = vpop.f32.mrf.mxu0
        %v853 = vadd.f32 %v739, %v852
        %854 = vmatmul.bf16.gmra.mxu0 %v772
        %v855 = vpop.f32.mrf.mxu0
        %v856 = vadd.f32 %v739, %v855
        %v857 = vpop.f32.mrf.mxu0
        %v858 = vadd.f32 %v739, %v857
        %859 = vmatmul.bf16.gmra.mxu0 %v775
        %v860 = vpop.f32.mrf.mxu0
        %v861 = vadd.f32 %v739, %v860
        %v862 = vpop.f32.mrf.mxu0
        %v863 = vadd.f32 %v739, %v862
        %864 = vmatmul.bf16.gmra.mxu0 %v778
        %v865 = vpop.f32.mrf.mxu0
        %v866 = vadd.f32 %v739, %v865
        %v867 = vpop.f32.mrf.mxu0
        %v868 = vadd.f32 %v739, %v867
        %869 = vmatmul.bf16.gmra.mxu0 %v781
        %v870 = vpop.f32.mrf.mxu0
        %v871 = vadd.f32 %v739, %v870
        %v872 = vpop.f32.mrf.mxu0
        %v873 = vadd.f32 %v739, %v872
        %874 = vmatmul.bf16.gmra.mxu0 %v784
        %v875 = vpop.f32.mrf.mxu0
        %v876 = vadd.f32 %v739, %v875
        %v877 = vpop.f32.mrf.mxu0
        %v878 = vadd.f32 %v739, %v877
        %879 = vmatmul.bf16.gmra.mxu0 %v787
        %v880 = vpop.f32.mrf.mxu0
        %v881 = vadd.f32 %v739, %v880
        %v882 = vpop.f32.mrf.mxu0
        %v883 = vadd.f32 %v739, %v882
        %884 = vdwg.mxu0
        %v885 = vmax.f32 %v806, 0.0
        %v886 = vmax.f32 %v808, 0.0
        %v887 = vmax.f32 %v811, 0.0
        %v888 = vmax.f32 %v813, 0.0
        %v889 = vmax.f32 %v816, 0.0
        %v890 = vmax.f32 %v818, 0.0
        %v891 = vmax.f32 %v821, 0.0
        %v892 = vmax.f32 %v823, 0.0
        %v893 = vmax.f32 %v826, 0.0
        %v894 = vmax.f32 %v828, 0.0
        %v895 = vmax.f32 %v831, 0.0
        %v896 = vmax.f32 %v833, 0.0
        %v897 = vmax.f32 %v836, 0.0
        %v898 = vmax.f32 %v838, 0.0
        %v899 = vmax.f32 %v841, 0.0
        %v900 = vmax.f32 %v843, 0.0
        %v901 = vmax.f32 %v846, 0.0
        %v902 = vmax.f32 %v848, 0.0
        %v903 = vmax.f32 %v851, 0.0
        %v904 = vmax.f32 %v853, 0.0
        %v905 = vmax.f32 %v856, 0.0
        %v906 = vmax.f32 %v858, 0.0
        %v907 = vmax.f32 %v861, 0.0
        %v908 = vmax.f32 %v863, 0.0
        %v909 = vmax.f32 %v866, 0.0
        %v910 = vmax.f32 %v868, 0.0
        %v911 = vmax.f32 %v871, 0.0
        %v912 = vmax.f32 %v873, 0.0
        %v913 = vmax.f32 %v876, 0.0
        %v914 = vmax.f32 %v878, 0.0
        %v915 = vmax.f32 %v881, 0.0
        %v916 = vmax.f32 %v883, 0.0
        %v917 = vld [vmem:[%s4] sm:$0xf]
        %v918 = vld [vmem:[%s4 + $0x4] sm:$0xf]
        %v919 = vld [vmem:[%s5] sm:$0x1]
        %v920 = vpack.c.bf16 %v886, %v885
        %v921 = vpack.c.bf16 %v888, %v887
        %v922 = vpack.c.bf16 %v890, %v889
        %v923 = vpack.c.bf16 %v892, %v891
        %v924 = vpack.c.bf16 %v894, %v893
        %v925 = vpack.c.bf16 %v896, %v895
        %v926 = vpack.c.bf16 %v898, %v897
        %v927 = vpack.c.bf16 %v900, %v899
        %v928 = vpack.c.bf16 %v902, %v901
        %v929 = vpack.c.bf16 %v904, %v903
        %v930 = vpack.c.bf16 %v906, %v905
        %v931 = vpack.c.bf16 %v908, %v907
        %v932 = vpack.c.bf16 %v910, %v909
        %v933 = vpack.c.bf16 %v912, %v911
        %v934 = vpack.c.bf16 %v914, %v913
        %v935 = vpack.c.bf16 %v916, %v915
        %v937 = vperm.slane %v919, 0
        %v941 = vunpack.c.l.b16 %v917
        %v942 = vunpack.c.l.b16 %v918
        %v943 = vpack.c.b16 %v942, %v941
        %vm945 = vcmask 130048
        %v947 = vsel %vm945, %v920, 0
        %v950 = vsel %vm945, %v921, 0
        %v953 = vsel %vm945, %v922, 0
        %v956 = vsel %vm945, %v923, 0
        %v959 = vsel %vm945, %v924, 0
        %v962 = vsel %vm945, %v925, 0
        %v965 = vsel %vm945, %v926, 0
        %v968 = vsel %vm945, %v927, 0
        %v971 = vsel %vm945, %v928, 0
        %v974 = vsel %vm945, %v929, 0
        %v977 = vsel %vm945, %v930, 0
        %v980 = vsel %vm945, %v931, 0
        %v983 = vsel %vm945, %v932, 0
        %v986 = vsel %vm945, %v933, 0
        %v989 = vsel %vm945, %v934, 0
        %v992 = vsel %vm945, %v935, 0
        %994 = vmatpush.bf16.msra.mxu0 0
        %995 = vmatpush.bf16.msra.mxu0 0
        %996 = vmatpush.bf16.msra.mxu0 0
        %997 = vmatpush.bf16.msra.mxu0 0
        %998 = vmatpush.bf16.msra.mxu0 0
        %999 = vmatpush.bf16.msra.mxu0 0
        %1000 = vmatpush.bf16.msra.mxu0 0
        %1001 = vmatpush.bf16.msra.mxu0 %v943
        %1002 = vmatmul.bf16.gmra.mxu0 %v947
        %v1003 = vpop.f32.mrf.mxu0
        %v1004 = vadd.f32 %v937, %v1003
        %v1005 = vpop.f32.mrf.mxu0
        %v1006 = vadd.f32 %v937, %v1005
        %1007 = vmatmul.bf16.gmra.mxu0 %v950
        %v1008 = vpop.f32.mrf.mxu0
        %v1009 = vadd.f32 %v937, %v1008
        %v1010 = vpop.f32.mrf.mxu0
        %v1011 = vadd.f32 %v937, %v1010
        %1012 = vmatmul.bf16.gmra.mxu0 %v953
        %v1013 = vpop.f32.mrf.mxu0
        %v1014 = vadd.f32 %v937, %v1013
        %v1015 = vpop.f32.mrf.mxu0
        %v1016 = vadd.f32 %v937, %v1015
        %1017 = vmatmul.bf16.gmra.mxu0 %v956
        %v1018 = vpop.f32.mrf.mxu0
        %v1019 = vadd.f32 %v937, %v1018
        %v1020 = vpop.f32.mrf.mxu0
        %v1021 = vadd.f32 %v937, %v1020
        %1022 = vmatmul.bf16.gmra.mxu0 %v959
        %v1023 = vpop.f32.mrf.mxu0
        %v1024 = vadd.f32 %v937, %v1023
        %v1025 = vpop.f32.mrf.mxu0
        %v1026 = vadd.f32 %v937, %v1025
        %1027 = vmatmul.bf16.gmra.mxu0 %v962
        %v1028 = vpop.f32.mrf.mxu0
        %v1029 = vadd.f32 %v937, %v1028
        %v1030 = vpop.f32.mrf.mxu0
        %v1031 = vadd.f32 %v937, %v1030
        %1032 = vmatmul.bf16.gmra.mxu0 %v965
        %v1033 = vpop.f32.mrf.mxu0
        %v1034 = vadd.f32 %v937, %v1033
        %v1035 = vpop.f32.mrf.mxu0
        %v1036 = vadd.f32 %v937, %v1035
        %1037 = vmatmul.bf16.gmra.mxu0 %v968
        %v1038 = vpop.f32.mrf.mxu0
        %v1039 = vadd.f32 %v937, %v1038
        %v1040 = vpop.f32.mrf.mxu0
        %v1041 = vadd.f32 %v937, %v1040
        %1042 = vmatmul.bf16.gmra.mxu0 %v971
        %v1043 = vpop.f32.mrf.mxu0
        %v1044 = vadd.f32 %v937, %v1043
        %v1045 = vpop.f32.mrf.mxu0
        %v1046 = vadd.f32 %v937, %v1045
        %1047 = vmatmul.bf16.gmra.mxu0 %v974
        %v1048 = vpop.f32.mrf.mxu0
        %v1049 = vadd.f32 %v937, %v1048
        %v1050 = vpop.f32.mrf.mxu0
        %v1051 = vadd.f32 %v937, %v1050
        %1052 = vmatmul.bf16.gmra.mxu0 %v977
        %v1053 = vpop.f32.mrf.mxu0
        %v1054 = vadd.f32 %v937, %v1053
        %v1055 = vpop.f32.mrf.mxu0
        %v1056 = vadd.f32 %v937, %v1055
        %1057 = vmatmul.bf16.gmra.mxu0 %v980
        %v1058 = vpop.f32.mrf.mxu0
        %v1059 = vadd.f32 %v937, %v1058
        %v1060 = vpop.f32.mrf.mxu0
        %v1061 = vadd.f32 %v937, %v1060
        %1062 = vmatmul.bf16.gmra.mxu0 %v983
        %v1063 = vpop.f32.mrf.mxu0
        %v1064 = vadd.f32 %v937, %v1063
        %v1065 = vpop.f32.mrf.mxu0
        %v1066 = vadd.f32 %v937, %v1065
        %1067 = vmatmul.bf16.gmra.mxu0 %v986
        %v1068 = vpop.f32.mrf.mxu0
        %v1069 = vadd.f32 %v937, %v1068
        %v1070 = vpop.f32.mrf.mxu0
        %v1071 = vadd.f32 %v937, %v1070
        %1072 = vmatmul.bf16.gmra.mxu0 %v989
        %v1073 = vpop.f32.mrf.mxu0
        %v1074 = vadd.f32 %v937, %v1073
        %v1075 = vpop.f32.mrf.mxu0
        %v1076 = vadd.f32 %v937, %v1075
        %1077 = vmatmul.bf16.gmra.mxu0 %v992
        %v1078 = vpop.f32.mrf.mxu0
        %v1079 = vadd.f32 %v937, %v1078
        %v1080 = vpop.f32.mrf.mxu0
        %v1081 = vadd.f32 %v937, %v1080
        %1082 = vdwg.mxu0
        %v1083 = vmax.f32 %v1004, 0.0
        %v1084 = vmax.f32 %v1006, 0.0
        %v1085 = vmax.f32 %v1009, 0.0
        %v1086 = vmax.f32 %v1011, 0.0
        %v1087 = vmax.f32 %v1014, 0.0
        %v1088 = vmax.f32 %v1016, 0.0
        %v1089 = vmax.f32 %v1019, 0.0
        %v1090 = vmax.f32 %v1021, 0.0
        %v1091 = vmax.f32 %v1024, 0.0
        %v1092 = vmax.f32 %v1026, 0.0
        %v1093 = vmax.f32 %v1029, 0.0
        %v1094 = vmax.f32 %v1031, 0.0
        %v1095 = vmax.f32 %v1034, 0.0
        %v1096 = vmax.f32 %v1036, 0.0
        %v1097 = vmax.f32 %v1039, 0.0
        %v1098 = vmax.f32 %v1041, 0.0
        %v1099 = vmax.f32 %v1044, 0.0
        %v1100 = vmax.f32 %v1046, 0.0
        %v1101 = vmax.f32 %v1049, 0.0
        %v1102 = vmax.f32 %v1051, 0.0
        %v1103 = vmax.f32 %v1054, 0.0
        %v1104 = vmax.f32 %v1056, 0.0
        %v1105 = vmax.f32 %v1059, 0.0
        %v1106 = vmax.f32 %v1061, 0.0
        %v1107 = vmax.f32 %v1064, 0.0
        %v1108 = vmax.f32 %v1066, 0.0
        %v1109 = vmax.f32 %v1069, 0.0
        %v1110 = vmax.f32 %v1071, 0.0
        %v1111 = vmax.f32 %v1074, 0.0
        %v1112 = vmax.f32 %v1076, 0.0
        %v1113 = vmax.f32 %v1079, 0.0
        %v1114 = vmax.f32 %v1081, 0.0
        %v1115 = vld [vmem:[%s6] sm:$0xf]
        %v1116 = vld [vmem:[%s6 + $0x4] sm:$0xf]
        %v1117 = vld [vmem:[%s6 + $0x8] sm:$0xf]
        %v1118 = vld [vmem:[%s6 + $0xc] sm:$0xf]
        %v1119 = vld [vmem:[%s7] sm:$0x1]
        %v1120 = vpack.c.bf16 %v1084, %v1083
        %v1121 = vpack.c.bf16 %v1086, %v1085
        %v1122 = vpack.c.bf16 %v1088, %v1087
        %v1123 = vpack.c.bf16 %v1090, %v1089
        %v1124 = vpack.c.bf16 %v1092, %v1091
        %v1125 = vpack.c.bf16 %v1094, %v1093
        %v1126 = vpack.c.bf16 %v1096, %v1095
        %v1127 = vpack.c.bf16 %v1098, %v1097
        %v1128 = vpack.c.bf16 %v1100, %v1099
        %v1129 = vpack.c.bf16 %v1102, %v1101
        %v1130 = vpack.c.bf16 %v1104, %v1103
        %v1131 = vpack.c.bf16 %v1106, %v1105
        %v1132 = vpack.c.bf16 %v1108, %v1107
        %v1133 = vpack.c.bf16 %v1110, %v1109
        %v1134 = vpack.c.bf16 %v1112, %v1111
        %v1135 = vpack.c.bf16 %v1114, %v1113
        %v1137 = vperm.slane %v1119, 0
        %v1143 = vunpack.c.l.b16 %v1115
        %v1144 = vunpack.c.l.b16 %v1116
        %v1145 = vunpack.c.l.b16 %v1117
        %v1146 = vunpack.c.l.b16 %v1118
        %v1147 = vpack.c.b16 %v1144, %v1143
        %v1148 = vpack.c.b16 %v1146, %v1145
        %vm1151 = vcmask 261120
        %v1153 = vsel %vm1151, %v1120, 0
        %v1156 = vsel %vm1151, %v1121, 0
        %v1159 = vsel %vm1151, %v1122, 0
        %v1162 = vsel %vm1151, %v1123, 0
        %v1165 = vsel %vm1151, %v1124, 0
        %v1168 = vsel %vm1151, %v1125, 0
        %v1171 = vsel %vm1151, %v1126, 0
        %v1174 = vsel %vm1151, %v1127, 0
        %v1177 = vsel %vm1151, %v1128, 0
        %v1180 = vsel %vm1151, %v1129, 0
        %v1183 = vsel %vm1151, %v1130, 0
        %v1186 = vsel %vm1151, %v1131, 0
        %v1189 = vsel %vm1151, %v1132, 0
        %v1192 = vsel %vm1151, %v1133, 0
        %v1195 = vsel %vm1151, %v1134, 0
        %v1198 = vsel %vm1151, %v1135, 0
        %1200 = vmatpush.bf16.msra.mxu0 0
        %1201 = vmatpush.bf16.msra.mxu0 0
        %1202 = vmatpush.bf16.msra.mxu0 0
        %1203 = vmatpush.bf16.msra.mxu0 0
        %1204 = vmatpush.bf16.msra.mxu0 0
        %1205 = vmatpush.bf16.msra.mxu0 0
        %1206 = vmatpush.bf16.msra.mxu0 %v1148
        %1207 = vmatpush.bf16.msra.mxu0 %v1147
        %1208 = vmatmul.bf16.gmra.mxu0 %v1153
        %v1209 = vpop.f32.mrf.mxu0
        %v1210 = vadd.f32 %v1137, %v1209
        %v1211 = vpop.f32.mrf.mxu0
        %v1212 = vadd.f32 %v1137, %v1211
        %1213 = vmatmul.bf16.gmra.mxu0 %v1156
        %v1214 = vpop.f32.mrf.mxu0
        %v1215 = vadd.f32 %v1137, %v1214
        %v1216 = vpop.f32.mrf.mxu0
        %v1217 = vadd.f32 %v1137, %v1216
        %1218 = vmatmul.bf16.gmra.mxu0 %v1159
        %v1219 = vpop.f32.mrf.mxu0
        %v1220 = vadd.f32 %v1137, %v1219
        %v1221 = vpop.f32.mrf.mxu0
        %v1222 = vadd.f32 %v1137, %v1221
        %1223 = vmatmul.bf16.gmra.mxu0 %v1162
        %v1224 = vpop.f32.mrf.mxu0
        %v1225 = vadd.f32 %v1137, %v1224
        %v1226 = vpop.f32.mrf.mxu0
        %v1227 = vadd.f32 %v1137, %v1226
        %1228 = vmatmul.bf16.gmra.mxu0 %v1165
        %v1229 = vpop.f32.mrf.mxu0
        %v1230 = vadd.f32 %v1137, %v1229
        %v1231 = vpop.f32.mrf.mxu0
        %v1232 = vadd.f32 %v1137, %v1231
        %1233 = vmatmul.bf16.gmra.mxu0 %v1168
        %v1234 = vpop.f32.mrf.mxu0
        %v1235 = vadd.f32 %v1137, %v1234
        %v1236 = vpop.f32.mrf.mxu0
        %v1237 = vadd.f32 %v1137, %v1236
        %1238 = vmatmul.bf16.gmra.mxu0 %v1171
        %v1239 = vpop.f32.mrf.mxu0
        %v1240 = vadd.f32 %v1137, %v1239
        %v1241 = vpop.f32.mrf.mxu0
        %v1242 = vadd.f32 %v1137, %v1241
        %1243 = vmatmul.bf16.gmra.mxu0 %v1174
        %v1244 = vpop.f32.mrf.mxu0
        %v1245 = vadd.f32 %v1137, %v1244
        %v1246 = vpop.f32.mrf.mxu0
        %v1247 = vadd.f32 %v1137, %v1246
        %1248 = vmatmul.bf16.gmra.mxu0 %v1177
        %v1249 = vpop.f32.mrf.mxu0
        %v1250 = vadd.f32 %v1137, %v1249
        %v1251 = vpop.f32.mrf.mxu0
        %v1252 = vadd.f32 %v1137, %v1251
        %1253 = vmatmul.bf16.gmra.mxu0 %v1180
        %v1254 = vpop.f32.mrf.mxu0
        %v1255 = vadd.f32 %v1137, %v1254
        %v1256 = vpop.f32.mrf.mxu0
        %v1257 = vadd.f32 %v1137, %v1256
        %1258 = vmatmul.bf16.gmra.mxu0 %v1183
        %v1259 = vpop.f32.mrf.mxu0
        %v1260 = vadd.f32 %v1137, %v1259
        %v1261 = vpop.f32.mrf.mxu0
        %v1262 = vadd.f32 %v1137, %v1261
        %1263 = vmatmul.bf16.gmra.mxu0 %v1186
        %v1264 = vpop.f32.mrf.mxu0
        %v1265 = vadd.f32 %v1137, %v1264
        %v1266 = vpop.f32.mrf.mxu0
        %v1267 = vadd.f32 %v1137, %v1266
        %1268 = vmatmul.bf16.gmra.mxu0 %v1189
        %v1269 = vpop.f32.mrf.mxu0
        %v1270 = vadd.f32 %v1137, %v1269
        %v1271 = vpop.f32.mrf.mxu0
        %v1272 = vadd.f32 %v1137, %v1271
        %1273 = vmatmul.bf16.gmra.mxu0 %v1192
        %v1274 = vpop.f32.mrf.mxu0
        %v1275 = vadd.f32 %v1137, %v1274
        %v1276 = vpop.f32.mrf.mxu0
        %v1277 = vadd.f32 %v1137, %v1276
        %1278 = vmatmul.bf16.gmra.mxu0 %v1195
        %v1279 = vpop.f32.mrf.mxu0
        %v1280 = vadd.f32 %v1137, %v1279
        %v1281 = vpop.f32.mrf.mxu0
        %v1282 = vadd.f32 %v1137, %v1281
        %1283 = vmatmul.bf16.gmra.mxu0 %v1198
        %v1284 = vpop.f32.mrf.mxu0
        %v1285 = vadd.f32 %v1137, %v1284
        %v1286 = vpop.f32.mrf.mxu0
        %v1287 = vadd.f32 %v1137, %v1286
        %1288 = vdwg.mxu0
        %v1289 = vmax.f32 %v1210, 0.0
        %v1290 = vmax.f32 %v1212, 0.0
        %v1291 = vmax.f32 %v1215, 0.0
        %v1292 = vmax.f32 %v1217, 0.0
        %v1293 = vmax.f32 %v1220, 0.0
        %v1294 = vmax.f32 %v1222, 0.0
        %v1295 = vmax.f32 %v1225, 0.0
        %v1296 = vmax.f32 %v1227, 0.0
        %v1297 = vmax.f32 %v1230, 0.0
        %v1298 = vmax.f32 %v1232, 0.0
        %v1299 = vmax.f32 %v1235, 0.0
        %v1300 = vmax.f32 %v1237, 0.0
        %v1301 = vmax.f32 %v1240, 0.0
        %v1302 = vmax.f32 %v1242, 0.0
        %v1303 = vmax.f32 %v1245, 0.0
        %v1304 = vmax.f32 %v1247, 0.0
        %v1305 = vmax.f32 %v1250, 0.0
        %v1306 = vmax.f32 %v1252, 0.0
        %v1307 = vmax.f32 %v1255, 0.0
        %v1308 = vmax.f32 %v1257, 0.0
        %v1309 = vmax.f32 %v1260, 0.0
        %v1310 = vmax.f32 %v1262, 0.0
        %v1311 = vmax.f32 %v1265, 0.0
        %v1312 = vmax.f32 %v1267, 0.0
        %v1313 = vmax.f32 %v1270, 0.0
        %v1314 = vmax.f32 %v1272, 0.0
        %v1315 = vmax.f32 %v1275, 0.0
        %v1316 = vmax.f32 %v1277, 0.0
        %v1317 = vmax.f32 %v1280, 0.0
        %v1318 = vmax.f32 %v1282, 0.0
        %v1319 = vmax.f32 %v1285, 0.0
        %v1320 = vmax.f32 %v1287, 0.0
        %vm1321 = vcmask 523264
        %v1322 = vsel %vm1321, %v1289, -inf
        %v1323 = vsel %vm1321, %v1290, -inf
        %v1324 = vsel %vm1321, %v1291, -inf
        %v1325 = vmax.f32 %v1322, %v1324
        %v1326 = vsel %vm1321, %v1292, -inf
        %v1327 = vmax.f32 %v1323, %v1326
        %v1328 = vsel %vm1321, %v1293, -inf
        %v1329 = vmax.f32 %v1325, %v1328
        %v1330 = vsel %vm1321, %v1294, -inf
        %v1331 = vmax.f32 %v1327, %v1330
        %v1332 = vsel %vm1321, %v1295, -inf
        %v1333 = vmax.f32 %v1329, %v1332
        %v1334 = vsel %vm1321, %v1296, -inf
        %v1335 = vmax.f32 %v1331, %v1334
        %v1336 = vsel %vm1321, %v1297, -inf
        %v1337 = vmax.f32 %v1333, %v1336
        %v1338 = vsel %vm1321, %v1298, -inf
        %v1339 = vmax.f32 %v1335, %v1338
        %v1340 = vsel %vm1321, %v1299, -inf
        %v1341 = vmax.f32 %v1337, %v1340
        %v1342 = vsel %vm1321, %v1300, -inf
        %v1343 = vmax.f32 %v1339, %v1342
        %v1344 = vsel %vm1321, %v1301, -inf
        %v1345 = vmax.f32 %v1341, %v1344
        %v1346 = vsel %vm1321, %v1302, -inf
        %v1347 = vmax.f32 %v1343, %v1346
        %v1348 = vsel %vm1321, %v1303, -inf
        %v1349 = vmax.f32 %v1345, %v1348
        %v1350 = vsel %vm1321, %v1304, -inf
        %v1351 = vmax.f32 %v1347, %v1350
        %v1352 = vmax.f32 %v1349, %v1351
        %v1353 = vrot.slane %v1352, 4
        %v1354 = vmax.f32 %v1352, %v1353
        %v1355 = vrot.slane %v1354, 2
        %v1356 = vmax.f32 %v1354, %v1355
        %v1357 = vrot.slane %v1356, 1
        %v1358 = vmax.f32 %v1356, %v1357
        %v1359 = vsel %vm1321, %v1305, -inf
        %v1360 = vsel %vm1321, %v1306, -inf
        %v1361 = vsel %vm1321, %v1307, -inf
        %v1362 = vmax.f32 %v1359, %v1361
        %v1363 = vsel %vm1321, %v1308, -inf
        %v1364 = vmax.f32 %v1360, %v1363
        %v1365 = vsel %vm1321, %v1309, -inf
        %v1366 = vmax.f32 %v1362, %v1365
        %v1367 = vsel %vm1321, %v1310, -inf
        %v1368 = vmax.f32 %v1364, %v1367
        %v1369 = vsel %vm1321, %v1311, -inf
        %v1370 = vmax.f32 %v1366, %v1369
        %v1371 = vsel %vm1321, %v1312, -inf
        %v1372 = vmax.f32 %v1368, %v1371
        %v1373 = vsel %vm1321, %v1313, -inf
        %v1374 = vmax.f32 %v1370, %v1373
        %v1375 = vsel %vm1321, %v1314, -inf
        %v1376 = vmax.f32 %v1372, %v1375
        %v1377 = vsel %vm1321, %v1315, -inf
        %v1378 = vmax.f32 %v1374, %v1377
        %v1379 = vsel %vm1321, %v1316, -inf
        %v1380 = vmax.f32 %v1376, %v1379
        %v1381 = vsel %vm1321, %v1317, -inf
        %v1382 = vmax.f32 %v1378, %v1381
        %v1383 = vsel %vm1321, %v1318, -inf
        %v1384 = vmax.f32 %v1380, %v1383
        %v1385 = vsel %vm1321, %v1319, -inf
        %v1386 = vmax.f32 %v1382, %v1385
        %v1387 = vsel %vm1321, %v1320, -inf
        %v1388 = vmax.f32 %v1384, %v1387
        %v1389 = vmax.f32 %v1386, %v1388
        %v1390 = vrot.slane %v1389, 4
        %v1391 = vmax.f32 %v1389, %v1390
        %v1392 = vrot.slane %v1391, 2
        %v1393 = vmax.f32 %v1391, %v1392
        %v1394 = vrot.slane %v1393, 1
        %v1395 = vmax.f32 %v1393, %v1394
        %p1396 = scmp.eq.s32.totalorder %s19, 0
        // Predicated region
        $region91: #{simple_pointnet_forward.6} parent=85 // pred_check
          %p1397 = pneg %p1396
        $region92: #{simple_pointnet_forward.6} parent=85 // pred_check_branch
          %1399 = sbr.rel (%p1397) target = $region94
        $region93: #{simple_pointnet_forward.6} parent=85 // pred_region
          %vm1400 = vcmask 517120
          %1401 = vst.msk [vmem:[%s8] sm:$0x3] %vm1400, -inf
        $region94: #{simple_pointnet_forward.6} parent=85 // pred_fallthru
          _
        %v1402 = vld [vmem:[%s8] sm:$0x3]
        %vm1405 = vcmask 1041409
        %v1406 = vsel %vm1405, %v1395, %v1358
        %v1408 = vmax.f32 %v1402, %v1406
        %vm1409 = vcmask 517120
        %1410 = vst.msk [vmem:[%s8] sm:$0x3] %vm1409, %v1408
        // Predicated region
        $region95: #{simple_pointnet_forward.6} parent=85 // pred_check
          %p1411 = pneg %p205
        $region96: #{simple_pointnet_forward.6} parent=85 // pred_check_branch
          %1413 = sbr.rel (%p1411) target = $region98
        $region97: #{simple_pointnet_forward.6} parent=85 // pred_region
          _
        $region98: #{simple_pointnet_forward.6} parent=85 // pred_fallthru
          _
        // Predicated region
        $region99: #{simple_pointnet_forward.6} parent=85 // pred_check
          %p1414 = pneg %p205
        $region100: #{simple_pointnet_forward.6} parent=85 // pred_check_branch
          %1416 = sbr.rel (%p1414) target = $region102
        $region101: #{simple_pointnet_forward.6} parent=85 // pred_region
          _
        $region102: #{simple_pointnet_forward.6} parent=85 // pred_fallthru
          _
      $region86: #{simple_pointnet_forward.6} parent=5 // pred_fallthru
        _
      %p1417 = scmp.le.s32.totalorder 2, %s14
      // Predicated region
      $region103: #{simple_pointnet_forward.6} parent=5 // pred_check
        %p1418 = pneg %p1417
      $region104: #{simple_pointnet_forward.6} parent=5 // pred_check_branch
        %1420 = sbr.rel (%p1418) target = $region106
      $region105: #{simple_pointnet_forward.6} parent=5 // pred_region
        %s1421 = ssub.s32 %s14, 2
      $region106: #{simple_pointnet_forward.6} parent=5 // pred_fallthru
        _
    $region6: #{simple_pointnet_forward.6} parent=1 // loop_footer
      %s18 = sadd.s32 1, %s14
    $region7: #{simple_pointnet_forward.6} parent=1 // loop_footer_branch
      %13 = sbr.rel target = $region3
    $region8: #{simple_pointnet_forward.6} parent=1 // loop_exit
      _

// kernel: simple_pointnet_forward.4
$region0: #{simple_pointnet_forward.4}
  #allocation0 [shape = 'u32[]', space=smem, size = 0x4, offset = 0x4, fixed_abs, tag = 'smem constant byte address 0x4 - core index']
  #allocation1 [shape = 'u32[72,128]{1,0:T(1,128)}', space=vmem, size = 0x9000, scoped, tag = 'internal scratch']
  %s0 = inlined_call_operand.vmem [shape: f32[2,256,3], index: 0, kind: input, shape index: {}]
  %s1 = inlined_call_operand.vmem [shape: bf16[3,16], index: 1, kind: input, shape index: {}]
  %s2 = inlined_call_operand.vmem [shape: f32[1,16], index: 2, kind: input, shape index: {}]
  %s3 = inlined_call_operand.vmem [shape: bf16[16,32], index: 3, kind: input, shape index: {}]
  %s4 = inlined_call_operand.vmem [shape: f32[1,32], index: 4, kind: input, shape index: {}]
  %s5 = inlined_call_operand.vmem [shape: bf16[32,64], index: 5, kind: input, shape index: {}]
  %s6 = inlined_call_operand.vmem [shape: f32[1,64], index: 6, kind: input, shape index: {}]
  %s7 = inlined_call_operand.vmem [shape: f32[2,64], index: 7, kind: output, shape index: {}]
  %s8 = sld [smem:[#allocation0]]
  $region103: #{simple_pointnet_forward.4} parent=0
    _
  %s10 = ssub.s32 1, %s8
  %s11 = scalar_select 0, %s10, %s8
  $region1: #{simple_pointnet_forward.4} parent=0
    #allocation2 [shape = 'u8[262144]{0}', space=vmem, size = 0x40000, scoped, tag = 'input window, operand 0']
    loop: start=0, step=1, limit=4
    $region2: #{simple_pointnet_forward.4} parent=1 // loop_pre_header
      _
    $region3: #{simple_pointnet_forward.4} parent=1 // loop_header
      %s13 = sphi 0, %s17
      %p14 = scmp.ge.s32.totalorder %s13, 4
      %s23 = sphi 0, %s25
      %s26 = sphi 0, %s23
      %s27 = sphi 0, %s26
      %s43 = sphi 0, %s27
      %s47 = sphi 0, %s47
      %s49 = sphi 0, %s47
      %s50 = sphi 0, %s49
      %s64 = sphi 0, %s50
      %s68 = sphi 0, %s68
      %s70 = sphi 0, %s68
      %s71 = sphi 0, %s70
      %s85 = sphi 0, %s71
      %s89 = sphi 0, %s89
      %s91 = sphi 0, %s89
      %s92 = sphi 0, %s91
      %s106 = sphi 0, %s92
      %s110 = sphi 0, %s110
      %s112 = sphi 0, %s110
      %s113 = sphi 0, %s112
      %s127 = sphi 0, %s113
      %s131 = sphi 0, %s131
      %s133 = sphi 0, %s131
      %s134 = sphi 0, %s133
      %s148 = sphi 0, %s134
      %s152 = sphi 0, %s152
      %s154 = sphi 0, %s152
      %s155 = sphi 0, %s154
      %s169 = sphi 0, %s155
      %s173 = sphi 0, %s173
      %s175 = sphi 0, %s173
      %s176 = sphi 0, %s175
      %s190 = sphi 0, %s176
    $region4: #{simple_pointnet_forward.4} parent=1 // loop_header_branch
      %16 = sbr.rel (%p14) target = $region8
    $region5: #{simple_pointnet_forward.4} parent=1 // loop_body
      %s18 = ssub.s32 %s13, 1
      %s19 = ssub.s32 %s13, 2
      %s20 = sadd.s32 %s13, 1
      %s21 = ssub.s32 %s13, %s20
      %p22 = scmp.eq.s32.totalorder %s21, 0
      %s24 = sadd.s32 %s23, 1
      %s25 = scalar_select %p22, %s23, %s24
      %p28 = pneg %p22
      %p29 = scmp.eq.s32.totalorder %s13, 1
      %p30 = por %p28, %p29
      %p31 = scmp.ne.s32.totalorder %s23, %s26
      %p32 = scmp.eq.s32.totalorder %s13, 0
      %p33 = por %p31, %p32
      %p34 = scmp.ne.s32.totalorder %s23, %s26
      %p35 = scmp.eq.s32.totalorder %s18, 1
      %p36 = por %p34, %p35
      %p37 = scmp.ne.s32.totalorder %s26, %s27
      %p38 = scmp.eq.s32.totalorder %s18, 0
      %p39 = por %p37, %p38
      %p40 = scmp.ne.s32.totalorder %s26, %s27
      %p41 = scmp.eq.s32.totalorder %s19, 1
      %p42 = por %p40, %p41
      %p44 = scmp.ne.s32.totalorder %s27, %s43
      %p45 = scmp.eq.s32.totalorder %s19, 0
      %p46 = por %p44, %p45
      %s48 = sadd.s32 %s47, 1
      %p51 = scmp.eq.s32.totalorder %s13, 1
      %p52 = scmp.ne.s32.totalorder %s47, %s49
      %p53 = scmp.eq.s32.totalorder %s13, 0
      %p54 = por %p52, %p53
      %p55 = scmp.ne.s32.totalorder %s47, %s49
      %p56 = scmp.eq.s32.totalorder %s18, 1
      %p57 = por %p55, %p56
      %p58 = scmp.ne.s32.totalorder %s49, %s50
      %p59 = scmp.eq.s32.totalorder %s18, 0
      %p60 = por %p58, %p59
      %p61 = scmp.ne.s32.totalorder %s49, %s50
      %p62 = scmp.eq.s32.totalorder %s19, 1
      %p63 = por %p61, %p62
      %p65 = scmp.ne.s32.totalorder %s50, %s64
      %p66 = scmp.eq.s32.totalorder %s19, 0
      %p67 = por %p65, %p66
      %s69 = sadd.s32 %s68, 1
      %p72 = scmp.eq.s32.totalorder %s13, 1
      %p73 = scmp.ne.s32.totalorder %s68, %s70
      %p74 = scmp.eq.s32.totalorder %s13, 0
      %p75 = por %p73, %p74
      %p76 = scmp.ne.s32.totalorder %s68, %s70
      %p77 = scmp.eq.s32.totalorder %s18, 1
      %p78 = por %p76, %p77
      %p79 = scmp.ne.s32.totalorder %s70, %s71
      %p80 = scmp.eq.s32.totalorder %s18, 0
      %p81 = por %p79, %p80
      %p82 = scmp.ne.s32.totalorder %s70, %s71
      %p83 = scmp.eq.s32.totalorder %s19, 1
      %p84 = por %p82, %p83
      %p86 = scmp.ne.s32.totalorder %s71, %s85
      %p87 = scmp.eq.s32.totalorder %s19, 0
      %p88 = por %p86, %p87
      %s90 = sadd.s32 %s89, 1
      %p93 = scmp.eq.s32.totalorder %s13, 1
      %p94 = scmp.ne.s32.totalorder %s89, %s91
      %p95 = scmp.eq.s32.totalorder %s13, 0
      %p96 = por %p94, %p95
      %p97 = scmp.ne.s32.totalorder %s89, %s91
      %p98 = scmp.eq.s32.totalorder %s18, 1
      %p99 = por %p97, %p98
      %p100 = scmp.ne.s32.totalorder %s91, %s92
      %p101 = scmp.eq.s32.totalorder %s18, 0
      %p102 = por %p100, %p101
      %p103 = scmp.ne.s32.totalorder %s91, %s92
      %p104 = scmp.eq.s32.totalorder %s19, 1
      %p105 = por %p103, %p104
      %p107 = scmp.ne.s32.totalorder %s92, %s106
      %p108 = scmp.eq.s32.totalorder %s19, 0
      %p109 = por %p107, %p108
      %s111 = sadd.s32 %s110, 1
      %p114 = scmp.eq.s32.totalorder %s13, 1
      %p115 = scmp.ne.s32.totalorder %s110, %s112
      %p116 = scmp.eq.s32.totalorder %s13, 0
      %p117 = por %p115, %p116
      %p118 = scmp.ne.s32.totalorder %s110, %s112
      %p119 = scmp.eq.s32.totalorder %s18, 1
      %p120 = por %p118, %p119
      %p121 = scmp.ne.s32.totalorder %s112, %s113
      %p122 = scmp.eq.s32.totalorder %s18, 0
      %p123 = por %p121, %p122
      %p124 = scmp.ne.s32.totalorder %s112, %s113
      %p125 = scmp.eq.s32.totalorder %s19, 1
      %p126 = por %p124, %p125
      %p128 = scmp.ne.s32.totalorder %s113, %s127
      %p129 = scmp.eq.s32.totalorder %s19, 0
      %p130 = por %p128, %p129
      %s132 = sadd.s32 %s131, 1
      %p135 = scmp.eq.s32.totalorder %s13, 1
      %p136 = scmp.ne.s32.totalorder %s131, %s133
      %p137 = scmp.eq.s32.totalorder %s13, 0
      %p138 = por %p136, %p137
      %p139 = scmp.ne.s32.totalorder %s131, %s133
      %p140 = scmp.eq.s32.totalorder %s18, 1
      %p141 = por %p139, %p140
      %p142 = scmp.ne.s32.totalorder %s133, %s134
      %p143 = scmp.eq.s32.totalorder %s18, 0
      %p144 = por %p142, %p143
      %p145 = scmp.ne.s32.totalorder %s133, %s134
      %p146 = scmp.eq.s32.totalorder %s19, 1
      %p147 = por %p145, %p146
      %p149 = scmp.ne.s32.totalorder %s134, %s148
      %p150 = scmp.eq.s32.totalorder %s19, 0
      %p151 = por %p149, %p150
      %s153 = sadd.s32 %s152, 1
      %p156 = scmp.eq.s32.totalorder %s13, 1
      %p157 = scmp.ne.s32.totalorder %s152, %s154
      %p158 = scmp.eq.s32.totalorder %s13, 0
      %p159 = por %p157, %p158
      %p160 = scmp.ne.s32.totalorder %s152, %s154
      %p161 = scmp.eq.s32.totalorder %s18, 1
      %p162 = por %p160, %p161
      %p163 = scmp.ne.s32.totalorder %s154, %s155
      %p164 = scmp.eq.s32.totalorder %s18, 0
      %p165 = por %p163, %p164
      %p166 = scmp.ne.s32.totalorder %s154, %s155
      %p167 = scmp.eq.s32.totalorder %s19, 1
      %p168 = por %p166, %p167
      %p170 = scmp.ne.s32.totalorder %s155, %s169
      %p171 = scmp.eq.s32.totalorder %s19, 0
      %p172 = por %p170, %p171
      %s174 = sadd.s32 %s173, 1
      %p177 = scmp.eq.s32.totalorder %s13, 1
      %p178 = scmp.ne.s32.totalorder %s173, %s175
      %p179 = scmp.eq.s32.totalorder %s13, 0
      %p180 = por %p178, %p179
      %p181 = scmp.ne.s32.totalorder %s173, %s175
      %p182 = scmp.eq.s32.totalorder %s18, 1
      %p183 = por %p181, %p182
      %p184 = scmp.ne.s32.totalorder %s175, %s176
      %p185 = scmp.eq.s32.totalorder %s18, 0
      %p186 = por %p184, %p185
      %p187 = scmp.ne.s32.totalorder %s175, %s176
      %p188 = scmp.eq.s32.totalorder %s19, 1
      %p189 = por %p187, %p188
      %p191 = scmp.ne.s32.totalorder %s176, %s190
      %p192 = scmp.eq.s32.totalorder %s19, 0
      %p193 = por %p191, %p192
      %p194 = scmp.le.s32.totalorder 1, %s13
      %p195 = scmp.lt.s32.totalorder %s13, 3
      %p196 = pnand %p194, %p195
      %p197 = pneg %p196
      // Predicated region
      $region9: #{simple_pointnet_forward.4} parent=5 // pred_check
        _
      $region10: #{simple_pointnet_forward.4} parent=5 // pred_check_branch
        %199 = sbr.rel (%p196) target = $region12
      $region11: #{simple_pointnet_forward.4} parent=5 // pred_region
        %s200 = ssub.s32 %s13, 1
        // Predicated region
        $region13: #{simple_pointnet_forward.4} parent=11 // pred_check
          %p201 = pneg %p60
        $region14: #{simple_pointnet_forward.4} parent=11 // pred_check_branch
          %203 = sbr.rel (%p201) target = $region16
        $region15: #{simple_pointnet_forward.4} parent=11 // pred_region
          _
        $region16: #{simple_pointnet_forward.4} parent=11 // pred_fallthru
          _
        // Predicated region
        $region17: #{simple_pointnet_forward.4} parent=11 // pred_check
          %p204 = pneg %p81
        $region18: #{simple_pointnet_forward.4} parent=11 // pred_check_branch
          %206 = sbr.rel (%p204) target = $region20
        $region19: #{simple_pointnet_forward.4} parent=11 // pred_region
          _
        $region20: #{simple_pointnet_forward.4} parent=11 // pred_fallthru
          _
        // Predicated region
        $region21: #{simple_pointnet_forward.4} parent=11 // pred_check
          %p207 = pneg %p102
        $region22: #{simple_pointnet_forward.4} parent=11 // pred_check_branch
          %209 = sbr.rel (%p207) target = $region24
        $region23: #{simple_pointnet_forward.4} parent=11 // pred_region
          _
        $region24: #{simple_pointnet_forward.4} parent=11 // pred_fallthru
          _
        // Predicated region
        $region25: #{simple_pointnet_forward.4} parent=11 // pred_check
          %p210 = pneg %p123
        $region26: #{simple_pointnet_forward.4} parent=11 // pred_check_branch
          %212 = sbr.rel (%p210) target = $region28
        $region27: #{simple_pointnet_forward.4} parent=11 // pred_region
          _
        $region28: #{simple_pointnet_forward.4} parent=11 // pred_fallthru
          _
        // Predicated region
        $region29: #{simple_pointnet_forward.4} parent=11 // pred_check
          %p213 = pneg %p144
        $region30: #{simple_pointnet_forward.4} parent=11 // pred_check_branch
          %215 = sbr.rel (%p213) target = $region32
        $region31: #{simple_pointnet_forward.4} parent=11 // pred_region
          _
        $region32: #{simple_pointnet_forward.4} parent=11 // pred_fallthru
          _
        // Predicated region
        $region33: #{simple_pointnet_forward.4} parent=11 // pred_check
          %p216 = pneg %p165
        $region34: #{simple_pointnet_forward.4} parent=11 // pred_check_branch
          %218 = sbr.rel (%p216) target = $region36
        $region35: #{simple_pointnet_forward.4} parent=11 // pred_region
          _
        $region36: #{simple_pointnet_forward.4} parent=11 // pred_fallthru
          _
      $region12: #{simple_pointnet_forward.4} parent=5 // pred_fallthru
        _
      %p219 = scmp.lt.s32.totalorder %s13, 2
      // Predicated region
      $region37: #{simple_pointnet_forward.4} parent=5 // pred_check
        %p220 = pneg %p219
      $region38: #{simple_pointnet_forward.4} parent=5 // pred_check_branch
        %222 = sbr.rel (%p220) target = $region40
      $region39: #{simple_pointnet_forward.4} parent=5 // pred_region
        // Predicated region
        $region41: #{simple_pointnet_forward.4} parent=39 // pred_check
          %p223 = pneg %p33
        $region42: #{simple_pointnet_forward.4} parent=39 // pred_check_branch
          %225 = sbr.rel (%p223) target = $region44
        $region43: #{simple_pointnet_forward.4} parent=39 // pred_region
          %s226 = sand.u32 %s23, 1
          %s227 = sand.u32 %s23, 1
          %s228 = smul.addr %s227, 256
          %s229 = scalar_lea.vmem [#allocation2], %s228
          %s230 = smul.u32 16, %s13
          %s231 = smul.addr %s230, 8
          %s232 = scalar_lea.vmem %s0, %s231
          // Predicated region
          $region45: #{simple_pointnet_forward.4} parent=43 // pred_check
            _
          $region46: #{simple_pointnet_forward.4} parent=43 // pred_check_branch
            %234 = sbr.rel (0) target = $region48
          $region47: #{simple_pointnet_forward.4} parent=43 // pred_region
            // Predicated region
            $region49: #{simple_pointnet_forward.4} parent=47 // pred_check
              _
            $region50: #{simple_pointnet_forward.4} parent=47 // pred_check_branch
              %236 = sbr.rel (0) target = $region52
            $region51: #{simple_pointnet_forward.4} parent=47 // pred_region
              // Predicated region
              $region64: #{simple_pointnet_forward.4} parent=51 // pred_check
                _
              $region65: #{simple_pointnet_forward.4} parent=51 // pred_check_branch
                %314 = sbr.rel (0) target = $region67
              $region66: #{simple_pointnet_forward.4} parent=51 // pred_region
                loop: start=0, step=1, limit=1
                $region68: #{simple_pointnet_forward.4} parent=66 // loop_pre_header
                  _
                $region69: #{simple_pointnet_forward.4} parent=66 // loop_header
                  %s316 = sphi 0, %s320
                  %p317 = scmp.ge.s32.totalorder %s316, 1
                  %s321 = sphi %s232, %s232
                  %s322 = sphi %s229, %s229
                $region70: #{simple_pointnet_forward.4} parent=66 // loop_header_branch
                  %319 = sbr.rel (%p317) target = $region74
                $region71: #{simple_pointnet_forward.4} parent=66 // loop_body
                  %v323 = vld [vmem:[%s321] sm:$0xff]
                  %324 = vst [vmem:[%s322] sm:$0xff] %v323
                  %v325 = vld [vmem:[%s321 + $0x8] sm:$0xff]
                  %326 = vst [vmem:[%s322 + $0x8] sm:$0xff] %v325
                  %v327 = vld [vmem:[%s321 + $0x10] sm:$0xff]
                  %328 = vst [vmem:[%s322 + $0x10] sm:$0xff] %v327
                  %v329 = vld [vmem:[%s321 + $0x18] sm:$0xff]
                  %330 = vst [vmem:[%s322 + $0x18] sm:$0xff] %v329
                  %v331 = vld [vmem:[%s321 + $0x20] sm:$0xff]
                  %332 = vst [vmem:[%s322 + $0x20] sm:$0xff] %v331
                  %v333 = vld [vmem:[%s321 + $0x28] sm:$0xff]
                  %334 = vst [vmem:[%s322 + $0x28] sm:$0xff] %v333
                  %v335 = vld [vmem:[%s321 + $0x30] sm:$0xff]
                  %336 = vst [vmem:[%s322 + $0x30] sm:$0xff] %v335
                  %v337 = vld [vmem:[%s321 + $0x38] sm:$0xff]
                  %338 = vst [vmem:[%s322 + $0x38] sm:$0xff] %v337
                  %v339 = vld [vmem:[%s321 + $0x40] sm:$0xff]
                  %340 = vst [vmem:[%s322 + $0x40] sm:$0xff] %v339
                  %v341 = vld [vmem:[%s321 + $0x48] sm:$0xff]
                  %342 = vst [vmem:[%s322 + $0x48] sm:$0xff] %v341
                  %v343 = vld [vmem:[%s321 + $0x50] sm:$0xff]
                  %344 = vst [vmem:[%s322 + $0x50] sm:$0xff] %v343
                  %v345 = vld [vmem:[%s321 + $0x58] sm:$0xff]
                  %346 = vst [vmem:[%s322 + $0x58] sm:$0xff] %v345
                  %v347 = vld [vmem:[%s321 + $0x60] sm:$0xff]
                  %348 = vst [vmem:[%s322 + $0x60] sm:$0xff] %v347
                  %v349 = vld [vmem:[%s321 + $0x68] sm:$0xff]
                  %350 = vst [vmem:[%s322 + $0x68] sm:$0xff] %v349
                  %v351 = vld [vmem:[%s321 + $0x70] sm:$0xff]
                  %352 = vst [vmem:[%s322 + $0x70] sm:$0xff] %v351
                  %v353 = vld [vmem:[%s321 + $0x78] sm:$0xff]
                  %354 = vst [vmem:[%s322 + $0x78] sm:$0xff] %v353
                  %v355 = vld [vmem:[%s321 + $0x100] sm:$0xff]
                  %356 = vst [vmem:[%s322 + $0x80] sm:$0xff] %v355
                  %v357 = vld [vmem:[%s321 + $0x108] sm:$0xff]
                  %358 = vst [vmem:[%s322 + $0x88] sm:$0xff] %v357
                  %v359 = vld [vmem:[%s321 + $0x110] sm:$0xff]
                  %360 = vst [vmem:[%s322 + $0x90] sm:$0xff] %v359
                  %v361 = vld [vmem:[%s321 + $0x118] sm:$0xff]
                  %362 = vst [vmem:[%s322 + $0x98] sm:$0xff] %v361
                  %v363 = vld [vmem:[%s321 + $0x120] sm:$0xff]
                  %364 = vst [vmem:[%s322 + $0xa0] sm:$0xff] %v363
                  %v365 = vld [vmem:[%s321 + $0x128] sm:$0xff]
                  %366 = vst [vmem:[%s322 + $0xa8] sm:$0xff] %v365
                  %v367 = vld [vmem:[%s321 + $0x130] sm:$0xff]
                  %368 = vst [vmem:[%s322 + $0xb0] sm:$0xff] %v367
                  %v369 = vld [vmem:[%s321 + $0x138] sm:$0xff]
                  %370 = vst [vmem:[%s322 + $0xb8] sm:$0xff] %v369
                  %v371 = vld [vmem:[%s321 + $0x140] sm:$0xff]
                  %372 = vst [vmem:[%s322 + $0xc0] sm:$0xff] %v371
                  %v373 = vld [vmem:[%s321 + $0x148] sm:$0xff]
                  %374 = vst [vmem:[%s322 + $0xc8] sm:$0xff] %v373
                  %v375 = vld [vmem:[%s321 + $0x150] sm:$0xff]
                  %376 = vst [vmem:[%s322 + $0xd0] sm:$0xff] %v375
                  %v377 = vld [vmem:[%s321 + $0x158] sm:$0xff]
                  %378 = vst [vmem:[%s322 + $0xd8] sm:$0xff] %v377
                  %v379 = vld [vmem:[%s321 + $0x160] sm:$0xff]
                  %380 = vst [vmem:[%s322 + $0xe0] sm:$0xff] %v379
                  %v381 = vld [vmem:[%s321 + $0x168] sm:$0xff]
                  %382 = vst [vmem:[%s322 + $0xe8] sm:$0xff] %v381
                  %v383 = vld [vmem:[%s321 + $0x170] sm:$0xff]
                  %384 = vst [vmem:[%s322 + $0xf0] sm:$0xff] %v383
                  %v385 = vld [vmem:[%s321 + $0x178] sm:$0xff]
                  %386 = vst [vmem:[%s322 + $0xf8] sm:$0xff] %v385
                $region72: #{simple_pointnet_forward.4} parent=66 // loop_footer
                  %s320 = sadd.s32 1, %s316
                $region73: #{simple_pointnet_forward.4} parent=66 // loop_footer_branch
                  %315 = sbr.rel target = $region69
                $region74: #{simple_pointnet_forward.4} parent=66 // loop_exit
                  _
              $region67: #{simple_pointnet_forward.4} parent=51 // pred_fallthru
                _
              // Predicated region
              $region75: #{simple_pointnet_forward.4} parent=51 // pred_check
                _
              $region76: #{simple_pointnet_forward.4} parent=51 // pred_check_branch
                %388 = sbr.rel target = $region78
              $region77: #{simple_pointnet_forward.4} parent=51 // pred_region
                _
              $region78: #{simple_pointnet_forward.4} parent=51 // pred_fallthru
                _
            $region52: #{simple_pointnet_forward.4} parent=47 // pred_fallthru
              _
            // Predicated region
            $region53: #{simple_pointnet_forward.4} parent=47 // pred_check
              _
            $region54: #{simple_pointnet_forward.4} parent=47 // pred_check_branch
              %238 = sbr.rel target = $region56
            $region55: #{simple_pointnet_forward.4} parent=47 // pred_region
              %s240 = ssub.s32 256, 1
              loop: start=0, step=1, limit=1
              $region57: #{simple_pointnet_forward.4} parent=55 // loop_pre_header
                _
              $region58: #{simple_pointnet_forward.4} parent=55 // loop_header
                %s242 = sphi 0, %s246
                %p243 = scmp.ge.s32.totalorder %s242, 1
                %s247 = sphi %s232, %s232
                %s248 = sphi %s229, %s229
              $region59: #{simple_pointnet_forward.4} parent=55 // loop_header_branch
                %245 = sbr.rel (%p243) target = $region63
              $region60: #{simple_pointnet_forward.4} parent=55 // loop_body
                %v249 = vld [vmem:[%s247] sm:%s240]
                %250 = vst [vmem:[%s248] sm:%s240] %v249
                %v251 = vld [vmem:[%s247 + $0x8] sm:%s240]
                %252 = vst [vmem:[%s248 + $0x8] sm:%s240] %v251
                %v253 = vld [vmem:[%s247 + $0x10] sm:%s240]
                %254 = vst [vmem:[%s248 + $0x10] sm:%s240] %v253
                %v255 = vld [vmem:[%s247 + $0x18] sm:%s240]
                %256 = vst [vmem:[%s248 + $0x18] sm:%s240] %v255
                %v257 = vld [vmem:[%s247 + $0x20] sm:%s240]
                %258 = vst [vmem:[%s248 + $0x20] sm:%s240] %v257
                %v259 = vld [vmem:[%s247 + $0x28] sm:%s240]
                %260 = vst [vmem:[%s248 + $0x28] sm:%s240] %v259
                %v261 = vld [vmem:[%s247 + $0x30] sm:%s240]
                %262 = vst [vmem:[%s248 + $0x30] sm:%s240] %v261
                %v263 = vld [vmem:[%s247 + $0x38] sm:%s240]
                %264 = vst [vmem:[%s248 + $0x38] sm:%s240] %v263
                %v265 = vld [vmem:[%s247 + $0x40] sm:%s240]
                %266 = vst [vmem:[%s248 + $0x40] sm:%s240] %v265
                %v267 = vld [vmem:[%s247 + $0x48] sm:%s240]
                %268 = vst [vmem:[%s248 + $0x48] sm:%s240] %v267
                %v269 = vld [vmem:[%s247 + $0x50] sm:%s240]
                %270 = vst [vmem:[%s248 + $0x50] sm:%s240] %v269
                %v271 = vld [vmem:[%s247 + $0x58] sm:%s240]
                %272 = vst [vmem:[%s248 + $0x58] sm:%s240] %v271
                %v273 = vld [vmem:[%s247 + $0x60] sm:%s240]
                %274 = vst [vmem:[%s248 + $0x60] sm:%s240] %v273
                %v275 = vld [vmem:[%s247 + $0x68] sm:%s240]
                %276 = vst [vmem:[%s248 + $0x68] sm:%s240] %v275
                %v277 = vld [vmem:[%s247 + $0x70] sm:%s240]
                %278 = vst [vmem:[%s248 + $0x70] sm:%s240] %v277
                %v279 = vld [vmem:[%s247 + $0x78] sm:%s240]
                %280 = vst [vmem:[%s248 + $0x78] sm:%s240] %v279
                %v281 = vld [vmem:[%s247 + $0x100] sm:%s240]
                %282 = vst [vmem:[%s248 + $0x80] sm:%s240] %v281
                %v283 = vld [vmem:[%s247 + $0x108] sm:%s240]
                %284 = vst [vmem:[%s248 + $0x88] sm:%s240] %v283
                %v285 = vld [vmem:[%s247 + $0x110] sm:%s240]
                %286 = vst [vmem:[%s248 + $0x90] sm:%s240] %v285
                %v287 = vld [vmem:[%s247 + $0x118] sm:%s240]
                %288 = vst [vmem:[%s248 + $0x98] sm:%s240] %v287
                %v289 = vld [vmem:[%s247 + $0x120] sm:%s240]
                %290 = vst [vmem:[%s248 + $0xa0] sm:%s240] %v289
                %v291 = vld [vmem:[%s247 + $0x128] sm:%s240]
                %292 = vst [vmem:[%s248 + $0xa8] sm:%s240] %v291
                %v293 = vld [vmem:[%s247 + $0x130] sm:%s240]
                %294 = vst [vmem:[%s248 + $0xb0] sm:%s240] %v293
                %v295 = vld [vmem:[%s247 + $0x138] sm:%s240]
                %296 = vst [vmem:[%s248 + $0xb8] sm:%s240] %v295
                %v297 = vld [vmem:[%s247 + $0x140] sm:%s240]
                %298 = vst [vmem:[%s248 + $0xc0] sm:%s240] %v297
                %v299 = vld [vmem:[%s247 + $0x148] sm:%s240]
                %300 = vst [vmem:[%s248 + $0xc8] sm:%s240] %v299
                %v301 = vld [vmem:[%s247 + $0x150] sm:%s240]
                %302 = vst [vmem:[%s248 + $0xd0] sm:%s240] %v301
                %v303 = vld [vmem:[%s247 + $0x158] sm:%s240]
                %304 = vst [vmem:[%s248 + $0xd8] sm:%s240] %v303
                %v305 = vld [vmem:[%s247 + $0x160] sm:%s240]
                %306 = vst [vmem:[%s248 + $0xe0] sm:%s240] %v305
                %v307 = vld [vmem:[%s247 + $0x168] sm:%s240]
                %308 = vst [vmem:[%s248 + $0xe8] sm:%s240] %v307
                %v309 = vld [vmem:[%s247 + $0x170] sm:%s240]
                %310 = vst [vmem:[%s248 + $0xf0] sm:%s240] %v309
                %v311 = vld [vmem:[%s247 + $0x178] sm:%s240]
                %312 = vst [vmem:[%s248 + $0xf8] sm:%s240] %v311
              $region61: #{simple_pointnet_forward.4} parent=55 // loop_footer
                %s246 = sadd.s32 1, %s242
              $region62: #{simple_pointnet_forward.4} parent=55 // loop_footer_branch
                %241 = sbr.rel target = $region58
              $region63: #{simple_pointnet_forward.4} parent=55 // loop_exit
                _
            $region56: #{simple_pointnet_forward.4} parent=47 // pred_fallthru
              _
          $region48: #{simple_pointnet_forward.4} parent=43 // pred_fallthru
            _
          %389 = vnop
        $region44: #{simple_pointnet_forward.4} parent=39 // pred_fallthru
          _
      $region40: #{simple_pointnet_forward.4} parent=5 // pred_fallthru
        _
      %p390 = scmp.le.s32.totalorder 1, %s13
      %p391 = scmp.lt.s32.totalorder %s13, 3
      %p392 = pnand %p390, %p391
      %p393 = pneg %p392
      // Predicated region
      $region79: #{simple_pointnet_forward.4} parent=5 // pred_check
        _
      $region80: #{simple_pointnet_forward.4} parent=5 // pred_check_branch
        %395 = sbr.rel (%p392) target = $region82
      $region81: #{simple_pointnet_forward.4} parent=5 // pred_region
        %s396 = ssub.s32 %s13, 1
        %s397 = sand.u32 %s26, 1
        %s398 = sand.u32 %s26, 1
        %s399 = smul.addr %s398, 256
        %s400 = scalar_lea.vmem [#allocation2], %s399
        // Predicated region
        $region83: #{simple_pointnet_forward.4} parent=81 // pred_check
          %p401 = pneg %p39
        $region84: #{simple_pointnet_forward.4} parent=81 // pred_check_branch
          %403 = sbr.rel (%p401) target = $region86
        $region85: #{simple_pointnet_forward.4} parent=81 // pred_region
          _
        $region86: #{simple_pointnet_forward.4} parent=81 // pred_fallthru
          _
        %s404 = sand.u32 %s26, 1
        %s405 = sand.u32 %s26, 1
        %s406 = smul.addr %s405, 256
        %s407 = scalar_lea.vmem [#allocation2], %s406
        %p408 = pneg %p39
        %p409 = pneg %p36
        %p410 = pneg %p60
        %p411 = pneg %p57
        %p412 = pneg %p81
        %p413 = pneg %p78
        %p414 = pneg %p102
        %p415 = pneg %p99
        %p416 = pneg %p123
        %p417 = pneg %p120
        %p418 = pneg %p144
        %p419 = pneg %p141
        %p420 = pneg %p165
        %p421 = pneg %p162
        %p422 = pneg %p186
        %p423 = pneg %p183
        %s424 = smul.u32 16, %s18
        %v426 = vld [vmem:[%s400] sm:$0xff]
        %v427 = vld [vmem:[%s400 + $0x8] sm:$0xff]
        %v428 = vld [vmem:[%s400 + $0x10] sm:$0xff]
        %v429 = vld [vmem:[%s400 + $0x18] sm:$0xff]
        %v430 = vld [vmem:[%s400 + $0x20] sm:$0xff]
        %v431 = vld [vmem:[%s400 + $0x28] sm:$0xff]
        %v432 = vld [vmem:[%s400 + $0x30] sm:$0xff]
        %v433 = vld [vmem:[%s400 + $0x38] sm:$0xff]
        %v434 = vld [vmem:[%s400 + $0x40] sm:$0xff]
        %v435 = vld [vmem:[%s400 + $0x48] sm:$0xff]
        %v436 = vld [vmem:[%s400 + $0x50] sm:$0xff]
        %v437 = vld [vmem:[%s400 + $0x58] sm:$0xff]
        %v438 = vld [vmem:[%s400 + $0x60] sm:$0xff]
        %v439 = vld [vmem:[%s400 + $0x68] sm:$0xff]
        %v440 = vld [vmem:[%s400 + $0x70] sm:$0xff]
        %v441 = vld [vmem:[%s400 + $0x78] sm:$0xff]
        %v442 = vld [vmem:[%s400 + $0x80] sm:$0xff]
        %v443 = vld [vmem:[%s400 + $0x88] sm:$0xff]
        %v444 = vld [vmem:[%s400 + $0x90] sm:$0xff]
        %v445 = vld [vmem:[%s400 + $0x98] sm:$0xff]
        %v446 = vld [vmem:[%s400 + $0xa0] sm:$0xff]
        %v447 = vld [vmem:[%s400 + $0xa8] sm:$0xff]
        %v448 = vld [vmem:[%s400 + $0xb0] sm:$0xff]
        %v449 = vld [vmem:[%s400 + $0xb8] sm:$0xff]
        %v450 = vld [vmem:[%s400 + $0xc0] sm:$0xff]
        %v451 = vld [vmem:[%s400 + $0xc8] sm:$0xff]
        %v452 = vld [vmem:[%s400 + $0xd0] sm:$0xff]
        %v453 = vld [vmem:[%s400 + $0xd8] sm:$0xff]
        %v454 = vld [vmem:[%s400 + $0xe0] sm:$0xff]
        %v455 = vld [vmem:[%s400 + $0xe8] sm:$0xff]
        %v456 = vld [vmem:[%s400 + $0xf0] sm:$0xff]
        %v457 = vld [vmem:[%s400 + $0xf8] sm:$0xff]
        %v458 = vld [vmem:[%s1] sm:$0x3]
        %v459 = vld [vmem:[%s2] sm:$0x1]
        %v460 = vpack.c.bf16 %v427, %v426
        %v461 = vpack.c.bf16 %v429, %v428
        %v462 = vpack.c.bf16 %v431, %v430
        %v463 = vpack.c.bf16 %v433, %v432
        %v464 = vpack.c.bf16 %v435, %v434
        %v465 = vpack.c.bf16 %v437, %v436
        %v466 = vpack.c.bf16 %v439, %v438
        %v467 = vpack.c.bf16 %v441, %v440
        %v468 = vpack.c.bf16 %v443, %v442
        %v469 = vpack.c.bf16 %v445, %v444
        %v470 = vpack.c.bf16 %v447, %v446
        %v471 = vpack.c.bf16 %v449, %v448
        %v472 = vpack.c.bf16 %v451, %v450
        %v473 = vpack.c.bf16 %v453, %v452
        %v474 = vpack.c.bf16 %v455, %v454
        %v475 = vpack.c.bf16 %v457, %v456
        %v477 = vperm.slane %v459, 0
        %vm479 = vcmask 23552
        %v481 = vsel %vm479, %v460, 0
        %v484 = vsel %vm479, %v461, 0
        %v487 = vsel %vm479, %v462, 0
        %v490 = vsel %vm479, %v463, 0
        %v493 = vsel %vm479, %v464, 0
        %v496 = vsel %vm479, %v465, 0
        %v499 = vsel %vm479, %v466, 0
        %v502 = vsel %vm479, %v467, 0
        %v505 = vsel %vm479, %v468, 0
        %v508 = vsel %vm479, %v469, 0
        %v511 = vsel %vm479, %v470, 0
        %v514 = vsel %vm479, %v471, 0
        %v517 = vsel %vm479, %v472, 0
        %v520 = vsel %vm479, %v473, 0
        %v523 = vsel %vm479, %v474, 0
        %v526 = vsel %vm479, %v475, 0
        %vm528 = vcmask 1040384
        %vm529 = vcmask 1041408
        %v530 = vsel %vm528, 4294967295, 65535
        %v531 = vsel %vm529, %v530, 0
        %v533 = vand.u32 %v458, %v531
        %535 = vmatpush.bf16.msra.mxu0 0
        %536 = vmatpush.bf16.msra.mxu0 0
        %537 = vmatpush.bf16.msra.mxu0 0
        %538 = vmatpush.bf16.msra.mxu0 0
        %539 = vmatpush.bf16.msra.mxu0 0
        %540 = vmatpush.bf16.msra.mxu0 0
        %541 = vmatpush.bf16.msra.mxu0 0
        %542 = vmatpush.bf16.msra.mxu0 %v533
        %543 = vmatmul.bf16.gmra.mxu0 %v481
        %v544 = vpop.f32.mrf.mxu0
        %v545 = vadd.f32 %v477, %v544
        %v546 = vpop.f32.mrf.mxu0
        %v547 = vadd.f32 %v477, %v546
        %548 = vmatmul.bf16.gmra.mxu0 %v484
        %v549 = vpop.f32.mrf.mxu0
        %v550 = vadd.f32 %v477, %v549
        %v551 = vpop.f32.mrf.mxu0
        %v552 = vadd.f32 %v477, %v551
        %553 = vmatmul.bf16.gmra.mxu0 %v487
        %v554 = vpop.f32.mrf.mxu0
        %v555 = vadd.f32 %v477, %v554
        %v556 = vpop.f32.mrf.mxu0
        %v557 = vadd.f32 %v477, %v556
        %558 = vmatmul.bf16.gmra.mxu0 %v490
        %v559 = vpop.f32.mrf.mxu0
        %v560 = vadd.f32 %v477, %v559
        %v561 = vpop.f32.mrf.mxu0
        %v562 = vadd.f32 %v477, %v561
        %563 = vmatmul.bf16.gmra.mxu0 %v493
        %v564 = vpop.f32.mrf.mxu0
        %v565 = vadd.f32 %v477, %v564
        %v566 = vpop.f32.mrf.mxu0
        %v567 = vadd.f32 %v477, %v566
        %568 = vmatmul.bf16.gmra.mxu0 %v496
        %v569 = vpop.f32.mrf.mxu0
        %v570 = vadd.f32 %v477, %v569
        %v571 = vpop.f32.mrf.mxu0
        %v572 = vadd.f32 %v477, %v571
        %573 = vmatmul.bf16.gmra.mxu0 %v499
        %v574 = vpop.f32.mrf.mxu0
        %v575 = vadd.f32 %v477, %v574
        %v576 = vpop.f32.mrf.mxu0
        %v577 = vadd.f32 %v477, %v576
        %578 = vmatmul.bf16.gmra.mxu0 %v502
        %v579 = vpop.f32.mrf.mxu0
        %v580 = vadd.f32 %v477, %v579
        %v581 = vpop.f32.mrf.mxu0
        %v582 = vadd.f32 %v477, %v581
        %583 = vmatmul.bf16.gmra.mxu0 %v505
        %v584 = vpop.f32.mrf.mxu0
        %v585 = vadd.f32 %v477, %v584
        %v586 = vpop.f32.mrf.mxu0
        %v587 = vadd.f32 %v477, %v586
        %588 = vmatmul.bf16.gmra.mxu0 %v508
        %v589 = vpop.f32.mrf.mxu0
        %v590 = vadd.f32 %v477, %v589
        %v591 = vpop.f32.mrf.mxu0
        %v592 = vadd.f32 %v477, %v591
        %593 = vmatmul.bf16.gmra.mxu0 %v511
        %v594 = vpop.f32.mrf.mxu0
        %v595 = vadd.f32 %v477, %v594
        %v596 = vpop.f32.mrf.mxu0
        %v597 = vadd.f32 %v477, %v596
        %598 = vmatmul.bf16.gmra.mxu0 %v514
        %v599 = vpop.f32.mrf.mxu0
        %v600 = vadd.f32 %v477, %v599
        %v601 = vpop.f32.mrf.mxu0
        %v602 = vadd.f32 %v477, %v601
        %603 = vmatmul.bf16.gmra.mxu0 %v517
        %v604 = vpop.f32.mrf.mxu0
        %v605 = vadd.f32 %v477, %v604
        %v606 = vpop.f32.mrf.mxu0
        %v607 = vadd.f32 %v477, %v606
        %608 = vmatmul.bf16.gmra.mxu0 %v520
        %v609 = vpop.f32.mrf.mxu0
        %v610 = vadd.f32 %v477, %v609
        %v611 = vpop.f32.mrf.mxu0
        %v612 = vadd.f32 %v477, %v611
        %613 = vmatmul.bf16.gmra.mxu0 %v523
        %v614 = vpop.f32.mrf.mxu0
        %v615 = vadd.f32 %v477, %v614
        %v616 = vpop.f32.mrf.mxu0
        %v617 = vadd.f32 %v477, %v616
        %618 = vmatmul.bf16.gmra.mxu0 %v526
        %v619 = vpop.f32.mrf.mxu0
        %v620 = vadd.f32 %v477, %v619
        %v621 = vpop.f32.mrf.mxu0
        %v622 = vadd.f32 %v477, %v621
        %623 = vdwg.mxu0
        %v624 = vmax.f32 %v545, 0.0
        %v625 = vmax.f32 %v547, 0.0
        %v626 = vmax.f32 %v550, 0.0
        %v627 = vmax.f32 %v552, 0.0
        %v628 = vmax.f32 %v555, 0.0
        %v629 = vmax.f32 %v557, 0.0
        %v630 = vmax.f32 %v560, 0.0
        %v631 = vmax.f32 %v562, 0.0
        %v632 = vmax.f32 %v565, 0.0
        %v633 = vmax.f32 %v567, 0.0
        %v634 = vmax.f32 %v570, 0.0
        %v635 = vmax.f32 %v572, 0.0
        %v636 = vmax.f32 %v575, 0.0
        %v637 = vmax.f32 %v577, 0.0
        %v638 = vmax.f32 %v580, 0.0
        %v639 = vmax.f32 %v582, 0.0
        %v640 = vmax.f32 %v585, 0.0
        %v641 = vmax.f32 %v587, 0.0
        %v642 = vmax.f32 %v590, 0.0
        %v643 = vmax.f32 %v592, 0.0
        %v644 = vmax.f32 %v595, 0.0
        %v645 = vmax.f32 %v597, 0.0
        %v646 = vmax.f32 %v600, 0.0
        %v647 = vmax.f32 %v602, 0.0
        %v648 = vmax.f32 %v605, 0.0
        %v649 = vmax.f32 %v607, 0.0
        %v650 = vmax.f32 %v610, 0.0
        %v651 = vmax.f32 %v612, 0.0
        %v652 = vmax.f32 %v615, 0.0
        %v653 = vmax.f32 %v617, 0.0
        %v654 = vmax.f32 %v620, 0.0
        %v655 = vmax.f32 %v622, 0.0
        %v656 = vld [vmem:[%s3] sm:$0xf]
        %v657 = vld [vmem:[%s3 + $0x4] sm:$0xf]
        %v658 = vld [vmem:[%s4] sm:$0x1]
        %v659 = vpack.c.bf16 %v625, %v624
        %v660 = vpack.c.bf16 %v627, %v626
        %v661 = vpack.c.bf16 %v629, %v628
        %v662 = vpack.c.bf16 %v631, %v630
        %v663 = vpack.c.bf16 %v633, %v632
        %v664 = vpack.c.bf16 %v635, %v634
        %v665 = vpack.c.bf16 %v637, %v636
        %v666 = vpack.c.bf16 %v639, %v638
        %v667 = vpack.c.bf16 %v641, %v640
        %v668 = vpack.c.bf16 %v643, %v642
        %v669 = vpack.c.bf16 %v645, %v644
        %v670 = vpack.c.bf16 %v647, %v646
        %v671 = vpack.c.bf16 %v649, %v648
        %v672 = vpack.c.bf16 %v651, %v650
        %v673 = vpack.c.bf16 %v653, %v652
        %v674 = vpack.c.bf16 %v655, %v654
        %v676 = vperm.slane %v658, 0
        %v680 = vunpack.c.l.b16 %v656
        %v681 = vunpack.c.l.b16 %v657
        %v682 = vpack.c.b16 %v681, %v680
        %vm684 = vcmask 130048
        %v686 = vsel %vm684, %v659, 0
        %v689 = vsel %vm684, %v660, 0
        %v692 = vsel %vm684, %v661, 0
        %v695 = vsel %vm684, %v662, 0
        %v698 = vsel %vm684, %v663, 0
        %v701 = vsel %vm684, %v664, 0
        %v704 = vsel %vm684, %v665, 0
        %v707 = vsel %vm684, %v666, 0
        %v710 = vsel %vm684, %v667, 0
        %v713 = vsel %vm684, %v668, 0
        %v716 = vsel %vm684, %v669, 0
        %v719 = vsel %vm684, %v670, 0
        %v722 = vsel %vm684, %v671, 0
        %v725 = vsel %vm684, %v672, 0
        %v728 = vsel %vm684, %v673, 0
        %v731 = vsel %vm684, %v674, 0
        %733 = vmatpush.bf16.msra.mxu0 0
        %734 = vmatpush.bf16.msra.mxu0 0
        %735 = vmatpush.bf16.msra.mxu0 0
        %736 = vmatpush.bf16.msra.mxu0 0
        %737 = vmatpush.bf16.msra.mxu0 0
        %738 = vmatpush.bf16.msra.mxu0 0
        %739 = vmatpush.bf16.msra.mxu0 0
        %740 = vmatpush.bf16.msra.mxu0 %v682
        %741 = vmatmul.bf16.gmra.mxu0 %v686
        %v742 = vpop.f32.mrf.mxu0
        %v743 = vadd.f32 %v676, %v742
        %v744 = vpop.f32.mrf.mxu0
        %v745 = vadd.f32 %v676, %v744
        %746 = vmatmul.bf16.gmra.mxu0 %v689
        %v747 = vpop.f32.mrf.mxu0
        %v748 = vadd.f32 %v676, %v747
        %v749 = vpop.f32.mrf.mxu0
        %v750 = vadd.f32 %v676, %v749
        %751 = vmatmul.bf16.gmra.mxu0 %v692
        %v752 = vpop.f32.mrf.mxu0
        %v753 = vadd.f32 %v676, %v752
        %v754 = vpop.f32.mrf.mxu0
        %v755 = vadd.f32 %v676, %v754
        %756 = vmatmul.bf16.gmra.mxu0 %v695
        %v757 = vpop.f32.mrf.mxu0
        %v758 = vadd.f32 %v676, %v757
        %v759 = vpop.f32.mrf.mxu0
        %v760 = vadd.f32 %v676, %v759
        %761 = vmatmul.bf16.gmra.mxu0 %v698
        %v762 = vpop.f32.mrf.mxu0
        %v763 = vadd.f32 %v676, %v762
        %v764 = vpop.f32.mrf.mxu0
        %v765 = vadd.f32 %v676, %v764
        %766 = vmatmul.bf16.gmra.mxu0 %v701
        %v767 = vpop.f32.mrf.mxu0
        %v768 = vadd.f32 %v676, %v767
        %v769 = vpop.f32.mrf.mxu0
        %v770 = vadd.f32 %v676, %v769
        %771 = vmatmul.bf16.gmra.mxu0 %v704
        %v772 = vpop.f32.mrf.mxu0
        %v773 = vadd.f32 %v676, %v772
        %v774 = vpop.f32.mrf.mxu0
        %v775 = vadd.f32 %v676, %v774
        %776 = vmatmul.bf16.gmra.mxu0 %v707
        %v777 = vpop.f32.mrf.mxu0
        %v778 = vadd.f32 %v676, %v777
        %v779 = vpop.f32.mrf.mxu0
        %v780 = vadd.f32 %v676, %v779
        %781 = vmatmul.bf16.gmra.mxu0 %v710
        %v782 = vpop.f32.mrf.mxu0
        %v783 = vadd.f32 %v676, %v782
        %v784 = vpop.f32.mrf.mxu0
        %v785 = vadd.f32 %v676, %v784
        %786 = vmatmul.bf16.gmra.mxu0 %v713
        %v787 = vpop.f32.mrf.mxu0
        %v788 = vadd.f32 %v676, %v787
        %v789 = vpop.f32.mrf.mxu0
        %v790 = vadd.f32 %v676, %v789
        %791 = vmatmul.bf16.gmra.mxu0 %v716
        %v792 = vpop.f32.mrf.mxu0
        %v793 = vadd.f32 %v676, %v792
        %v794 = vpop.f32.mrf.mxu0
        %v795 = vadd.f32 %v676, %v794
        %796 = vmatmul.bf16.gmra.mxu0 %v719
        %v797 = vpop.f32.mrf.mxu0
        %v798 = vadd.f32 %v676, %v797
        %v799 = vpop.f32.mrf.mxu0
        %v800 = vadd.f32 %v676, %v799
        %801 = vmatmul.bf16.gmra.mxu0 %v722
        %v802 = vpop.f32.mrf.mxu0
        %v803 = vadd.f32 %v676, %v802
        %v804 = vpop.f32.mrf.mxu0
        %v805 = vadd.f32 %v676, %v804
        %806 = vmatmul.bf16.gmra.mxu0 %v725
        %v807 = vpop.f32.mrf.mxu0
        %v808 = vadd.f32 %v676, %v807
        %v809 = vpop.f32.mrf.mxu0
        %v810 = vadd.f32 %v676, %v809
        %811 = vmatmul.bf16.gmra.mxu0 %v728
        %v812 = vpop.f32.mrf.mxu0
        %v813 = vadd.f32 %v676, %v812
        %v814 = vpop.f32.mrf.mxu0
        %v815 = vadd.f32 %v676, %v814
        %816 = vmatmul.bf16.gmra.mxu0 %v731
        %v817 = vpop.f32.mrf.mxu0
        %v818 = vadd.f32 %v676, %v817
        %v819 = vpop.f32.mrf.mxu0
        %v820 = vadd.f32 %v676, %v819
        %821 = vdwg.mxu0
        %v822 = vmax.f32 %v743, 0.0
        %v823 = vmax.f32 %v745, 0.0
        %v824 = vmax.f32 %v748, 0.0
        %v825 = vmax.f32 %v750, 0.0
        %v826 = vmax.f32 %v753, 0.0
        %v827 = vmax.f32 %v755, 0.0
        %v828 = vmax.f32 %v758, 0.0
        %v829 = vmax.f32 %v760, 0.0
        %v830 = vmax.f32 %v763, 0.0
        %v831 = vmax.f32 %v765, 0.0
        %v832 = vmax.f32 %v768, 0.0
        %v833 = vmax.f32 %v770, 0.0
        %v834 = vmax.f32 %v773, 0.0
        %v835 = vmax.f32 %v775, 0.0
        %v836 = vmax.f32 %v778, 0.0
        %v837 = vmax.f32 %v780, 0.0
        %v838 = vmax.f32 %v783, 0.0
        %v839 = vmax.f32 %v785, 0.0
        %v840 = vmax.f32 %v788, 0.0
        %v841 = vmax.f32 %v790, 0.0
        %v842 = vmax.f32 %v793, 0.0
        %v843 = vmax.f32 %v795, 0.0
        %v844 = vmax.f32 %v798, 0.0
        %v845 = vmax.f32 %v800, 0.0
        %v846 = vmax.f32 %v803, 0.0
        %v847 = vmax.f32 %v805, 0.0
        %v848 = vmax.f32 %v808, 0.0
        %v849 = vmax.f32 %v810, 0.0
        %v850 = vmax.f32 %v813, 0.0
        %v851 = vmax.f32 %v815, 0.0
        %v852 = vmax.f32 %v818, 0.0
        %v853 = vmax.f32 %v820, 0.0
        %v854 = vld [vmem:[%s5] sm:$0xf]
        %v855 = vld [vmem:[%s5 + $0x4] sm:$0xf]
        %v856 = vld [vmem:[%s5 + $0x8] sm:$0xf]
        %v857 = vld [vmem:[%s5 + $0xc] sm:$0xf]
        %v858 = vld [vmem:[%s6] sm:$0x1]
        %v859 = vpack.c.bf16 %v823, %v822
        %v860 = vpack.c.bf16 %v825, %v824
        %v861 = vpack.c.bf16 %v827, %v826
        %v862 = vpack.c.bf16 %v829, %v828
        %v863 = vpack.c.bf16 %v831, %v830
        %v864 = vpack.c.bf16 %v833, %v832
        %v865 = vpack.c.bf16 %v835, %v834
        %v866 = vpack.c.bf16 %v837, %v836
        %v867 = vpack.c.bf16 %v839, %v838
        %v868 = vpack.c.bf16 %v841, %v840
        %v869 = vpack.c.bf16 %v843, %v842
        %v870 = vpack.c.bf16 %v845, %v844
        %v871 = vpack.c.bf16 %v847, %v846
        %v872 = vpack.c.bf16 %v849, %v848
        %v873 = vpack.c.bf16 %v851, %v850
        %v874 = vpack.c.bf16 %v853, %v852
        %v876 = vperm.slane %v858, 0
        %v882 = vunpack.c.l.b16 %v854
        %v883 = vunpack.c.l.b16 %v855
        %v884 = vunpack.c.l.b16 %v856
        %v885 = vunpack.c.l.b16 %v857
        %v886 = vpack.c.b16 %v883, %v882
        %v887 = vpack.c.b16 %v885, %v884
        %vm890 = vcmask 261120
        %v892 = vsel %vm890, %v859, 0
        %v895 = vsel %vm890, %v860, 0
        %v898 = vsel %vm890, %v861, 0
        %v901 = vsel %vm890, %v862, 0
        %v904 = vsel %vm890, %v863, 0
        %v907 = vsel %vm890, %v864, 0
        %v910 = vsel %vm890, %v865, 0
        %v913 = vsel %vm890, %v866, 0
        %v916 = vsel %vm890, %v867, 0
        %v919 = vsel %vm890, %v868, 0
        %v922 = vsel %vm890, %v869, 0
        %v925 = vsel %vm890, %v870, 0
        %v928 = vsel %vm890, %v871, 0
        %v931 = vsel %vm890, %v872, 0
        %v934 = vsel %vm890, %v873, 0
        %v937 = vsel %vm890, %v874, 0
        %939 = vmatpush.bf16.msra.mxu0 0
        %940 = vmatpush.bf16.msra.mxu0 0
        %941 = vmatpush.bf16.msra.mxu0 0
        %942 = vmatpush.bf16.msra.mxu0 0
        %943 = vmatpush.bf16.msra.mxu0 0
        %944 = vmatpush.bf16.msra.mxu0 0
        %945 = vmatpush.bf16.msra.mxu0 %v887
        %946 = vmatpush.bf16.msra.mxu0 %v886
        %947 = vmatmul.bf16.gmra.mxu0 %v892
        %v948 = vpop.f32.mrf.mxu0
        %v949 = vadd.f32 %v876, %v948
        %v950 = vpop.f32.mrf.mxu0
        %v951 = vadd.f32 %v876, %v950
        %952 = vmatmul.bf16.gmra.mxu0 %v895
        %v953 = vpop.f32.mrf.mxu0
        %v954 = vadd.f32 %v876, %v953
        %v955 = vpop.f32.mrf.mxu0
        %v956 = vadd.f32 %v876, %v955
        %957 = vmatmul.bf16.gmra.mxu0 %v898
        %v958 = vpop.f32.mrf.mxu0
        %v959 = vadd.f32 %v876, %v958
        %v960 = vpop.f32.mrf.mxu0
        %v961 = vadd.f32 %v876, %v960
        %962 = vmatmul.bf16.gmra.mxu0 %v901
        %v963 = vpop.f32.mrf.mxu0
        %v964 = vadd.f32 %v876, %v963
        %v965 = vpop.f32.mrf.mxu0
        %v966 = vadd.f32 %v876, %v965
        %967 = vmatmul.bf16.gmra.mxu0 %v904
        %v968 = vpop.f32.mrf.mxu0
        %v969 = vadd.f32 %v876, %v968
        %v970 = vpop.f32.mrf.mxu0
        %v971 = vadd.f32 %v876, %v970
        %972 = vmatmul.bf16.gmra.mxu0 %v907
        %v973 = vpop.f32.mrf.mxu0
        %v974 = vadd.f32 %v876, %v973
        %v975 = vpop.f32.mrf.mxu0
        %v976 = vadd.f32 %v876, %v975
        %977 = vmatmul.bf16.gmra.mxu0 %v910
        %v978 = vpop.f32.mrf.mxu0
        %v979 = vadd.f32 %v876, %v978
        %v980 = vpop.f32.mrf.mxu0
        %v981 = vadd.f32 %v876, %v980
        %982 = vmatmul.bf16.gmra.mxu0 %v913
        %v983 = vpop.f32.mrf.mxu0
        %v984 = vadd.f32 %v876, %v983
        %v985 = vpop.f32.mrf.mxu0
        %v986 = vadd.f32 %v876, %v985
        %987 = vmatmul.bf16.gmra.mxu0 %v916
        %v988 = vpop.f32.mrf.mxu0
        %v989 = vadd.f32 %v876, %v988
        %v990 = vpop.f32.mrf.mxu0
        %v991 = vadd.f32 %v876, %v990
        %992 = vmatmul.bf16.gmra.mxu0 %v919
        %v993 = vpop.f32.mrf.mxu0
        %v994 = vadd.f32 %v876, %v993
        %v995 = vpop.f32.mrf.mxu0
        %v996 = vadd.f32 %v876, %v995
        %997 = vmatmul.bf16.gmra.mxu0 %v922
        %v998 = vpop.f32.mrf.mxu0
        %v999 = vadd.f32 %v876, %v998
        %v1000 = vpop.f32.mrf.mxu0
        %v1001 = vadd.f32 %v876, %v1000
        %1002 = vmatmul.bf16.gmra.mxu0 %v925
        %v1003 = vpop.f32.mrf.mxu0
        %v1004 = vadd.f32 %v876, %v1003
        %v1005 = vpop.f32.mrf.mxu0
        %v1006 = vadd.f32 %v876, %v1005
        %1007 = vmatmul.bf16.gmra.mxu0 %v928
        %v1008 = vpop.f32.mrf.mxu0
        %v1009 = vadd.f32 %v876, %v1008
        %v1010 = vpop.f32.mrf.mxu0
        %v1011 = vadd.f32 %v876, %v1010
        %1012 = vmatmul.bf16.gmra.mxu0 %v931
        %v1013 = vpop.f32.mrf.mxu0
        %v1014 = vadd.f32 %v876, %v1013
        %v1015 = vpop.f32.mrf.mxu0
        %v1016 = vadd.f32 %v876, %v1015
        %1017 = vmatmul.bf16.gmra.mxu0 %v934
        %v1018 = vpop.f32.mrf.mxu0
        %v1019 = vadd.f32 %v876, %v1018
        %v1020 = vpop.f32.mrf.mxu0
        %v1021 = vadd.f32 %v876, %v1020
        %1022 = vmatmul.bf16.gmra.mxu0 %v937
        %v1023 = vpop.f32.mrf.mxu0
        %v1024 = vadd.f32 %v876, %v1023
        %v1025 = vpop.f32.mrf.mxu0
        %v1026 = vadd.f32 %v876, %v1025
        %1027 = vdwg.mxu0
        %v1028 = vmax.f32 %v949, 0.0
        %v1029 = vmax.f32 %v951, 0.0
        %v1030 = vmax.f32 %v954, 0.0
        %v1031 = vmax.f32 %v956, 0.0
        %v1032 = vmax.f32 %v959, 0.0
        %v1033 = vmax.f32 %v961, 0.0
        %v1034 = vmax.f32 %v964, 0.0
        %v1035 = vmax.f32 %v966, 0.0
        %v1036 = vmax.f32 %v969, 0.0
        %v1037 = vmax.f32 %v971, 0.0
        %v1038 = vmax.f32 %v974, 0.0
        %v1039 = vmax.f32 %v976, 0.0
        %v1040 = vmax.f32 %v979, 0.0
        %v1041 = vmax.f32 %v981, 0.0
        %v1042 = vmax.f32 %v984, 0.0
        %v1043 = vmax.f32 %v986, 0.0
        %v1044 = vmax.f32 %v989, 0.0
        %v1045 = vmax.f32 %v991, 0.0
        %v1046 = vmax.f32 %v994, 0.0
        %v1047 = vmax.f32 %v996, 0.0
        %v1048 = vmax.f32 %v999, 0.0
        %v1049 = vmax.f32 %v1001, 0.0
        %v1050 = vmax.f32 %v1004, 0.0
        %v1051 = vmax.f32 %v1006, 0.0
        %v1052 = vmax.f32 %v1009, 0.0
        %v1053 = vmax.f32 %v1011, 0.0
        %v1054 = vmax.f32 %v1014, 0.0
        %v1055 = vmax.f32 %v1016, 0.0
        %v1056 = vmax.f32 %v1019, 0.0
        %v1057 = vmax.f32 %v1021, 0.0
        %v1058 = vmax.f32 %v1024, 0.0
        %v1059 = vmax.f32 %v1026, 0.0
        %vm1060 = vcmask 523264
        %v1061 = vsel %vm1060, %v1028, -inf
        %v1062 = vsel %vm1060, %v1029, -inf
        %v1063 = vsel %vm1060, %v1030, -inf
        %v1064 = vmax.f32 %v1061, %v1063
        %v1065 = vsel %vm1060, %v1031, -inf
        %v1066 = vmax.f32 %v1062, %v1065
        %v1067 = vsel %vm1060, %v1032, -inf
        %v1068 = vmax.f32 %v1064, %v1067
        %v1069 = vsel %vm1060, %v1033, -inf
        %v1070 = vmax.f32 %v1066, %v1069
        %v1071 = vsel %vm1060, %v1034, -inf
        %v1072 = vmax.f32 %v1068, %v1071
        %v1073 = vsel %vm1060, %v1035, -inf
        %v1074 = vmax.f32 %v1070, %v1073
        %v1075 = vsel %vm1060, %v1036, -inf
        %v1076 = vmax.f32 %v1072, %v1075
        %v1077 = vsel %vm1060, %v1037, -inf
        %v1078 = vmax.f32 %v1074, %v1077
        %v1079 = vsel %vm1060, %v1038, -inf
        %v1080 = vmax.f32 %v1076, %v1079
        %v1081 = vsel %vm1060, %v1039, -inf
        %v1082 = vmax.f32 %v1078, %v1081
        %v1083 = vsel %vm1060, %v1040, -inf
        %v1084 = vmax.f32 %v1080, %v1083
        %v1085 = vsel %vm1060, %v1041, -inf
        %v1086 = vmax.f32 %v1082, %v1085
        %v1087 = vsel %vm1060, %v1042, -inf
        %v1088 = vmax.f32 %v1084, %v1087
        %v1089 = vsel %vm1060, %v1043, -inf
        %v1090 = vmax.f32 %v1086, %v1089
        %v1091 = vmax.f32 %v1088, %v1090
        %v1092 = vrot.slane %v1091, 4
        %v1093 = vmax.f32 %v1091, %v1092
        %v1094 = vrot.slane %v1093, 2
        %v1095 = vmax.f32 %v1093, %v1094
        %v1096 = vrot.slane %v1095, 1
        %v1097 = vmax.f32 %v1095, %v1096
        %v1098 = vsel %vm1060, %v1044, -inf
        %v1099 = vsel %vm1060, %v1045, -inf
        %v1100 = vsel %vm1060, %v1046, -inf
        %v1101 = vmax.f32 %v1098, %v1100
        %v1102 = vsel %vm1060, %v1047, -inf
        %v1103 = vmax.f32 %v1099, %v1102
        %v1104 = vsel %vm1060, %v1048, -inf
        %v1105 = vmax.f32 %v1101, %v1104
        %v1106 = vsel %vm1060, %v1049, -inf
        %v1107 = vmax.f32 %v1103, %v1106
        %v1108 = vsel %vm1060, %v1050, -inf
        %v1109 = vmax.f32 %v1105, %v1108
        %v1110 = vsel %vm1060, %v1051, -inf
        %v1111 = vmax.f32 %v1107, %v1110
        %v1112 = vsel %vm1060, %v1052, -inf
        %v1113 = vmax.f32 %v1109, %v1112
        %v1114 = vsel %vm1060, %v1053, -inf
        %v1115 = vmax.f32 %v1111, %v1114
        %v1116 = vsel %vm1060, %v1054, -inf
        %v1117 = vmax.f32 %v1113, %v1116
        %v1118 = vsel %vm1060, %v1055, -inf
        %v1119 = vmax.f32 %v1115, %v1118
        %v1120 = vsel %vm1060, %v1056, -inf
        %v1121 = vmax.f32 %v1117, %v1120
        %v1122 = vsel %vm1060, %v1057, -inf
        %v1123 = vmax.f32 %v1119, %v1122
        %v1124 = vsel %vm1060, %v1058, -inf
        %v1125 = vmax.f32 %v1121, %v1124
        %v1126 = vsel %vm1060, %v1059, -inf
        %v1127 = vmax.f32 %v1123, %v1126
        %v1128 = vmax.f32 %v1125, %v1127
        %v1129 = vrot.slane %v1128, 4
        %v1130 = vmax.f32 %v1128, %v1129
        %v1131 = vrot.slane %v1130, 2
        %v1132 = vmax.f32 %v1130, %v1131
        %v1133 = vrot.slane %v1132, 1
        %v1134 = vmax.f32 %v1132, %v1133
        %p1135 = scmp.eq.s32.totalorder %s18, 0
        // Predicated region
        $region87: #{simple_pointnet_forward.4} parent=81 // pred_check
          %p1136 = pneg %p1135
        $region88: #{simple_pointnet_forward.4} parent=81 // pred_check_branch
          %1138 = sbr.rel (%p1136) target = $region90
        $region89: #{simple_pointnet_forward.4} parent=81 // pred_region
          %vm1139 = vcmask 517120
          %1140 = vst.msk [vmem:[%s7] sm:$0x3] %vm1139, -inf
        $region90: #{simple_pointnet_forward.4} parent=81 // pred_fallthru
          _
        %v1141 = vld [vmem:[%s7] sm:$0x3]
        %vm1144 = vcmask 1041409
        %v1145 = vsel %vm1144, %v1134, %v1097
        %v1147 = vmax.f32 %v1141, %v1145
        %vm1148 = vcmask 517120
        %1149 = vst.msk [vmem:[%s7] sm:$0x3] %vm1148, %v1147
        // Predicated region
        $region91: #{simple_pointnet_forward.4} parent=81 // pred_check
          %p1150 = pneg %p183
        $region92: #{simple_pointnet_forward.4} parent=81 // pred_check_branch
          %1152 = sbr.rel (%p1150) target = $region94
        $region93: #{simple_pointnet_forward.4} parent=81 // pred_region
          _
        $region94: #{simple_pointnet_forward.4} parent=81 // pred_fallthru
          _
        // Predicated region
        $region95: #{simple_pointnet_forward.4} parent=81 // pred_check
          %p1153 = pneg %p183
        $region96: #{simple_pointnet_forward.4} parent=81 // pred_check_branch
          %1155 = sbr.rel (%p1153) target = $region98
        $region97: #{simple_pointnet_forward.4} parent=81 // pred_region
          _
        $region98: #{simple_pointnet_forward.4} parent=81 // pred_fallthru
          _
      $region82: #{simple_pointnet_forward.4} parent=5 // pred_fallthru
        _
      %p1156 = scmp.le.s32.totalorder 2, %s13
      // Predicated region
      $region99: #{simple_pointnet_forward.4} parent=5 // pred_check
        %p1157 = pneg %p1156
      $region100: #{simple_pointnet_forward.4} parent=5 // pred_check_branch
        %1159 = sbr.rel (%p1157) target = $region102
      $region101: #{simple_pointnet_forward.4} parent=5 // pred_region
        %s1160 = ssub.s32 %s13, 2
      $region102: #{simple_pointnet_forward.4} parent=5 // pred_fallthru
        _
    $region6: #{simple_pointnet_forward.4} parent=1 // loop_footer
      %s17 = sadd.s32 1, %s13
    $region7: #{simple_pointnet_forward.4} parent=1 // loop_footer_branch
      %12 = sbr.rel target = $region3
    $region8: #{simple_pointnet_forward.4} parent=1 // loop_exit
      _

</llo_original>
